<compile_context>
chip_gen: v7x
topology: tpu7x:2x2x1
jax: 0.10.0
libtpu: 0.0.40
codegen_flags: <defaults>
</compile_context>

<pallas_src>
import functools
import math

import jax
import jax.numpy as jnp
from jax import lax
from jax.experimental import pallas as pl
from jax.experimental.pallas import tpu as pltpu


# --------------------------- TPU-dependent knobs ----------------------------

def _vmem_limit_bytes():
    # Leave headroom for compiler scratch: ~3/4 of physical VMEM, capped.
    try:
        cap = pltpu.get_tpu_info().vmem_capacity_bytes
    except Exception:
        cap = None
    if not cap:
        return 48 * 1024 * 1024            # conservative default (v7x: 64 MiB/TC)
    return int(min(cap * 3 // 4, 100 * 1024 * 1024))


VMEM_LIMIT = _vmem_limit_bytes()


def _probe_single_buffer_mode():
    """Probe pl.Buffered(1) support once at import time.  Grid-invariant
    weight inputs are kept single-buffered in VMEM (default pipelining
    double-buffers every input); fall back silently if unsupported."""
    try:
        mode = pl.Buffered(1)

        def probe_kernel(x_ref, o_ref):
            o_ref[...] = x_ref[...] + 1.0

        f = pl.pallas_call(
            probe_kernel,
            grid=(2,),
            in_specs=[pl.BlockSpec((8, 128), lambda i: (0, 0),
                                   pipeline_mode=mode)],
            out_specs=pl.BlockSpec((8, 128), lambda i: (0, 0)),
            out_shape=jax.ShapeDtypeStruct((8, 128), jnp.float32),
        )
        jax.block_until_ready(f(jnp.zeros((8, 128), jnp.float32)))
        return mode
    except Exception:
        return None


_WEIGHT_BUFFER_MODE = _probe_single_buffer_mode()


# ----------------------------- small helpers -------------------------------

def _layernorm(x, gamma, beta, eps=1e-5):
    mean = jnp.mean(x, axis=-1, keepdims=True)
    var = jnp.mean((x - mean) ** 2, axis=-1, keepdims=True)
    return (x - mean) * lax.rsqrt(var + eps) * gamma + beta


def _silu(x):
    return x * jax.nn.sigmoid(x)


def _const_index_map(ndim):
    def im(*_):
        return (0,) * ndim
    return im


def _const_spec(a):
    # Grid-invariant (weight) input: stays VMEM-resident across the grid.
    if _WEIGHT_BUFFER_MODE is None:
        return pl.BlockSpec(a.shape, _const_index_map(a.ndim))
    return pl.BlockSpec(a.shape, _const_index_map(a.ndim),
                        pipeline_mode=_WEIGHT_BUFFER_MODE)


def _ff_row_target(d_ff):
    # Large d_ff -> smaller row tile so the [tm, d_ff] f32 intermediate stays
    # comfortable inside v7x's 64 MiB VMEM.
    return 256 if d_ff >= 2048 else 512


def _choose_row_tile(rows, target):
    if rows <= target:
        return rows           # one full block (full-dim rule)
    return target             # multiple of 8; ragged tail masked via cdiv grid


def _row_tiled_call(kernel, x2d, weights, out_dim, out_dtype, target=512):
    """Row-tiled pallas_call: activation rows are tiled/pipelined, weights use
    constant index_maps (single-buffered, VMEM-resident), grid axis parallel."""
    rows, d_in = x2d.shape
    tm = _choose_row_tile(rows, target)
    return pl.pallas_call(
        kernel,
        grid=(pl.cdiv(rows, tm),),
        in_specs=[pl.BlockSpec((tm, d_in), lambda i: (i, 0))]
                 + [_const_spec(w) for w in weights],
        out_specs=pl.BlockSpec((tm, out_dim), lambda i: (i, 0)),
        out_shape=jax.ShapeDtypeStruct((rows, out_dim), out_dtype),
        compiler_params=pltpu.CompilerParams(
            dimension_semantics=("parallel",),
            vmem_limit_bytes=VMEM_LIMIT),
    )(x2d, *weights)


# ----------------------------- Pallas kernels ------------------------------

def linear_kernel(x_ref, w_ref, b_ref, o_ref):
    y = jnp.dot(x_ref[...].astype(jnp.bfloat16), w_ref[...],
                preferred_element_type=jnp.float32) + b_ref[...]
    o_ref[...] = y.astype(o_ref.dtype)


def _ff_body(x, g, be, w1, b1, w2, b2, res_scale):
    # ConformerPositionwiseFeedForwardV1 fused with the block residual
    # (dropout == identity in eval mode).  Stats in f32, matmuls in bf16.
    xf = x.astype(jnp.float32)
    h = _layernorm(xf, g, be)
    h = jnp.dot(h.astype(jnp.bfloat16), w1,
                preferred_element_type=jnp.float32) + b1
    h = _silu(h)
    h = jnp.dot(h.astype(jnp.bfloat16), w2,
                preferred_element_type=jnp.float32) + b2
    return res_scale * xf + h


def ff_kernel(x_ref, g_ref, be_ref, w1_ref, b1_ref, w2_ref, b2_ref, o_ref,
              *, res_scale):
    y = _ff_body(x_ref[...], g_ref[...], be_ref[...],
                 w1_ref[...], b1_ref[...], w2_ref[...], b2_ref[...], res_scale)
    o_ref[...] = y.astype(o_ref.dtype)


def ff_ln_kernel(x_ref, g_ref, be_ref, w1_ref, b1_ref, w2_ref, b2_ref,
                 fg_ref, fb_ref, o_ref, *, res_scale):
    # ff_2 + block residual + final_layer_norm fused (all row-wise).
    y = _ff_body(x_ref[...], g_ref[...], be_ref[...],
                 w1_ref[...], b1_ref[...], w2_ref[...], b2_ref[...], res_scale)
    o_ref[...] = _layernorm(y, fg_ref[...], fb_ref[...]).astype(o_ref.dtype)


def conv_module_kernel(x_ref, g_ref, be_ref, w1_ref, b1_ref,
                       dww_ref, dwb_ref, bns_ref, bnt_ref, w2_ref, b2_ref,
                       o_ref, gpad_ref, *, kernel_size):
    # ConformerConvolutionV1 fused with the block residual, one batch element
    # per grid step.  Pointwise conv1 is one D->2D matmul, GLU splits it by
    # lane slicing.  The depthwise Conv1d over time writes the GLU output into
    # a zero-padded VMEM scratch once, reads it back once, and applies the K
    # tap shifts on the register-resident value (no per-tap VMEM re-loads).
    T, D = x_ref.shape[1], x_ref.shape[2]
    pad = (kernel_size - 1) // 2

    x = x_ref[...].reshape(T, D).astype(jnp.float32)
    h = _layernorm(x, g_ref[...], be_ref[...])
    h1 = jnp.dot(h.astype(jnp.bfloat16), w1_ref[...],
                 preferred_element_type=jnp.float32) + b1_ref[...]   # [T, 2D]
    g = h1[:, :D] * jax.nn.sigmoid(h1[:, D:])                        # GLU(dim=-1)

    # depthwise Conv1d over time, zero padded ("same")
    if pad > 0:
        gpad_ref[0:pad, :] = jnp.zeros((pad, D), jnp.float32)
        gpad_ref[pad + T:pad + T + pad, :] = jnp.zeros((pad, D), jnp.float32)
    gpad_ref[pad:pad + T, :] = g
    gp = gpad_ref[...]                                               # [T+2p, D]
    dw_w = dww_ref[...]                                              # [K, D]
    acc = jnp.zeros((T, D), jnp.float32) + dwb_ref[...]
    for j in range(kernel_size):
        acc = acc + gp[j:j + T, :] * dw_w[j:j + 1, :]
    # TODO(synk): padded time frames are not zeroed before the depthwise conv
    # (matches the unmasked reference ConformerConvolutionV1 behaviour).

    acc = acc * bns_ref[...] + bnt_ref[...]          # BatchNorm1d (eval, folded)
    acc = _silu(acc)
    y = jnp.dot(acc.astype(jnp.bfloat16), w2_ref[...],
                preferred_element_type=jnp.float32) + b2_ref[...]
    o_ref[...] = (x + y).reshape(1, T, D).astype(o_ref.dtype)        # residual


def mhsa_kernel(x_ref, g_ref, be_ref, wqkv_ref, bqkv_ref, pbu_ref, pbv_ref,
                relp_ref, bias_ref, wout_ref, bout_ref, o_ref, ctx_ref,
                *, num_heads, clip, scale):
    # Fully fused MHSA (LN + QKV + rel-pos attention + out-proj + residual),
    # one batch element per grid step.  Heads are lane-contiguous dh slices;
    # every MXU matmul takes bf16 operands (f32 accumulate); the 1/sqrt(dh)
    # scale is folded into q; per-head context goes into a VMEM scratch.
    T, D = x_ref.shape[1], x_ref.shape[2]
    H = num_heads
    dh = D // H

    x = x_ref[...].reshape(T, D).astype(jnp.float32)
    h = _layernorm(x, g_ref[...], be_ref[...])
    qkv = jnp.dot(h.astype(jnp.bfloat16), wqkv_ref[...],
                  preferred_element_type=jnp.float32) + bqkv_ref[...]  # [T, 3D]
    q = qkv[:, :D]
    k = qkv[:, D:2 * D].astype(jnp.bfloat16)
    v = qkv[:, 2 * D:].astype(jnp.bfloat16)
    qu = ((q + pbu_ref[...]) * scale).astype(jnp.bfloat16)   # scale folded here
    qv = ((q + pbv_ref[...]) * scale).astype(jnp.bfloat16)
    relp = relp_ref[...]                       # [2*clip+1, D] bf16 (pre-projected)
    bias = bias_ref[...].reshape(1, T)         # -1e9 on padded keys

    # clipped relative distance, computed once (no precomputed mask list kept
    # live -> no (2C+1) [T,T] temporaries resident in VMEM)
    i_idx = lax.broadcasted_iota(jnp.int32, (T, T), 0)
    j_idx = lax.broadcasted_iota(jnp.int32, (T, T), 1)
    dist = jnp.clip(j_idx - i_idx, -clip, clip) + clip       # [T,T] in 0..2C

    dn = (((1,), (1,)), ((), ()))    # contract the dh axis (A @ B^T)
    for hh in range(H):
        lo = hh * dh
        qu_h = qu[:, lo:lo + dh]
        qv_h = qv[:, lo:lo + dh]
        k_h = k[:, lo:lo + dh]
        v_h = v[:, lo:lo + dh]
        rp_h = relp[:, lo:lo + dh]

        s = lax.dot_general(qu_h, k_h, dn,
                            preferred_element_type=jnp.float32)        # [T, T]
        compact = lax.dot_general(qv_h, rp_h, dn,
                                  preferred_element_type=jnp.float32)  # [T, 2C+1]
        bd = jnp.zeros((T, T), jnp.float32)
        for p in range(2 * clip + 1):
            bd = bd + jnp.where(dist == p, compact[:, p:p + 1], 0.0)

        s = s + bd + bias
        mx = jnp.max(s, axis=-1, keepdims=True)
        e = jnp.exp(s - mx)
        l = jnp.sum(e, axis=-1, keepdims=True)
        p_attn = (e / l).astype(jnp.bfloat16)                # exact normalization
        ctx_ref[:, lo:lo + dh] = jnp.dot(
            p_attn, v_h, preferred_element_type=jnp.float32).astype(jnp.bfloat16)

    out = jnp.dot(ctx_ref[...], wout_ref[...],
                  preferred_element_type=jnp.float32) + bout_ref[...]
    o_ref[...] = (x + out).reshape(1, T, D).astype(o_ref.dtype)        # residual


# ------------------------------- wrappers -----------------------------------

def linear_forward(x2d, w_bf16, b):
    return _row_tiled_call(linear_kernel, x2d, [w_bf16, b], w_bf16.shape[1],
                           jnp.bfloat16, target=512)


def ff_forward(x2d, p, res_scale):
    weights = [p["ln_g"], p["ln_b"], p["w1"], p["b1"], p["w2"], p["b2"]]
    return _row_tiled_call(functools.partial(ff_kernel, res_scale=res_scale),
                           x2d, weights, x2d.shape[1], jnp.bfloat16,
                           target=_ff_row_target(p["w1"].shape[1]))


def ff_ln_forward(x2d, p, ln_p, res_scale):
    weights = [p["ln_g"], p["ln_b"], p["w1"], p["b1"], p["w2"], p["b2"],
               ln_p["g"], ln_p["b"]]
    return _row_tiled_call(functools.partial(ff_ln_kernel, res_scale=res_scale),
                           x2d, weights, x2d.shape[1], jnp.bfloat16,
                           target=_ff_row_target(p["w1"].shape[1]))


def conv_forward(x, p, kernel_size):
    assert kernel_size % 2 == 1, "depthwise 'same' padding assumes odd kernel"
    B, T, D = x.shape
    pad = (kernel_size - 1) // 2
    args = (x, p["ln_g"], p["ln_b"], p["w1"], p["b1"],
            p["dw_w"], p["dw_b"], p["bn_s"], p["bn_t"], p["w2"], p["b2"])
    x_spec = pl.BlockSpec((1, T, D), lambda b: (b, 0, 0))
    return pl.pallas_call(
        functools.partial(conv_module_kernel, kernel_size=kernel_size),
        grid=(B,),
        in_specs=[x_spec] + [_const_spec(a) for a in args[1:]],
        out_specs=x_spec,
        out_shape=jax.ShapeDtypeStruct((B, T, D), jnp.bfloat16),
        scratch_shapes=[pltpu.VMEM((T + 2 * pad, D), jnp.float32)],
        compiler_params=pltpu.CompilerParams(
            dimension_semantics=("parallel",),
            vmem_limit_bytes=VMEM_LIMIT),
    )(*args)


def mhsa_forward(x, attn_bias, p, num_heads, clipping):
    B, T, D = x.shape
    assert D % num_heads == 0, "model dim must be divisible by num_heads"
    dh = D // num_heads

    args = (x, p["ln_g"], p["ln_b"], p["w_qkv"], p["b_qkv"], p["pbu"], p["pbv"],
            p["relp"], attn_bias, p["w_out"], p["b_out"])
    x_spec = pl.BlockSpec((1, T, D), lambda b: (b, 0, 0))
    bias_spec = pl.BlockSpec((1, 1, T), lambda b: (b, 0, 0))
    in_specs = ([x_spec] + [_const_spec(a) for a in args[1:8]]
                + [bias_spec] + [_const_spec(a) for a in args[9:]])
    return pl.pallas_call(
        functools.partial(mhsa_kernel, num_heads=num_heads, clip=clipping,
                          scale=1.0 / math.sqrt(dh)),
        grid=(B,),
        in_specs=in_specs,
        out_specs=x_spec,
        out_shape=jax.ShapeDtypeStruct((B, T, D), jnp.bfloat16),
        scratch_shapes=[pltpu.VMEM((T, D), jnp.bfloat16)],
        compiler_params=pltpu.CompilerParams(
            dimension_semantics=("parallel",),
            vmem_limit_bytes=VMEM_LIMIT),
    )(*args)


def conformer_block(x, attn_bias, p, *, num_heads, conv_kernel, clipping):
    B, T, D = x.shape
    # x = 0.5 * x + ff_1(x)                          (residual fused in kernel)
    x = ff_forward(x.reshape(B * T, D), p["ff1"], res_scale=0.5).reshape(B, T, D)
    # x = x + conv(x)                                (residual fused in kernel)
    x = conv_forward(x, p["conv"], conv_kernel)
    # x = x + mhsa(x, rel_pos_enc(x), mask)          (residual fused in kernel)
    x = mhsa_forward(x, attn_bias, p["mhsa"], num_heads, clipping)
    # x = final_layer_norm(0.5 * x + ff_2(x))        (fused)
    x = ff_ln_forward(x.reshape(B * T, D), p["ff2"], p["final_ln"],
                      res_scale=0.5).reshape(B, T, D)
    return x


def encoder_forward(data, mask, params, *, num_heads, conv_kernel, clipping):
    B, T, F_in = data.shape
    # frontend (linear projection, mask pass-through)
    x = linear_forward(data.reshape(B * T, F_in),
                       params["frontend"]["w"], params["frontend"]["b"])
    D = x.shape[-1]
    x = x.reshape(B, T, D)
    # sequence_mask: 0 = inside the sequence, 1 = padding (per module docstring)
    attn_bias = (mask.astype(jnp.float32) * (-1e9)).reshape(B, 1, T)
    for blk in params["blocks"]:
        x = conformer_block(x, attn_bias, blk, num_heads=num_heads,
                            conv_kernel=conv_kernel, clipping=clipping)
    return x, mask


# --------------------------- parameter handling -----------------------------

def init_params(key, *, num_layers, f_in, d_model, d_ff, num_heads,
                conv_kernel, clipping):
    dh = d_model // num_heads
    cnt = [0]

    def w(shape, scale=0.05):
        cnt[0] += 1
        return scale * jax.random.normal(jax.random.fold_in(key, cnt[0]),
                                         shape, jnp.float32)

    ones = lambda s: jnp.ones(s, jnp.float32)
    zeros = lambda s: jnp.zeros(s, jnp.float32)

    def ff_p():
        return dict(ln_g=ones((1, d_model)), ln_b=zeros((1, d_model)),
                    w1=w((d_model, d_ff)), b1=w((1, d_ff)),
                    w2=w((d_ff, d_model)), b2=w((1, d_model)))

    def conv_p():
        # w1/b1 correspond to PyTorch pointwise_conv1 (D -> 2D, GLU halves in
        # the same order as the torch weight layout).
        return dict(ln_g=ones((1, d_model)), ln_b=zeros((1, d_model)),
                    w1=w((d_model, 2 * d_model)), b1=w((1, 2 * d_model)),
                    dw_w=w((conv_kernel, d_model)), dw_b=w((1, d_model)),
                    bn_gamma=ones((1, d_model)), bn_beta=zeros((1, d_model)),
                    bn_mean=zeros((1, d_model)), bn_var=ones((1, d_model)),
                    w2=w((d_model, d_model)), b2=w((1, d_model)))

    def mhsa_p():
        return dict(ln_g=ones((1, d_model)), ln_b=zeros((1, d_model)),
                    w_qkv=w((d_model, 3 * d_model)), b_qkv=w((1, 3 * d_model)),
                    w_out=w((d_model, d_model)), b_out=w((1, d_model)),
                    pos_emb=w((2 * clipping + 1, d_model)),
                    w_pos=w((d_model, d_model)),
                    pos_bias_u=w((num_heads, dh)),
                    pos_bias_v=w((num_heads, dh)))

    blocks = [dict(ff1=ff_p(), conv=conv_p(), mhsa=mhsa_p(), ff2=ff_p(),
                   final_ln=dict(g=ones((1, d_model)), b=zeros((1, d_model))))
              for _ in range(num_layers)]
    frontend = dict(w=w((f_in, d_model)), b=w((1, d_model)))
    return dict(frontend=frontend, blocks=blocks)


def prepare_params(params):
    """One-time parameter preprocessing outside the hot path:
       * big projection matrices pre-cast to bf16 (MXU inputs),
       * BatchNorm1d folded into a per-channel scale/shift (eval mode),
       * rel-pos table projected once (pos_emb @ w_pos) and cast to bf16,
       * pos_bias_u/v flattened over contiguous head slices.
    NOTE: all projection matmuls use bf16 operands with f32 accumulation,
    so expect ~1e-2..1e-3 divergence from an f32 PyTorch reference."""
    bf16 = lambda a: a.astype(jnp.bfloat16)

    def prep_ff(p):
        return dict(ln_g=p["ln_g"], ln_b=p["ln_b"],
                    w1=bf16(p["w1"]), b1=p["b1"],
                    w2=bf16(p["w2"]), b2=p["b2"])

    def prep_conv(p):
        bn_s = p["bn_gamma"] * lax.rsqrt(p["bn_var"] + 1e-5)
        bn_t = p["bn_beta"] - p["bn_mean"] * bn_s
        return dict(ln_g=p["ln_g"], ln_b=p["ln_b"],
                    w1=bf16(p["w1"]), b1=p["b1"],
                    dw_w=p["dw_w"], dw_b=p["dw_b"],
                    bn_s=bn_s, bn_t=bn_t,
                    w2=bf16(p["w2"]), b2=p["b2"])

    def prep_mhsa(p):
        d_model = p["w_out"].shape[0]
        relp = jnp.dot(p["pos_emb"], p["w_pos"])     # [2*clip+1, D], once
        return dict(ln_g=p["ln_g"], ln_b=p["ln_b"],
                    w_qkv=bf16(p["w_qkv"]), b_qkv=p["b_qkv"],
                    w_out=bf16(p["w_out"]), b_out=p["b_out"],
                    relp=bf16(relp),
                    pbu=p["pos_bias_u"].reshape(1, d_model),
                    pbv=p["pos_bias_v"].reshape(1, d_model))

    blocks = [dict(ff1=prep_ff(b["ff1"]), conv=prep_conv(b["conv"]),
                   mhsa=prep_mhsa(b["mhsa"]), ff2=prep_ff(b["ff2"]),
                   final_ln=b["final_ln"])
              for b in params["blocks"]]
    return dict(frontend=dict(w=bf16(params["frontend"]["w"]),
                              b=params["frontend"]["b"]),
                blocks=blocks)


# --------------------------------- main -------------------------------------

if __name__ == "__main__":
    B, T, F_IN = 2, 8, 16
    D_MODEL, D_FF, HEADS, CONV_K, CLIP, LAYERS = 32, 64, 4, 3, 4, 2

    key = jax.random.PRNGKey(0)
    k_data, k_param = jax.random.split(key)

    data_tensor = jax.random.normal(k_data, (B, T, F_IN), jnp.float32)
    # sequence_mask: 0 inside sequence, 1 outside (padding)
    sequence_mask = jnp.zeros((B, T), jnp.float32).at[1, 6:].set(1.0)

    raw_params = init_params(k_param, num_layers=LAYERS, f_in=F_IN,
                             d_model=D_MODEL, d_ff=D_FF, num_heads=HEADS,
                             conv_kernel=CONV_K, clipping=CLIP)
    params = prepare_params(raw_params)   # one-time: bf16 cast / BN fold / rel-pos

    fwd = jax.jit(functools.partial(encoder_forward, num_heads=HEADS,
                                    conv_kernel=CONV_K, clipping=CLIP))
    out, out_mask = fwd(data_tensor, sequence_mask, params)
    jax.block_until_ready(out)

    assert out.shape == (B, T, D_MODEL)
    assert out_mask.shape == (B, T)
    assert bool(jnp.all(jnp.isfinite(out.astype(jnp.float32))))
    print("KERNEL_OK")
</pallas_src>

<mosaic_0001>
module attributes {stable_mosaic.version = 11 : i64} {
  func.func @probe_kernel(%arg0: i32, %arg1: memref<8x128xf32, #tpu.memory_space<vmem>>, %arg2: memref<8x128xf32, #tpu.memory_space<vmem>>) attributes {dimension_semantics = [#tpu.dimension_semantics<arbitrary>], iteration_bounds = array<i64: 2>, scalar_prefetch = 0 : i64, scratch_operands = 0 : i64, tpu.core_type = #tpu.core_type<tc>, window_params = [{pipeline_mode = #tpu.pipeline_mode<synchronous>, transform_indices = @transform_0, window_bounds = array<i64: 8, 128>}, {pipeline_mode = #tpu.pipeline_mode<synchronous>, transform_indices = @transform_1, window_bounds = array<i64: 8, 128>}]} {
    %c0 = arith.constant 0 : index
    %c0_0 = arith.constant 0 : index
    %0 = vector.load %arg1[%c0, %c0_0] : memref<8x128xf32, #tpu.memory_space<vmem>>, vector<8x128xf32>
    %cst = arith.constant 1.000000e+00 : f32
    %1 = vector.broadcast %cst : f32 to vector<8x128xf32>
    %2 = arith.addf %0, %1 : vector<8x128xf32>
    %c0_1 = arith.constant 0 : index
    %c0_2 = arith.constant 0 : index
    %3 = vector.load %arg2[%c0_1, %c0_2] : memref<8x128xf32, #tpu.memory_space<vmem>>, vector<8x128xf32>
    tpu.vector_store %arg2[%c0_1, %c0_2], %2 {strides = array<i32>} : memref<8x128xf32, #tpu.memory_space<vmem>>, vector<8x128xf32>,
    return
  }
  func.func @transform_0(%arg0: i32) -> (i32, i32) {
    %c0_i32 = arith.constant 0 : i32
    %c0_i32_0 = arith.constant 0 : i32
    %c0_i32_1 = arith.constant 0 : i32
    return %c0_i32, %c0_i32_0 : i32, i32
  }
  func.func @transform_1(%arg0: i32) -> (i32, i32) {
    %c0_i32 = arith.constant 0 : i32
    %c0_i32_0 = arith.constant 0 : i32
    %c0_i32_1 = arith.constant 0 : i32
    return %c0_i32, %c0_i32_0 : i32, i32
  }
}

module attributes {stable_mosaic.version = 11 : i64} {
  func.func @ff_kernel(%arg0: i32, %arg1: memref<16x32xbf16, #tpu.memory_space<vmem>>, %arg2: memref<1x32xf32, #tpu.memory_space<vmem>>, %arg3: memref<1x32xf32, #tpu.memory_space<vmem>>, %arg4: memref<32x64xbf16, #tpu.memory_space<vmem>>, %arg5: memref<1x64xf32, #tpu.memory_space<vmem>>, %arg6: memref<64x32xbf16, #tpu.memory_space<vmem>>, %arg7: memref<1x32xf32, #tpu.memory_space<vmem>>, %arg8: memref<16x32xbf16, #tpu.memory_space<vmem>>) attributes {dimension_semantics = [#tpu.dimension_semantics<parallel>], iteration_bounds = array<i64: 1>, scalar_prefetch = 0 : i64, scratch_operands = 0 : i64, tpu.core_type = #tpu.core_type<tc>, window_params = [{transform_indices = @transform_0, window_bounds = array<i64: 16, 32>}, {pipeline_mode = #tpu.pipeline_mode<synchronous>, transform_indices = @transform_1, window_bounds = array<i64: 1, 32>}, {pipeline_mode = #tpu.pipeline_mode<synchronous>, transform_indices = @transform_2, window_bounds = array<i64: 1, 32>}, {pipeline_mode = #tpu.pipeline_mode<synchronous>, transform_indices = @transform_3, window_bounds = array<i64: 32, 64>}, {pipeline_mode = #tpu.pipeline_mode<synchronous>, transform_indices = @transform_4, window_bounds = array<i64: 1, 64>}, {pipeline_mode = #tpu.pipeline_mode<synchronous>, transform_indices = @transform_5, window_bounds = array<i64: 64, 32>}, {pipeline_mode = #tpu.pipeline_mode<synchronous>, transform_indices = @transform_6, window_bounds = array<i64: 1, 32>}, {transform_indices = @transform_7, window_bounds = array<i64: 16, 32>}]} {
    %c0 = arith.constant 0 : index
    %c0_0 = arith.constant 0 : index
    %0 = vector.load %arg1[%c0, %c0_0] : memref<16x32xbf16, #tpu.memory_space<vmem>>, vector<16x32xbf16>
    %c0_1 = arith.constant 0 : index
    %c0_2 = arith.constant 0 : index
    %1 = vector.load %arg2[%c0_1, %c0_2] : memref<1x32xf32, #tpu.memory_space<vmem>>, vector<1x32xf32>
    %c0_3 = arith.constant 0 : index
    %c0_4 = arith.constant 0 : index
    %2 = vector.load %arg3[%c0_3, %c0_4] : memref<1x32xf32, #tpu.memory_space<vmem>>, vector<1x32xf32>
    %c0_5 = arith.constant 0 : index
    %c0_6 = arith.constant 0 : index
    %3 = vector.load %arg4[%c0_5, %c0_6] : memref<32x64xbf16, #tpu.memory_space<vmem>>, vector<32x64xbf16>
    %c0_7 = arith.constant 0 : index
    %c0_8 = arith.constant 0 : index
    %4 = vector.load %arg5[%c0_7, %c0_8] : memref<1x64xf32, #tpu.memory_space<vmem>>, vector<1x64xf32>
    %c0_9 = arith.constant 0 : index
    %c0_10 = arith.constant 0 : index
    %5 = vector.load %arg6[%c0_9, %c0_10] : memref<64x32xbf16, #tpu.memory_space<vmem>>, vector<64x32xbf16>
    %c0_11 = arith.constant 0 : index
    %c0_12 = arith.constant 0 : index
    %6 = vector.load %arg7[%c0_11, %c0_12] : memref<1x32xf32, #tpu.memory_space<vmem>>, vector<1x32xf32>
    %7 = arith.extf %0 : vector<16x32xbf16> to vector<16x32xf32>
    %cst = arith.constant dense<0.000000e+00> : vector<16xf32>
    %8 = vector.multi_reduction <add>, %7, %cst [1] : vector<16x32xf32> to vector<16xf32>
    %9 = vector.shape_cast %8 : vector<16xf32> to vector<16x1xf32>
    %cst_13 = arith.constant 3.200000e+01 : f32
    %10 = vector.broadcast %cst_13 : f32 to vector<16x1xf32>
    %11 = arith.divf %9, %10 : vector<16x1xf32>
    %12 = vector.broadcast %11 : vector<16x1xf32> to vector<16x32xf32>
    %13 = arith.subf %7, %12 : vector<16x32xf32>
    %14 = arith.mulf %13, %13 : vector<16x32xf32>
    %cst_14 = arith.constant dense<0.000000e+00> : vector<16xf32>
    %15 = vector.multi_reduction <add>, %14, %cst_14 [1] : vector<16x32xf32> to vector<16xf32>
    %16 = vector.shape_cast %15 : vector<16xf32> to vector<16x1xf32>
    %cst_15 = arith.constant 3.200000e+01 : f32
    %17 = vector.broadcast %cst_15 : f32 to vector<16x1xf32>
    %18 = arith.divf %16, %17 : vector<16x1xf32>
    %19 = vector.broadcast %11 : vector<16x1xf32> to vector<16x32xf32>
    %20 = arith.subf %7, %19 : vector<16x32xf32>
    %cst_16 = arith.constant 9.99999974E-6 : f32
    %21 = vector.broadcast %cst_16 : f32 to vector<16x1xf32>
    %22 = arith.addf %18, %21 : vector<16x1xf32>
    %23 = math.rsqrt %22 : vector<16x1xf32>
    %24 = vector.broadcast %23 : vector<16x1xf32> to vector<16x32xf32>
    %25 = arith.mulf %20, %24 : vector<16x32xf32>
    %26 = vector.broadcast %1 : vector<1x32xf32> to vector<16x32xf32>
    %27 = arith.mulf %25, %26 : vector<16x32xf32>
    %28 = vector.broadcast %2 : vector<1x32xf32> to vector<16x32xf32>
    %29 = arith.addf %27, %28 : vector<16x32xf32>
    %30 = arith.truncf %29 : vector<16x32xf32> to vector<16x32xbf16>
    %cst_17 = arith.constant dense<0.000000e+00> : vector<16x64xf32>
    %31 = tpu.matmul %30, %3, %cst_17 {dimension_numbers = #tpu.dot_dimension_numbers<[1], [0], [0], [1], [0, 0, 1, 1], [], []>} : vector<16x32xbf16>, vector<32x64xbf16>, vector<16x64xf32> -> vector<16x64xf32>
    %32 = vector.broadcast %4 : vector<1x64xf32> to vector<16x64xf32>
    %33 = arith.addf %31, %32 : vector<16x64xf32>
    %34 = arith.negf %33 : vector<16x64xf32>
    %35 = math.exp %34 : vector<16x64xf32>
    %cst_18 = arith.constant 1.000000e+00 : f32
    %36 = vector.broadcast %cst_18 : f32 to vector<16x64xf32>
    %37 = arith.addf %36, %35 : vector<16x64xf32>
    %38 = arith.divf %36, %37 : vector<16x64xf32>
    %39 = arith.mulf %33, %38 : vector<16x64xf32>
    %40 = arith.truncf %39 : vector<16x64xf32> to vector<16x64xbf16>
    %cst_19 = arith.constant dense<0.000000e+00> : vector<16x32xf32>
    %41 = tpu.matmul %40, %5, %cst_19 {dimension_numbers = #tpu.dot_dimension_numbers<[1], [0], [0], [1], [0, 0, 1, 1], [], []>} : vector<16x64xbf16>, vector<64x32xbf16>, vector<16x32xf32> -> vector<16x32xf32>
    %42 = vector.broadcast %6 : vector<1x32xf32> to vector<16x32xf32>
    %43 = arith.addf %41, %42 : vector<16x32xf32>
    %cst_20 = arith.constant 5.000000e-01 : f32
    %44 = vector.broadcast %cst_20 : f32 to vector<16x32xf32>
    %45 = arith.mulf %44, %7 : vector<16x32xf32>
    %46 = arith.addf %45, %43 : vector<16x32xf32>
    %47 = arith.truncf %46 : vector<16x32xf32> to vector<16x32xbf16>
    %c0_21 = arith.constant 0 : index
    %c0_22 = arith.constant 0 : index
    %48 = vector.load %arg8[%c0_21, %c0_22] : memref<16x32xbf16, #tpu.memory_space<vmem>>, vector<16x32xbf16>
    tpu.vector_store %arg8[%c0_21, %c0_22], %47 {strides = array<i32>} : memref<16x32xbf16, #tpu.memory_space<vmem>>, vector<16x32xbf16>,
    return
  }
  func.func @transform_0(%arg0: i32) -> (i32, i32) {
    %c0_i32 = arith.constant 0 : i32
    %c0_i32_0 = arith.constant 0 : i32
    return %arg0, %c0_i32 : i32, i32
  }
  func.func @transform_1(%arg0: i32) -> (i32, i32) {
    %c0_i32 = arith.constant 0 : i32
    %c0_i32_0 = arith.constant 0 : i32
    %c0_i32_1 = arith.constant 0 : i32
    return %c0_i32, %c0_i32_0 : i32, i32
  }
  func.func @transform_2(%arg0: i32) -> (i32, i32) {
    %c0_i32 = arith.constant 0 : i32
    %c0_i32_0 = arith.constant 0 : i32
    %c0_i32_1 = arith.constant 0 : i32
    return %c0_i32, %c0_i32_0 : i32, i32
  }
  func.func @transform_3(%arg0: i32) -> (i32, i32) {
    %c0_i32 = arith.constant 0 : i32
    %c0_i32_0 = arith.constant 0 : i32
    %c0_i32_1 = arith.constant 0 : i32
    return %c0_i32, %c0_i32_0 : i32, i32
  }
  func.func @transform_4(%arg0: i32) -> (i32, i32) {
    %c0_i32 = arith.constant 0 : i32
    %c0_i32_0 = arith.constant 0 : i32
    %c0_i32_1 = arith.constant 0 : i32
    return %c0_i32, %c0_i32_0 : i32, i32
  }
  func.func @transform_5(%arg0: i32) -> (i32, i32) {
    %c0_i32 = arith.constant 0 : i32
    %c0_i32_0 = arith.constant 0 : i32
    %c0_i32_1 = arith.constant 0 : i32
    return %c0_i32, %c0_i32_0 : i32, i32
  }
  func.func @transform_6(%arg0: i32) -> (i32, i32) {
    %c0_i32 = arith.constant 0 : i32
    %c0_i32_0 = arith.constant 0 : i32
    %c0_i32_1 = arith.constant 0 : i32
    return %c0_i32, %c0_i32_0 : i32, i32
  }
  func.func @transform_7(%arg0: i32) -> (i32, i32) {
    %c0_i32 = arith.constant 0 : i32
    %c0_i32_0 = arith.constant 0 : i32
    return %arg0, %c0_i32 : i32, i32
  }
}

module attributes {stable_mosaic.version = 11 : i64} {
  func.func @linear_kernel(%arg0: i32, %arg1: memref<16x16xf32, #tpu.memory_space<vmem>>, %arg2: memref<16x32xbf16, #tpu.memory_space<vmem>>, %arg3: memref<1x32xf32, #tpu.memory_space<vmem>>, %arg4: memref<16x32xbf16, #tpu.memory_space<vmem>>) attributes {dimension_semantics = [#tpu.dimension_semantics<parallel>], iteration_bounds = array<i64: 1>, scalar_prefetch = 0 : i64, scratch_operands = 0 : i64, tpu.core_type = #tpu.core_type<tc>, window_params = [{transform_indices = @transform_0, window_bounds = array<i64: 16, 16>}, {pipeline_mode = #tpu.pipeline_mode<synchronous>, transform_indices = @transform_1, window_bounds = array<i64: 16, 32>}, {pipeline_mode = #tpu.pipeline_mode<synchronous>, transform_indices = @transform_2, window_bounds = array<i64: 1, 32>}, {transform_indices = @transform_3, window_bounds = array<i64: 16, 32>}]} {
    %c0 = arith.constant 0 : index
    %c0_0 = arith.constant 0 : index
    %0 = vector.load %arg1[%c0, %c0_0] : memref<16x16xf32, #tpu.memory_space<vmem>>, vector<16x16xf32>
    %1 = arith.truncf %0 : vector<16x16xf32> to vector<16x16xbf16>
    %c0_1 = arith.constant 0 : index
    %c0_2 = arith.constant 0 : index
    %2 = vector.load %arg2[%c0_1, %c0_2] : memref<16x32xbf16, #tpu.memory_space<vmem>>, vector<16x32xbf16>
    %cst = arith.constant dense<0.000000e+00> : vector<16x32xf32>
    %3 = tpu.matmul %1, %2, %cst {dimension_numbers = #tpu.dot_dimension_numbers<[1], [0], [0], [1], [0, 0, 1, 1], [], []>} : vector<16x16xbf16>, vector<16x32xbf16>, vector<16x32xf32> -> vector<16x32xf32>
    %c0_3 = arith.constant 0 : index
    %c0_4 = arith.constant 0 : index
    %4 = vector.load %arg3[%c0_3, %c0_4] : memref<1x32xf32, #tpu.memory_space<vmem>>, vector<1x32xf32>
    %5 = vector.broadcast %4 : vector<1x32xf32> to vector<16x32xf32>
    %6 = arith.addf %3, %5 : vector<16x32xf32>
    %7 = arith.truncf %6 : vector<16x32xf32> to vector<16x32xbf16>
    %c0_5 = arith.constant 0 : index
    %c0_6 = arith.constant 0 : index
    %8 = vector.load %arg4[%c0_5, %c0_6] : memref<16x32xbf16, #tpu.memory_space<vmem>>, vector<16x32xbf16>
    tpu.vector_store %arg4[%c0_5, %c0_6], %7 {strides = array<i32>} : memref<16x32xbf16, #tpu.memory_space<vmem>>, vector<16x32xbf16>,
    return
  }
  func.func @transform_0(%arg0: i32) -> (i32, i32) {
    %c0_i32 = arith.constant 0 : i32
    %c0_i32_0 = arith.constant 0 : i32
    return %arg0, %c0_i32 : i32, i32
  }
  func.func @transform_1(%arg0: i32) -> (i32, i32) {
    %c0_i32 = arith.constant 0 : i32
    %c0_i32_0 = arith.constant 0 : i32
    %c0_i32_1 = arith.constant 0 : i32
    return %c0_i32, %c0_i32_0 : i32, i32
  }
  func.func @transform_2(%arg0: i32) -> (i32, i32) {
    %c0_i32 = arith.constant 0 : i32
    %c0_i32_0 = arith.constant 0 : i32
    %c0_i32_1 = arith.constant 0 : i32
    return %c0_i32, %c0_i32_0 : i32, i32
  }
  func.func @transform_3(%arg0: i32) -> (i32, i32) {
    %c0_i32 = arith.constant 0 : i32
    %c0_i32_0 = arith.constant 0 : i32
    return %arg0, %c0_i32 : i32, i32
  }
}

module attributes {stable_mosaic.version = 11 : i64} {
  func.func @conv_module_kernel(%arg0: i32, %arg1: memref<1x8x32xbf16, #tpu.memory_space<vmem>>, %arg2: memref<1x32xf32, #tpu.memory_space<vmem>>, %arg3: memref<1x32xf32, #tpu.memory_space<vmem>>, %arg4: memref<32x64xbf16, #tpu.memory_space<vmem>>, %arg5: memref<1x64xf32, #tpu.memory_space<vmem>>, %arg6: memref<3x32xf32, #tpu.memory_space<vmem>>, %arg7: memref<1x32xf32, #tpu.memory_space<vmem>>, %arg8: memref<1x32xf32, #tpu.memory_space<vmem>>, %arg9: memref<1x32xf32, #tpu.memory_space<vmem>>, %arg10: memref<32x32xbf16, #tpu.memory_space<vmem>>, %arg11: memref<1x32xf32, #tpu.memory_space<vmem>>, %arg12: memref<1x8x32xbf16, #tpu.memory_space<vmem>>, %arg13: memref<10x32xf32, #tpu.memory_space<vmem>>) attributes {dimension_semantics = [#tpu.dimension_semantics<parallel>], iteration_bounds = array<i64: 2>, scalar_prefetch = 0 : i64, scratch_operands = 1 : i64, tpu.core_type = #tpu.core_type<tc>, window_params = [{transform_indices = @transform_0, window_bounds = array<i64: 1, 8, 32>}, {pipeline_mode = #tpu.pipeline_mode<synchronous>, transform_indices = @transform_1, window_bounds = array<i64: 1, 32>}, {pipeline_mode = #tpu.pipeline_mode<synchronous>, transform_indices = @transform_2, window_bounds = array<i64: 1, 32>}, {pipeline_mode = #tpu.pipeline_mode<synchronous>, transform_indices = @transform_3, window_bounds = array<i64: 32, 64>}, {pipeline_mode = #tpu.pipeline_mode<synchronous>, transform_indices = @transform_4, window_bounds = array<i64: 1, 64>}, {pipeline_mode = #tpu.pipeline_mode<synchronous>, transform_indices = @transform_5, window_bounds = array<i64: 3, 32>}, {pipeline_mode = #tpu.pipeline_mode<synchronous>, transform_indices = @transform_6, window_bounds = array<i64: 1, 32>}, {pipeline_mode = #tpu.pipeline_mode<synchronous>, transform_indices = @transform_7, window_bounds = array<i64: 1, 32>}, {pipeline_mode = #tpu.pipeline_mode<synchronous>, transform_indices = @transform_8, window_bounds = array<i64: 1, 32>}, {pipeline_mode = #tpu.pipeline_mode<synchronous>, transform_indices = @transform_9, window_bounds = array<i64: 32, 32>}, {pipeline_mode = #tpu.pipeline_mode<synchronous>, transform_indices = @transform_10, window_bounds = array<i64: 1, 32>}, {transform_indices = @transform_11, window_bounds = array<i64: 1, 8, 32>}]} {
    %c0 = arith.constant 0 : index
    %c0_0 = arith.constant 0 : index
    %c0_1 = arith.constant 0 : index
    %0 = vector.load %arg1[%c0, %c0_0, %c0_1] : memref<1x8x32xbf16, #tpu.memory_space<vmem>>, vector<1x8x32xbf16>
    %1 = vector.shape_cast %0 : vector<1x8x32xbf16> to vector<8x32xbf16>
    %2 = arith.extf %1 : vector<8x32xbf16> to vector<8x32xf32>
    %c0_2 = arith.constant 0 : index
    %c0_3 = arith.constant 0 : index
    %3 = vector.load %arg2[%c0_2, %c0_3] : memref<1x32xf32, #tpu.memory_space<vmem>>, vector<1x32xf32>
    %c0_4 = arith.constant 0 : index
    %c0_5 = arith.constant 0 : index
    %4 = vector.load %arg3[%c0_4, %c0_5] : memref<1x32xf32, #tpu.memory_space<vmem>>, vector<1x32xf32>
    %cst = arith.constant dense<0.000000e+00> : vector<8xf32>
    %5 = vector.multi_reduction <add>, %2, %cst [1] : vector<8x32xf32> to vector<8xf32>
    %6 = vector.shape_cast %5 : vector<8xf32> to vector<8x1xf32>
    %cst_6 = arith.constant 3.200000e+01 : f32
    %7 = vector.broadcast %cst_6 : f32 to vector<8x1xf32>
    %8 = arith.divf %6, %7 : vector<8x1xf32>
    %9 = vector.broadcast %8 : vector<8x1xf32> to vector<8x32xf32>
    %10 = arith.subf %2, %9 : vector<8x32xf32>
    %11 = arith.mulf %10, %10 : vector<8x32xf32>
    %cst_7 = arith.constant dense<0.000000e+00> : vector<8xf32>
    %12 = vector.multi_reduction <add>, %11, %cst_7 [1] : vector<8x32xf32> to vector<8xf32>
    %13 = vector.shape_cast %12 : vector<8xf32> to vector<8x1xf32>
    %cst_8 = arith.constant 3.200000e+01 : f32
    %14 = vector.broadcast %cst_8 : f32 to vector<8x1xf32>
    %15 = arith.divf %13, %14 : vector<8x1xf32>
    %16 = vector.broadcast %8 : vector<8x1xf32> to vector<8x32xf32>
    %17 = arith.subf %2, %16 : vector<8x32xf32>
    %cst_9 = arith.constant 9.99999974E-6 : f32
    %18 = vector.broadcast %cst_9 : f32 to vector<8x1xf32>
    %19 = arith.addf %15, %18 : vector<8x1xf32>
    %20 = math.rsqrt %19 : vector<8x1xf32>
    %21 = vector.broadcast %20 : vector<8x1xf32> to vector<8x32xf32>
    %22 = arith.mulf %17, %21 : vector<8x32xf32>
    %23 = vector.broadcast %3 : vector<1x32xf32> to vector<8x32xf32>
    %24 = arith.mulf %22, %23 : vector<8x32xf32>
    %25 = vector.broadcast %4 : vector<1x32xf32> to vector<8x32xf32>
    %26 = arith.addf %24, %25 : vector<8x32xf32>
    %27 = arith.truncf %26 : vector<8x32xf32> to vector<8x32xbf16>
    %c0_10 = arith.constant 0 : index
    %c0_11 = arith.constant 0 : index
    %28 = vector.load %arg4[%c0_10, %c0_11] : memref<32x64xbf16, #tpu.memory_space<vmem>>, vector<32x64xbf16>
    %cst_12 = arith.constant dense<0.000000e+00> : vector<8x64xf32>
    %29 = tpu.matmul %27, %28, %cst_12 {dimension_numbers = #tpu.dot_dimension_numbers<[1], [0], [0], [1], [0, 0, 1, 1], [], []>} : vector<8x32xbf16>, vector<32x64xbf16>, vector<8x64xf32> -> vector<8x64xf32>
    %c0_13 = arith.constant 0 : index
    %c0_14 = arith.constant 0 : index
    %30 = vector.load %arg5[%c0_13, %c0_14] : memref<1x64xf32, #tpu.memory_space<vmem>>, vector<1x64xf32>
    %31 = vector.broadcast %30 : vector<1x64xf32> to vector<8x64xf32>
    %32 = arith.addf %29, %31 : vector<8x64xf32>
    %33 = vector.extract_strided_slice %32 {offsets = [0, 0], sizes = [8, 32], strides = [1, 1]} : vector<8x64xf32> to vector<8x32xf32>
    %34 = vector.extract_strided_slice %32 {offsets = [0, 32], sizes = [8, 32], strides = [1, 1]} : vector<8x64xf32> to vector<8x32xf32>
    %35 = arith.negf %34 : vector<8x32xf32>
    %36 = math.exp %35 : vector<8x32xf32>
    %cst_15 = arith.constant 1.000000e+00 : f32
    %37 = vector.broadcast %cst_15 : f32 to vector<8x32xf32>
    %38 = arith.addf %37, %36 : vector<8x32xf32>
    %39 = arith.divf %37, %38 : vector<8x32xf32>
    %40 = arith.mulf %33, %39 : vector<8x32xf32>
    %cst_16 = arith.constant 0.000000e+00 : f32
    %41 = vector.broadcast %cst_16 : f32 to vector<1x32xf32>
    %c0_17 = arith.constant 0 : index
    %c0_18 = arith.constant 0 : index
    %42 = vector.load %arg13[%c0_17, %c0_18] : memref<10x32xf32, #tpu.memory_space<vmem>>, vector<1x32xf32>
    tpu.vector_store %arg13[%c0_17, %c0_18], %41 {strides = array<i32>} : memref<10x32xf32, #tpu.memory_space<vmem>>, vector<1x32xf32>,
    %cst_19 = arith.constant 0.000000e+00 : f32
    %43 = vector.broadcast %cst_19 : f32 to vector<1x32xf32>
    %c9 = arith.constant 9 : index
    %c0_20 = arith.constant 0 : index
    %44 = vector.load %arg13[%c9, %c0_20] : memref<10x32xf32, #tpu.memory_space<vmem>>, vector<1x32xf32>
    tpu.vector_store %arg13[%c9, %c0_20], %43 {strides = array<i32>} : memref<10x32xf32, #tpu.memory_space<vmem>>, vector<1x32xf32>,
    %c1 = arith.constant 1 : index
    %c0_21 = arith.constant 0 : index
    %45 = vector.load %arg13[%c1, %c0_21] : memref<10x32xf32, #tpu.memory_space<vmem>>, vector<8x32xf32>
    tpu.vector_store %arg13[%c1, %c0_21], %40 {strides = array<i32>} : memref<10x32xf32, #tpu.memory_space<vmem>>, vector<8x32xf32>,
    %c0_22 = arith.constant 0 : index
    %c0_23 = arith.constant 0 : index
    %46 = vector.load %arg13[%c0_22, %c0_23] : memref<10x32xf32, #tpu.memory_space<vmem>>, vector<10x32xf32>
    %c0_24 = arith.constant 0 : index
    %c0_25 = arith.constant 0 : index
    %47 = vector.load %arg6[%c0_24, %c0_25] : memref<3x32xf32, #tpu.memory_space<vmem>>, vector<3x32xf32>
    %cst_26 = arith.constant 0.000000e+00 : f32
    %48 = vector.broadcast %cst_26 : f32 to vector<8x32xf32>
    %c0_27 = arith.constant 0 : index
    %c0_28 = arith.constant 0 : index
    %49 = vector.load %arg7[%c0_27, %c0_28] : memref<1x32xf32, #tpu.memory_space<vmem>>, vector<1x32xf32>
    %50 = vector.broadcast %49 : vector<1x32xf32> to vector<8x32xf32>
    %51 = arith.addf %48, %50 : vector<8x32xf32>
    %52 = vector.extract_strided_slice %46 {offsets = [0, 0], sizes = [8, 32], strides = [1, 1]} : vector<10x32xf32> to vector<8x32xf32>
    %53 = vector.extract_strided_slice %47 {offsets = [0, 0], sizes = [1, 32], strides = [1, 1]} : vector<3x32xf32> to vector<1x32xf32>
    %54 = vector.broadcast %53 : vector<1x32xf32> to vector<8x32xf32>
    %55 = arith.mulf %52, %54 : vector<8x32xf32>
    %56 = arith.addf %51, %55 : vector<8x32xf32>
    %57 = vector.extract_strided_slice %46 {offsets = [1, 0], sizes = [8, 32], strides = [1, 1]} : vector<10x32xf32> to vector<8x32xf32>
    %58 = vector.extract_strided_slice %47 {offsets = [1, 0], sizes = [1, 32], strides = [1, 1]} : vector<3x32xf32> to vector<1x32xf32>
    %59 = vector.broadcast %58 : vector<1x32xf32> to vector<8x32xf32>
    %60 = arith.mulf %57, %59 : vector<8x32xf32>
    %61 = arith.addf %56, %60 : vector<8x32xf32>
    %62 = vector.extract_strided_slice %46 {offsets = [2, 0], sizes = [8, 32], strides = [1, 1]} : vector<10x32xf32> to vector<8x32xf32>
    %63 = vector.extract_strided_slice %47 {offsets = [2, 0], sizes = [1, 32], strides = [1, 1]} : vector<3x32xf32> to vector<1x32xf32>
    %64 = vector.broadcast %63 : vector<1x32xf32> to vector<8x32xf32>
    %65 = arith.mulf %62, %64 : vector<8x32xf32>
    %66 = arith.addf %61, %65 : vector<8x32xf32>
    %c0_29 = arith.constant 0 : index
    %c0_30 = arith.constant 0 : index
    %67 = vector.load %arg8[%c0_29, %c0_30] : memref<1x32xf32, #tpu.memory_space<vmem>>, vector<1x32xf32>
    %68 = vector.broadcast %67 : vector<1x32xf32> to vector<8x32xf32>
    %69 = arith.mulf %66, %68 : vector<8x32xf32>
    %c0_31 = arith.constant 0 : index
    %c0_32 = arith.constant 0 : index
    %70 = vector.load %arg9[%c0_31, %c0_32] : memref<1x32xf32, #tpu.memory_space<vmem>>, vector<1x32xf32>
    %71 = vector.broadcast %70 : vector<1x32xf32> to vector<8x32xf32>
    %72 = arith.addf %69, %71 : vector<8x32xf32>
    %73 = arith.negf %72 : vector<8x32xf32>
    %74 = math.exp %73 : vector<8x32xf32>
    %cst_33 = arith.constant 1.000000e+00 : f32
    %75 = vector.broadcast %cst_33 : f32 to vector<8x32xf32>
    %76 = arith.addf %75, %74 : vector<8x32xf32>
    %77 = arith.divf %75, %76 : vector<8x32xf32>
    %78 = arith.mulf %72, %77 : vector<8x32xf32>
    %79 = arith.truncf %78 : vector<8x32xf32> to vector<8x32xbf16>
    %c0_34 = arith.constant 0 : index
    %c0_35 = arith.constant 0 : index
    %80 = vector.load %arg10[%c0_34, %c0_35] : memref<32x32xbf16, #tpu.memory_space<vmem>>, vector<32x32xbf16>
    %cst_36 = arith.constant dense<0.000000e+00> : vector<8x32xf32>
    %81 = tpu.matmul %79, %80, %cst_36 {dimension_numbers = #tpu.dot_dimension_numbers<[1], [0], [0], [1], [0, 0, 1, 1], [], []>} : vector<8x32xbf16>, vector<32x32xbf16>, vector<8x32xf32> -> vector<8x32xf32>
    %c0_37 = arith.constant 0 : index
    %c0_38 = arith.constant 0 : index
    %82 = vector.load %arg11[%c0_37, %c0_38] : memref<1x32xf32, #tpu.memory_space<vmem>>, vector<1x32xf32>
    %83 = vector.broadcast %82 : vector<1x32xf32> to vector<8x32xf32>
    %84 = arith.addf %81, %83 : vector<8x32xf32>
    %85 = arith.addf %2, %84 : vector<8x32xf32>
    %86 = vector.shape_cast %85 : vector<8x32xf32> to vector<1x8x32xf32>
    %87 = arith.truncf %86 : vector<1x8x32xf32> to vector<1x8x32xbf16>
    %c0_39 = arith.constant 0 : index
    %c0_40 = arith.constant 0 : index
    %c0_41 = arith.constant 0 : index
    %88 = vector.load %arg12[%c0_39, %c0_40, %c0_41] : memref<1x8x32xbf16, #tpu.memory_space<vmem>>, vector<1x8x32xbf16>
    tpu.vector_store %arg12[%c0_39, %c0_40, %c0_41], %87 {strides = array<i32>} : memref<1x8x32xbf16, #tpu.memory_space<vmem>>, vector<1x8x32xbf16>,
    return
  }
  func.func @transform_0(%arg0: i32) -> (i32, i32, i32) {
    %c0_i32 = arith.constant 0 : i32
    %c0_i32_0 = arith.constant 0 : i32
    %c0_i32_1 = arith.constant 0 : i32
    return %arg0, %c0_i32, %c0_i32_0 : i32, i32, i32
  }
  func.func @transform_1(%arg0: i32) -> (i32, i32) {
    %c0_i32 = arith.constant 0 : i32
    %c0_i32_0 = arith.constant 0 : i32
    %c0_i32_1 = arith.constant 0 : i32
    return %c0_i32, %c0_i32_0 : i32, i32
  }
  func.func @transform_2(%arg0: i32) -> (i32, i32) {
    %c0_i32 = arith.constant 0 : i32
    %c0_i32_0 = arith.constant 0 : i32
    %c0_i32_1 = arith.constant 0 : i32
    return %c0_i32, %c0_i32_0 : i32, i32
  }
  func.func @transform_3(%arg0: i32) -> (i32, i32) {
    %c0_i32 = arith.constant 0 : i32
    %c0_i32_0 = arith.constant 0 : i32
    %c0_i32_1 = arith.constant 0 : i32
    return %c0_i32, %c0_i32_0 : i32, i32
  }
  func.func @transform_4(%arg0: i32) -> (i32, i32) {
    %c0_i32 = arith.constant 0 : i32
    %c0_i32_0 = arith.constant 0 : i32
    %c0_i32_1 = arith.constant 0 : i32
    return %c0_i32, %c0_i32_0 : i32, i32
  }
  func.func @transform_5(%arg0: i32) -> (i32, i32) {
    %c0_i32 = arith.constant 0 : i32
    %c0_i32_0 = arith.constant 0 : i32
    %c0_i32_1 = arith.constant 0 : i32
    return %c0_i32, %c0_i32_0 : i32, i32
  }
  func.func @transform_6(%arg0: i32) -> (i32, i32) {
    %c0_i32 = arith.constant 0 : i32
    %c0_i32_0 = arith.constant 0 : i32
    %c0_i32_1 = arith.constant 0 : i32
    return %c0_i32, %c0_i32_0 : i32, i32
  }
  func.func @transform_7(%arg0: i32) -> (i32, i32) {
    %c0_i32 = arith.constant 0 : i32
    %c0_i32_0 = arith.constant 0 : i32
    %c0_i32_1 = arith.constant 0 : i32
    return %c0_i32, %c0_i32_0 : i32, i32
  }
  func.func @transform_8(%arg0: i32) -> (i32, i32) {
    %c0_i32 = arith.constant 0 : i32
    %c0_i32_0 = arith.constant 0 : i32
    %c0_i32_1 = arith.constant 0 : i32
    return %c0_i32, %c0_i32_0 : i32, i32
  }
  func.func @transform_9(%arg0: i32) -> (i32, i32) {
    %c0_i32 = arith.constant 0 : i32
    %c0_i32_0 = arith.constant 0 : i32
    %c0_i32_1 = arith.constant 0 : i32
    return %c0_i32, %c0_i32_0 : i32, i32
  }
  func.func @transform_10(%arg0: i32) -> (i32, i32) {
    %c0_i32 = arith.constant 0 : i32
    %c0_i32_0 = arith.constant 0 : i32
    %c0_i32_1 = arith.constant 0 : i32
    return %c0_i32, %c0_i32_0 : i32, i32
  }
  func.func @transform_11(%arg0: i32) -> (i32, i32, i32) {
    %c0_i32 = arith.constant 0 : i32
    %c0_i32_0 = arith.constant 0 : i32
    %c0_i32_1 = arith.constant 0 : i32
    return %arg0, %c0_i32, %c0_i32_0 : i32, i32, i32
  }
}

module attributes {stable_mosaic.version = 11 : i64} {
  func.func @mhsa_kernel(%arg0: i32, %arg1: memref<1x8x32xbf16, #tpu.memory_space<vmem>>, %arg2: memref<1x32xf32, #tpu.memory_space<vmem>>, %arg3: memref<1x32xf32, #tpu.memory_space<vmem>>, %arg4: memref<32x96xbf16, #tpu.memory_space<vmem>>, %arg5: memref<1x96xf32, #tpu.memory_space<vmem>>, %arg6: memref<1x32xf32, #tpu.memory_space<vmem>>, %arg7: memref<1x32xf32, #tpu.memory_space<vmem>>, %arg8: memref<9x32xbf16, #tpu.memory_space<vmem>>, %arg9: memref<1x1x8xf32, #tpu.memory_space<vmem>>, %arg10: memref<32x32xbf16, #tpu.memory_space<vmem>>, %arg11: memref<1x32xf32, #tpu.memory_space<vmem>>, %arg12: memref<1x8x32xbf16, #tpu.memory_space<vmem>>, %arg13: memref<8x32xbf16, #tpu.memory_space<vmem>>) attributes {dimension_semantics = [#tpu.dimension_semantics<parallel>], iteration_bounds = array<i64: 2>, scalar_prefetch = 0 : i64, scratch_operands = 1 : i64, tpu.core_type = #tpu.core_type<tc>, window_params = [{transform_indices = @transform_0, window_bounds = array<i64: 1, 8, 32>}, {pipeline_mode = #tpu.pipeline_mode<synchronous>, transform_indices = @transform_1, window_bounds = array<i64: 1, 32>}, {pipeline_mode = #tpu.pipeline_mode<synchronous>, transform_indices = @transform_2, window_bounds = array<i64: 1, 32>}, {pipeline_mode = #tpu.pipeline_mode<synchronous>, transform_indices = @transform_3, window_bounds = array<i64: 32, 96>}, {pipeline_mode = #tpu.pipeline_mode<synchronous>, transform_indices = @transform_4, window_bounds = array<i64: 1, 96>}, {pipeline_mode = #tpu.pipeline_mode<synchronous>, transform_indices = @transform_5, window_bounds = array<i64: 1, 32>}, {pipeline_mode = #tpu.pipeline_mode<synchronous>, transform_indices = @transform_6, window_bounds = array<i64: 1, 32>}, {pipeline_mode = #tpu.pipeline_mode<synchronous>, transform_indices = @transform_7, window_bounds = array<i64: 9, 32>}, {transform_indices = @transform_8, window_bounds = array<i64: 1, 1, 8>}, {pipeline_mode = #tpu.pipeline_mode<synchronous>, transform_indices = @transform_9, window_bounds = array<i64: 32, 32>}, {pipeline_mode = #tpu.pipeline_mode<synchronous>, transform_indices = @transform_10, window_bounds = array<i64: 1, 32>}, {transform_indices = @transform_11, window_bounds = array<i64: 1, 8, 32>}]} {
    %c0 = arith.constant 0 : index
    %c0_0 = arith.constant 0 : index
    %c0_1 = arith.constant 0 : index
    %0 = vector.load %arg1[%c0, %c0_0, %c0_1] : memref<1x8x32xbf16, #tpu.memory_space<vmem>>, vector<1x8x32xbf16>
    %1 = vector.shape_cast %0 : vector<1x8x32xbf16> to vector<8x32xbf16>
    %2 = arith.extf %1 : vector<8x32xbf16> to vector<8x32xf32>
    %c0_2 = arith.constant 0 : index
    %c0_3 = arith.constant 0 : index
    %3 = vector.load %arg2[%c0_2, %c0_3] : memref<1x32xf32, #tpu.memory_space<vmem>>, vector<1x32xf32>
    %c0_4 = arith.constant 0 : index
    %c0_5 = arith.constant 0 : index
    %4 = vector.load %arg3[%c0_4, %c0_5] : memref<1x32xf32, #tpu.memory_space<vmem>>, vector<1x32xf32>
    %cst = arith.constant dense<0.000000e+00> : vector<8xf32>
    %5 = vector.multi_reduction <add>, %2, %cst [1] : vector<8x32xf32> to vector<8xf32>
    %6 = vector.shape_cast %5 : vector<8xf32> to vector<8x1xf32>
    %cst_6 = arith.constant 3.200000e+01 : f32
    %7 = vector.broadcast %cst_6 : f32 to vector<8x1xf32>
    %8 = arith.divf %6, %7 : vector<8x1xf32>
    %9 = vector.broadcast %8 : vector<8x1xf32> to vector<8x32xf32>
    %10 = arith.subf %2, %9 : vector<8x32xf32>
    %11 = arith.mulf %10, %10 : vector<8x32xf32>
    %cst_7 = arith.constant dense<0.000000e+00> : vector<8xf32>
    %12 = vector.multi_reduction <add>, %11, %cst_7 [1] : vector<8x32xf32> to vector<8xf32>
    %13 = vector.shape_cast %12 : vector<8xf32> to vector<8x1xf32>
    %cst_8 = arith.constant 3.200000e+01 : f32
    %14 = vector.broadcast %cst_8 : f32 to vector<8x1xf32>
    %15 = arith.divf %13, %14 : vector<8x1xf32>
    %16 = vector.broadcast %8 : vector<8x1xf32> to vector<8x32xf32>
    %17 = arith.subf %2, %16 : vector<8x32xf32>
    %cst_9 = arith.constant 9.99999974E-6 : f32
    %18 = vector.broadcast %cst_9 : f32 to vector<8x1xf32>
    %19 = arith.addf %15, %18 : vector<8x1xf32>
    %20 = math.rsqrt %19 : vector<8x1xf32>
    %21 = vector.broadcast %20 : vector<8x1xf32> to vector<8x32xf32>
    %22 = arith.mulf %17, %21 : vector<8x32xf32>
    %23 = vector.broadcast %3 : vector<1x32xf32> to vector<8x32xf32>
    %24 = arith.mulf %22, %23 : vector<8x32xf32>
    %25 = vector.broadcast %4 : vector<1x32xf32> to vector<8x32xf32>
    %26 = arith.addf %24, %25 : vector<8x32xf32>
    %27 = arith.truncf %26 : vector<8x32xf32> to vector<8x32xbf16>
    %c0_10 = arith.constant 0 : index
    %c0_11 = arith.constant 0 : index
    %28 = vector.load %arg4[%c0_10, %c0_11] : memref<32x96xbf16, #tpu.memory_space<vmem>>, vector<32x96xbf16>
    %cst_12 = arith.constant dense<0.000000e+00> : vector<8x96xf32>
    %29 = tpu.matmul %27, %28, %cst_12 {dimension_numbers = #tpu.dot_dimension_numbers<[1], [0], [0], [1], [0, 0, 1, 1], [], []>} : vector<8x32xbf16>, vector<32x96xbf16>, vector<8x96xf32> -> vector<8x96xf32>
    %c0_13 = arith.constant 0 : index
    %c0_14 = arith.constant 0 : index
    %30 = vector.load %arg5[%c0_13, %c0_14] : memref<1x96xf32, #tpu.memory_space<vmem>>, vector<1x96xf32>
    %31 = vector.broadcast %30 : vector<1x96xf32> to vector<8x96xf32>
    %32 = arith.addf %29, %31 : vector<8x96xf32>
    %33 = vector.extract_strided_slice %32 {offsets = [0, 0], sizes = [8, 32], strides = [1, 1]} : vector<8x96xf32> to vector<8x32xf32>
    %34 = vector.extract_strided_slice %32 {offsets = [0, 32], sizes = [8, 32], strides = [1, 1]} : vector<8x96xf32> to vector<8x32xf32>
    %35 = arith.truncf %34 : vector<8x32xf32> to vector<8x32xbf16>
    %36 = vector.extract_strided_slice %32 {offsets = [0, 64], sizes = [8, 32], strides = [1, 1]} : vector<8x96xf32> to vector<8x32xf32>
    %37 = arith.truncf %36 : vector<8x32xf32> to vector<8x32xbf16>
    %c0_15 = arith.constant 0 : index
    %c0_16 = arith.constant 0 : index
    %38 = vector.load %arg6[%c0_15, %c0_16] : memref<1x32xf32, #tpu.memory_space<vmem>>, vector<1x32xf32>
    %39 = vector.broadcast %38 : vector<1x32xf32> to vector<8x32xf32>
    %40 = arith.addf %33, %39 : vector<8x32xf32>
    %cst_17 = arith.constant 0.353553385 : f32
    %41 = vector.broadcast %cst_17 : f32 to vector<8x32xf32>
    %42 = arith.mulf %40, %41 : vector<8x32xf32>
    %43 = arith.truncf %42 : vector<8x32xf32> to vector<8x32xbf16>
    %c0_18 = arith.constant 0 : index
    %c0_19 = arith.constant 0 : index
    %44 = vector.load %arg7[%c0_18, %c0_19] : memref<1x32xf32, #tpu.memory_space<vmem>>, vector<1x32xf32>
    %45 = vector.broadcast %44 : vector<1x32xf32> to vector<8x32xf32>
    %46 = arith.addf %33, %45 : vector<8x32xf32>
    %cst_20 = arith.constant 0.353553385 : f32
    %47 = vector.broadcast %cst_20 : f32 to vector<8x32xf32>
    %48 = arith.mulf %46, %47 : vector<8x32xf32>
    %49 = arith.truncf %48 : vector<8x32xf32> to vector<8x32xbf16>
    %c0_21 = arith.constant 0 : index
    %c0_22 = arith.constant 0 : index
    %50 = vector.load %arg8[%c0_21, %c0_22] : memref<9x32xbf16, #tpu.memory_space<vmem>>, vector<9x32xbf16>
    %c0_23 = arith.constant 0 : index
    %c0_24 = arith.constant 0 : index
    %c0_25 = arith.constant 0 : index
    %51 = vector.load %arg9[%c0_23, %c0_24, %c0_25] : memref<1x1x8xf32, #tpu.memory_space<vmem>>, vector<1x1x8xf32>
    %52 = vector.shape_cast %51 : vector<1x1x8xf32> to vector<1x8xf32>
    %53 = tpu.iota {dimensions = array<i32: 0>} : vector<8x8xi32>
    %54 = tpu.iota {dimensions = array<i32: 1>} : vector<8x8xi32>
    %55 = arith.subi %54, %53 : vector<8x8xi32>
    %c-4_i32 = arith.constant -4 : i32
    %c4_i32 = arith.constant 4 : i32
    %56 = vector.broadcast %c-4_i32 : i32 to vector<8x8xi32>
    %57 = arith.maxsi %56, %55 : vector<8x8xi32>
    %58 = vector.broadcast %c4_i32 : i32 to vector<8x8xi32>
    %59 = arith.minsi %58, %57 : vector<8x8xi32>
    %c4_i32_26 = arith.constant 4 : i32
    %60 = vector.broadcast %c4_i32_26 : i32 to vector<8x8xi32>
    %61 = arith.addi %59, %60 : vector<8x8xi32>
    %62 = vector.extract_strided_slice %43 {offsets = [0, 0], sizes = [8, 8], strides = [1, 1]} : vector<8x32xbf16> to vector<8x8xbf16>
    %63 = vector.extract_strided_slice %49 {offsets = [0, 0], sizes = [8, 8], strides = [1, 1]} : vector<8x32xbf16> to vector<8x8xbf16>
    %64 = vector.extract_strided_slice %35 {offsets = [0, 0], sizes = [8, 8], strides = [1, 1]} : vector<8x32xbf16> to vector<8x8xbf16>
    %65 = vector.extract_strided_slice %37 {offsets = [0, 0], sizes = [8, 8], strides = [1, 1]} : vector<8x32xbf16> to vector<8x8xbf16>
    %66 = vector.extract_strided_slice %50 {offsets = [0, 0], sizes = [9, 8], strides = [1, 1]} : vector<9x32xbf16> to vector<9x8xbf16>
    %cst_27 = arith.constant dense<0.000000e+00> : vector<8x8xf32>
    %67 = tpu.matmul %62, %64, %cst_27 {dimension_numbers = #tpu.dot_dimension_numbers<[1], [1], [0], [0], [0, 0, 1, 0], [], []>} : vector<8x8xbf16>, vector<8x8xbf16>, vector<8x8xf32> -> vector<8x8xf32>
    %cst_28 = arith.constant dense<0.000000e+00> : vector<8x9xf32>
    %68 = tpu.matmul %63, %66, %cst_28 {dimension_numbers = #tpu.dot_dimension_numbers<[1], [1], [0], [0], [0, 0, 1, 0], [], []>} : vector<8x8xbf16>, vector<9x8xbf16>, vector<8x9xf32> -> vector<8x9xf32>
    %cst_29 = arith.constant 0.000000e+00 : f32
    %69 = vector.broadcast %cst_29 : f32 to vector<8x8xf32>
    %c0_i32 = arith.constant 0 : i32
    %70 = vector.broadcast %c0_i32 : i32 to vector<8x8xi32>
    %71 = arith.cmpi eq, %61, %70 : vector<8x8xi32>
    %72 = vector.extract_strided_slice %68 {offsets = [0, 0], sizes = [8, 1], strides = [1, 1]} : vector<8x9xf32> to vector<8x1xf32>
    %cst_30 = arith.constant 0.000000e+00 : f32
    %73 = vector.shape_cast %72 : vector<8x1xf32> to vector<8x1xf32>
    %74 = vector.broadcast %73 : vector<8x1xf32> to vector<8x8xf32>
    %75 = vector.broadcast %cst_30 : f32 to vector<8x8xf32>
    %76 = arith.select %71, %74, %75 : vector<8x8xi1>, vector<8x8xf32>
    %77 = arith.addf %69, %76 : vector<8x8xf32>
    %c1_i32 = arith.constant 1 : i32
    %78 = vector.broadcast %c1_i32 : i32 to vector<8x8xi32>
    %79 = arith.cmpi eq, %61, %78 : vector<8x8xi32>
    %80 = vector.extract_strided_slice %68 {offsets = [0, 1], sizes = [8, 1], strides = [1, 1]} : vector<8x9xf32> to vector<8x1xf32>
    %cst_31 = arith.constant 0.000000e+00 : f32
    %81 = vector.shape_cast %80 : vector<8x1xf32> to vector<8x1xf32>
    %82 = vector.broadcast %81 : vector<8x1xf32> to vector<8x8xf32>
    %83 = vector.broadcast %cst_31 : f32 to vector<8x8xf32>
    %84 = arith.select %79, %82, %83 : vector<8x8xi1>, vector<8x8xf32>
    %85 = arith.addf %77, %84 : vector<8x8xf32>
    %c2_i32 = arith.constant 2 : i32
    %86 = vector.broadcast %c2_i32 : i32 to vector<8x8xi32>
    %87 = arith.cmpi eq, %61, %86 : vector<8x8xi32>
    %88 = vector.extract_strided_slice %68 {offsets = [0, 2], sizes = [8, 1], strides = [1, 1]} : vector<8x9xf32> to vector<8x1xf32>
    %cst_32 = arith.constant 0.000000e+00 : f32
    %89 = vector.shape_cast %88 : vector<8x1xf32> to vector<8x1xf32>
    %90 = vector.broadcast %89 : vector<8x1xf32> to vector<8x8xf32>
    %91 = vector.broadcast %cst_32 : f32 to vector<8x8xf32>
    %92 = arith.select %87, %90, %91 : vector<8x8xi1>, vector<8x8xf32>
    %93 = arith.addf %85, %92 : vector<8x8xf32>
    %c3_i32 = arith.constant 3 : i32
    %94 = vector.broadcast %c3_i32 : i32 to vector<8x8xi32>
    %95 = arith.cmpi eq, %61, %94 : vector<8x8xi32>
    %96 = vector.extract_strided_slice %68 {offsets = [0, 3], sizes = [8, 1], strides = [1, 1]} : vector<8x9xf32> to vector<8x1xf32>
    %cst_33 = arith.constant 0.000000e+00 : f32
    %97 = vector.shape_cast %96 : vector<8x1xf32> to vector<8x1xf32>
    %98 = vector.broadcast %97 : vector<8x1xf32> to vector<8x8xf32>
    %99 = vector.broadcast %cst_33 : f32 to vector<8x8xf32>
    %100 = arith.select %95, %98, %99 : vector<8x8xi1>, vector<8x8xf32>
    %101 = arith.addf %93, %100 : vector<8x8xf32>
    %c4_i32_34 = arith.constant 4 : i32
    %102 = vector.broadcast %c4_i32_34 : i32 to vector<8x8xi32>
    %103 = arith.cmpi eq, %61, %102 : vector<8x8xi32>
    %104 = vector.extract_strided_slice %68 {offsets = [0, 4], sizes = [8, 1], strides = [1, 1]} : vector<8x9xf32> to vector<8x1xf32>
    %cst_35 = arith.constant 0.000000e+00 : f32
    %105 = vector.shape_cast %104 : vector<8x1xf32> to vector<8x1xf32>
    %106 = vector.broadcast %105 : vector<8x1xf32> to vector<8x8xf32>
    %107 = vector.broadcast %cst_35 : f32 to vector<8x8xf32>
    %108 = arith.select %103, %106, %107 : vector<8x8xi1>, vector<8x8xf32>
    %109 = arith.addf %101, %108 : vector<8x8xf32>
    %c5_i32 = arith.constant 5 : i32
    %110 = vector.broadcast %c5_i32 : i32 to vector<8x8xi32>
    %111 = arith.cmpi eq, %61, %110 : vector<8x8xi32>
    %112 = vector.extract_strided_slice %68 {offsets = [0, 5], sizes = [8, 1], strides = [1, 1]} : vector<8x9xf32> to vector<8x1xf32>
    %cst_36 = arith.constant 0.000000e+00 : f32
    %113 = vector.shape_cast %112 : vector<8x1xf32> to vector<8x1xf32>
    %114 = vector.broadcast %113 : vector<8x1xf32> to vector<8x8xf32>
    %115 = vector.broadcast %cst_36 : f32 to vector<8x8xf32>
    %116 = arith.select %111, %114, %115 : vector<8x8xi1>, vector<8x8xf32>
    %117 = arith.addf %109, %116 : vector<8x8xf32>
    %c6_i32 = arith.constant 6 : i32
    %118 = vector.broadcast %c6_i32 : i32 to vector<8x8xi32>
    %119 = arith.cmpi eq, %61, %118 : vector<8x8xi32>
    %120 = vector.extract_strided_slice %68 {offsets = [0, 6], sizes = [8, 1], strides = [1, 1]} : vector<8x9xf32> to vector<8x1xf32>
    %cst_37 = arith.constant 0.000000e+00 : f32
    %121 = vector.shape_cast %120 : vector<8x1xf32> to vector<8x1xf32>
    %122 = vector.broadcast %121 : vector<8x1xf32> to vector<8x8xf32>
    %123 = vector.broadcast %cst_37 : f32 to vector<8x8xf32>
    %124 = arith.select %119, %122, %123 : vector<8x8xi1>, vector<8x8xf32>
    %125 = arith.addf %117, %124 : vector<8x8xf32>
    %c7_i32 = arith.constant 7 : i32
    %126 = vector.broadcast %c7_i32 : i32 to vector<8x8xi32>
    %127 = arith.cmpi eq, %61, %126 : vector<8x8xi32>
    %128 = vector.extract_strided_slice %68 {offsets = [0, 7], sizes = [8, 1], strides = [1, 1]} : vector<8x9xf32> to vector<8x1xf32>
    %cst_38 = arith.constant 0.000000e+00 : f32
    %129 = vector.shape_cast %128 : vector<8x1xf32> to vector<8x1xf32>
    %130 = vector.broadcast %129 : vector<8x1xf32> to vector<8x8xf32>
    %131 = vector.broadcast %cst_38 : f32 to vector<8x8xf32>
    %132 = arith.select %127, %130, %131 : vector<8x8xi1>, vector<8x8xf32>
    %133 = arith.addf %125, %132 : vector<8x8xf32>
    %c8_i32 = arith.constant 8 : i32
    %134 = vector.broadcast %c8_i32 : i32 to vector<8x8xi32>
    %135 = arith.cmpi eq, %61, %134 : vector<8x8xi32>
    %136 = vector.extract_strided_slice %68 {offsets = [0, 8], sizes = [8, 1], strides = [1, 1]} : vector<8x9xf32> to vector<8x1xf32>
    %cst_39 = arith.constant 0.000000e+00 : f32
    %137 = vector.shape_cast %136 : vector<8x1xf32> to vector<8x1xf32>
    %138 = vector.broadcast %137 : vector<8x1xf32> to vector<8x8xf32>
    %139 = vector.broadcast %cst_39 : f32 to vector<8x8xf32>
    %140 = arith.select %135, %138, %139 : vector<8x8xi1>, vector<8x8xf32>
    %141 = arith.addf %133, %140 : vector<8x8xf32>
    %142 = arith.addf %67, %141 : vector<8x8xf32>
    %143 = vector.broadcast %52 : vector<1x8xf32> to vector<8x8xf32>
    %144 = arith.addf %142, %143 : vector<8x8xf32>
    %cst_40 = arith.constant dense<0xFF800000> : vector<8xf32>
    %145 = vector.multi_reduction <maximumf>, %144, %cst_40 [1] : vector<8x8xf32> to vector<8xf32>
    %146 = vector.shape_cast %145 : vector<8xf32> to vector<8x1xf32>
    %147 = vector.broadcast %146 : vector<8x1xf32> to vector<8x8xf32>
    %148 = arith.subf %144, %147 : vector<8x8xf32>
    %149 = math.exp %148 : vector<8x8xf32>
    %cst_41 = arith.constant dense<0.000000e+00> : vector<8xf32>
    %150 = vector.multi_reduction <add>, %149, %cst_41 [1] : vector<8x8xf32> to vector<8xf32>
    %151 = vector.shape_cast %150 : vector<8xf32> to vector<8x1xf32>
    %152 = vector.broadcast %151 : vector<8x1xf32> to vector<8x8xf32>
    %153 = arith.divf %149, %152 : vector<8x8xf32>
    %154 = arith.truncf %153 : vector<8x8xf32> to vector<8x8xbf16>
    %cst_42 = arith.constant dense<0.000000e+00> : vector<8x8xf32>
    %155 = tpu.matmul %154, %65, %cst_42 {dimension_numbers = #tpu.dot_dimension_numbers<[1], [0], [0], [1], [0, 0, 1, 1], [], []>} : vector<8x8xbf16>, vector<8x8xbf16>, vector<8x8xf32> -> vector<8x8xf32>
    %156 = arith.truncf %155 : vector<8x8xf32> to vector<8x8xbf16>
    %c0_43 = arith.constant 0 : index
    %c0_44 = arith.constant 0 : index
    %157 = vector.load %arg13[%c0_43, %c0_44] : memref<8x32xbf16, #tpu.memory_space<vmem>>, vector<8x8xbf16>
    tpu.vector_store %arg13[%c0_43, %c0_44], %156 {strides = array<i32>} : memref<8x32xbf16, #tpu.memory_space<vmem>>, vector<8x8xbf16>,
    %158 = vector.extract_strided_slice %43 {offsets = [0, 8], sizes = [8, 8], strides = [1, 1]} : vector<8x32xbf16> to vector<8x8xbf16>
    %159 = vector.extract_strided_slice %49 {offsets = [0, 8], sizes = [8, 8], strides = [1, 1]} : vector<8x32xbf16> to vector<8x8xbf16>
    %160 = vector.extract_strided_slice %35 {offsets = [0, 8], sizes = [8, 8], strides = [1, 1]} : vector<8x32xbf16> to vector<8x8xbf16>
    %161 = vector.extract_strided_slice %37 {offsets = [0, 8], sizes = [8, 8], strides = [1, 1]} : vector<8x32xbf16> to vector<8x8xbf16>
    %162 = vector.extract_strided_slice %50 {offsets = [0, 8], sizes = [9, 8], strides = [1, 1]} : vector<9x32xbf16> to vector<9x8xbf16>
    %cst_45 = arith.constant dense<0.000000e+00> : vector<8x8xf32>
    %163 = tpu.matmul %158, %160, %cst_45 {dimension_numbers = #tpu.dot_dimension_numbers<[1], [1], [0], [0], [0, 0, 1, 0], [], []>} : vector<8x8xbf16>, vector<8x8xbf16>, vector<8x8xf32> -> vector<8x8xf32>
    %cst_46 = arith.constant dense<0.000000e+00> : vector<8x9xf32>
    %164 = tpu.matmul %159, %162, %cst_46 {dimension_numbers = #tpu.dot_dimension_numbers<[1], [1], [0], [0], [0, 0, 1, 0], [], []>} : vector<8x8xbf16>, vector<9x8xbf16>, vector<8x9xf32> -> vector<8x9xf32>
    %cst_47 = arith.constant 0.000000e+00 : f32
    %165 = vector.broadcast %cst_47 : f32 to vector<8x8xf32>
    %c0_i32_48 = arith.constant 0 : i32
    %166 = vector.broadcast %c0_i32_48 : i32 to vector<8x8xi32>
    %167 = arith.cmpi eq, %61, %166 : vector<8x8xi32>
    %168 = vector.extract_strided_slice %164 {offsets = [0, 0], sizes = [8, 1], strides = [1, 1]} : vector<8x9xf32> to vector<8x1xf32>
    %cst_49 = arith.constant 0.000000e+00 : f32
    %169 = vector.shape_cast %168 : vector<8x1xf32> to vector<8x1xf32>
    %170 = vector.broadcast %169 : vector<8x1xf32> to vector<8x8xf32>
    %171 = vector.broadcast %cst_49 : f32 to vector<8x8xf32>
    %172 = arith.select %167, %170, %171 : vector<8x8xi1>, vector<8x8xf32>
    %173 = arith.addf %165, %172 : vector<8x8xf32>
    %c1_i32_50 = arith.constant 1 : i32
    %174 = vector.broadcast %c1_i32_50 : i32 to vector<8x8xi32>
    %175 = arith.cmpi eq, %61, %174 : vector<8x8xi32>
    %176 = vector.extract_strided_slice %164 {offsets = [0, 1], sizes = [8, 1], strides = [1, 1]} : vector<8x9xf32> to vector<8x1xf32>
    %cst_51 = arith.constant 0.000000e+00 : f32
    %177 = vector.shape_cast %176 : vector<8x1xf32> to vector<8x1xf32>
    %178 = vector.broadcast %177 : vector<8x1xf32> to vector<8x8xf32>
    %179 = vector.broadcast %cst_51 : f32 to vector<8x8xf32>
    %180 = arith.select %175, %178, %179 : vector<8x8xi1>, vector<8x8xf32>
    %181 = arith.addf %173, %180 : vector<8x8xf32>
    %c2_i32_52 = arith.constant 2 : i32
    %182 = vector.broadcast %c2_i32_52 : i32 to vector<8x8xi32>
    %183 = arith.cmpi eq, %61, %182 : vector<8x8xi32>
    %184 = vector.extract_strided_slice %164 {offsets = [0, 2], sizes = [8, 1], strides = [1, 1]} : vector<8x9xf32> to vector<8x1xf32>
    %cst_53 = arith.constant 0.000000e+00 : f32
    %185 = vector.shape_cast %184 : vector<8x1xf32> to vector<8x1xf32>
    %186 = vector.broadcast %185 : vector<8x1xf32> to vector<8x8xf32>
    %187 = vector.broadcast %cst_53 : f32 to vector<8x8xf32>
    %188 = arith.select %183, %186, %187 : vector<8x8xi1>, vector<8x8xf32>
    %189 = arith.addf %181, %188 : vector<8x8xf32>
    %c3_i32_54 = arith.constant 3 : i32
    %190 = vector.broadcast %c3_i32_54 : i32 to vector<8x8xi32>
    %191 = arith.cmpi eq, %61, %190 : vector<8x8xi32>
    %192 = vector.extract_strided_slice %164 {offsets = [0, 3], sizes = [8, 1], strides = [1, 1]} : vector<8x9xf32> to vector<8x1xf32>
    %cst_55 = arith.constant 0.000000e+00 : f32
    %193 = vector.shape_cast %192 : vector<8x1xf32> to vector<8x1xf32>
    %194 = vector.broadcast %193 : vector<8x1xf32> to vector<8x8xf32>
    %195 = vector.broadcast %cst_55 : f32 to vector<8x8xf32>
    %196 = arith.select %191, %194, %195 : vector<8x8xi1>, vector<8x8xf32>
    %197 = arith.addf %189, %196 : vector<8x8xf32>
    %c4_i32_56 = arith.constant 4 : i32
    %198 = vector.broadcast %c4_i32_56 : i32 to vector<8x8xi32>
    %199 = arith.cmpi eq, %61, %198 : vector<8x8xi32>
    %200 = vector.extract_strided_slice %164 {offsets = [0, 4], sizes = [8, 1], strides = [1, 1]} : vector<8x9xf32> to vector<8x1xf32>
    %cst_57 = arith.constant 0.000000e+00 : f32
    %201 = vector.shape_cast %200 : vector<8x1xf32> to vector<8x1xf32>
    %202 = vector.broadcast %201 : vector<8x1xf32> to vector<8x8xf32>
    %203 = vector.broadcast %cst_57 : f32 to vector<8x8xf32>
    %204 = arith.select %199, %202, %203 : vector<8x8xi1>, vector<8x8xf32>
    %205 = arith.addf %197, %204 : vector<8x8xf32>
    %c5_i32_58 = arith.constant 5 : i32
    %206 = vector.broadcast %c5_i32_58 : i32 to vector<8x8xi32>
    %207 = arith.cmpi eq, %61, %206 : vector<8x8xi32>
    %208 = vector.extract_strided_slice %164 {offsets = [0, 5], sizes = [8, 1], strides = [1, 1]} : vector<8x9xf32> to vector<8x1xf32>
    %cst_59 = arith.constant 0.000000e+00 : f32
    %209 = vector.shape_cast %208 : vector<8x1xf32> to vector<8x1xf32>
    %210 = vector.broadcast %209 : vector<8x1xf32> to vector<8x8xf32>
    %211 = vector.broadcast %cst_59 : f32 to vector<8x8xf32>
    %212 = arith.select %207, %210, %211 : vector<8x8xi1>, vector<8x8xf32>
    %213 = arith.addf %205, %212 : vector<8x8xf32>
    %c6_i32_60 = arith.constant 6 : i32
    %214 = vector.broadcast %c6_i32_60 : i32 to vector<8x8xi32>
    %215 = arith.cmpi eq, %61, %214 : vector<8x8xi32>
    %216 = vector.extract_strided_slice %164 {offsets = [0, 6], sizes = [8, 1], strides = [1, 1]} : vector<8x9xf32> to vector<8x1xf32>
    %cst_61 = arith.constant 0.000000e+00 : f32
    %217 = vector.shape_cast %216 : vector<8x1xf32> to vector<8x1xf32>
    %218 = vector.broadcast %217 : vector<8x1xf32> to vector<8x8xf32>
    %219 = vector.broadcast %cst_61 : f32 to vector<8x8xf32>
    %220 = arith.select %215, %218, %219 : vector<8x8xi1>, vector<8x8xf32>
    %221 = arith.addf %213, %220 : vector<8x8xf32>
    %c7_i32_62 = arith.constant 7 : i32
    %222 = vector.broadcast %c7_i32_62 : i32 to vector<8x8xi32>
    %223 = arith.cmpi eq, %61, %222 : vector<8x8xi32>
    %224 = vector.extract_strided_slice %164 {offsets = [0, 7], sizes = [8, 1], strides = [1, 1]} : vector<8x9xf32> to vector<8x1xf32>
    %cst_63 = arith.constant 0.000000e+00 : f32
    %225 = vector.shape_cast %224 : vector<8x1xf32> to vector<8x1xf32>
    %226 = vector.broadcast %225 : vector<8x1xf32> to vector<8x8xf32>
    %227 = vector.broadcast %cst_63 : f32 to vector<8x8xf32>
    %228 = arith.select %223, %226, %227 : vector<8x8xi1>, vector<8x8xf32>
    %229 = arith.addf %221, %228 : vector<8x8xf32>
    %c8_i32_64 = arith.constant 8 : i32
    %230 = vector.broadcast %c8_i32_64 : i32 to vector<8x8xi32>
    %231 = arith.cmpi eq, %61, %230 : vector<8x8xi32>
    %232 = vector.extract_strided_slice %164 {offsets = [0, 8], sizes = [8, 1], strides = [1, 1]} : vector<8x9xf32> to vector<8x1xf32>
    %cst_65 = arith.constant 0.000000e+00 : f32
    %233 = vector.shape_cast %232 : vector<8x1xf32> to vector<8x1xf32>
    %234 = vector.broadcast %233 : vector<8x1xf32> to vector<8x8xf32>
    %235 = vector.broadcast %cst_65 : f32 to vector<8x8xf32>
    %236 = arith.select %231, %234, %235 : vector<8x8xi1>, vector<8x8xf32>
    %237 = arith.addf %229, %236 : vector<8x8xf32>
    %238 = arith.addf %163, %237 : vector<8x8xf32>
    %239 = vector.broadcast %52 : vector<1x8xf32> to vector<8x8xf32>
    %240 = arith.addf %238, %239 : vector<8x8xf32>
    %cst_66 = arith.constant dense<0xFF800000> : vector<8xf32>
    %241 = vector.multi_reduction <maximumf>, %240, %cst_66 [1] : vector<8x8xf32> to vector<8xf32>
    %242 = vector.shape_cast %241 : vector<8xf32> to vector<8x1xf32>
    %243 = vector.broadcast %242 : vector<8x1xf32> to vector<8x8xf32>
    %244 = arith.subf %240, %243 : vector<8x8xf32>
    %245 = math.exp %244 : vector<8x8xf32>
    %cst_67 = arith.constant dense<0.000000e+00> : vector<8xf32>
    %246 = vector.multi_reduction <add>, %245, %cst_67 [1] : vector<8x8xf32> to vector<8xf32>
    %247 = vector.shape_cast %246 : vector<8xf32> to vector<8x1xf32>
    %248 = vector.broadcast %247 : vector<8x1xf32> to vector<8x8xf32>
    %249 = arith.divf %245, %248 : vector<8x8xf32>
    %250 = arith.truncf %249 : vector<8x8xf32> to vector<8x8xbf16>
    %cst_68 = arith.constant dense<0.000000e+00> : vector<8x8xf32>
    %251 = tpu.matmul %250, %161, %cst_68 {dimension_numbers = #tpu.dot_dimension_numbers<[1], [0], [0], [1], [0, 0, 1, 1], [], []>} : vector<8x8xbf16>, vector<8x8xbf16>, vector<8x8xf32> -> vector<8x8xf32>
    %252 = arith.truncf %251 : vector<8x8xf32> to vector<8x8xbf16>
    %c0_69 = arith.constant 0 : index
    %c8 = arith.constant 8 : index
    %253 = vector.load %arg13[%c0_69, %c8] : memref<8x32xbf16, #tpu.memory_space<vmem>>, vector<8x8xbf16>
    tpu.vector_store %arg13[%c0_69, %c8], %252 {strides = array<i32>} : memref<8x32xbf16, #tpu.memory_space<vmem>>, vector<8x8xbf16>,
    %254 = vector.extract_strided_slice %43 {offsets = [0, 16], sizes = [8, 8], strides = [1, 1]} : vector<8x32xbf16> to vector<8x8xbf16>
    %255 = vector.extract_strided_slice %49 {offsets = [0, 16], sizes = [8, 8], strides = [1, 1]} : vector<8x32xbf16> to vector<8x8xbf16>
    %256 = vector.extract_strided_slice %35 {offsets = [0, 16], sizes = [8, 8], strides = [1, 1]} : vector<8x32xbf16> to vector<8x8xbf16>
    %257 = vector.extract_strided_slice %37 {offsets = [0, 16], sizes = [8, 8], strides = [1, 1]} : vector<8x32xbf16> to vector<8x8xbf16>
    %258 = vector.extract_strided_slice %50 {offsets = [0, 16], sizes = [9, 8], strides = [1, 1]} : vector<9x32xbf16> to vector<9x8xbf16>
    %cst_70 = arith.constant dense<0.000000e+00> : vector<8x8xf32>
    %259 = tpu.matmul %254, %256, %cst_70 {dimension_numbers = #tpu.dot_dimension_numbers<[1], [1], [0], [0], [0, 0, 1, 0], [], []>} : vector<8x8xbf16>, vector<8x8xbf16>, vector<8x8xf32> -> vector<8x8xf32>
    %cst_71 = arith.constant dense<0.000000e+00> : vector<8x9xf32>
    %260 = tpu.matmul %255, %258, %cst_71 {dimension_numbers = #tpu.dot_dimension_numbers<[1], [1], [0], [0], [0, 0, 1, 0], [], []>} : vector<8x8xbf16>, vector<9x8xbf16>, vector<8x9xf32> -> vector<8x9xf32>
    %cst_72 = arith.constant 0.000000e+00 : f32
    %261 = vector.broadcast %cst_72 : f32 to vector<8x8xf32>
    %c0_i32_73 = arith.constant 0 : i32
    %262 = vector.broadcast %c0_i32_73 : i32 to vector<8x8xi32>
    %263 = arith.cmpi eq, %61, %262 : vector<8x8xi32>
    %264 = vector.extract_strided_slice %260 {offsets = [0, 0], sizes = [8, 1], strides = [1, 1]} : vector<8x9xf32> to vector<8x1xf32>
    %cst_74 = arith.constant 0.000000e+00 : f32
    %265 = vector.shape_cast %264 : vector<8x1xf32> to vector<8x1xf32>
    %266 = vector.broadcast %265 : vector<8x1xf32> to vector<8x8xf32>
    %267 = vector.broadcast %cst_74 : f32 to vector<8x8xf32>
    %268 = arith.select %263, %266, %267 : vector<8x8xi1>, vector<8x8xf32>
    %269 = arith.addf %261, %268 : vector<8x8xf32>
    %c1_i32_75 = arith.constant 1 : i32
    %270 = vector.broadcast %c1_i32_75 : i32 to vector<8x8xi32>
    %271 = arith.cmpi eq, %61, %270 : vector<8x8xi32>
    %272 = vector.extract_strided_slice %260 {offsets = [0, 1], sizes = [8, 1], strides = [1, 1]} : vector<8x9xf32> to vector<8x1xf32>
    %cst_76 = arith.constant 0.000000e+00 : f32
    %273 = vector.shape_cast %272 : vector<8x1xf32> to vector<8x1xf32>
    %274 = vector.broadcast %273 : vector<8x1xf32> to vector<8x8xf32>
    %275 = vector.broadcast %cst_76 : f32 to vector<8x8xf32>
    %276 = arith.select %271, %274, %275 : vector<8x8xi1>, vector<8x8xf32>
    %277 = arith.addf %269, %276 : vector<8x8xf32>
    %c2_i32_77 = arith.constant 2 : i32
    %278 = vector.broadcast %c2_i32_77 : i32 to vector<8x8xi32>
    %279 = arith.cmpi eq, %61, %278 : vector<8x8xi32>
    %280 = vector.extract_strided_slice %260 {offsets = [0, 2], sizes = [8, 1], strides = [1, 1]} : vector<8x9xf32> to vector<8x1xf32>
    %cst_78 = arith.constant 0.000000e+00 : f32
    %281 = vector.shape_cast %280 : vector<8x1xf32> to vector<8x1xf32>
    %282 = vector.broadcast %281 : vector<8x1xf32> to vector<8x8xf32>
    %283 = vector.broadcast %cst_78 : f32 to vector<8x8xf32>
    %284 = arith.select %279, %282, %283 : vector<8x8xi1>, vector<8x8xf32>
    %285 = arith.addf %277, %284 : vector<8x8xf32>
    %c3_i32_79 = arith.constant 3 : i32
    %286 = vector.broadcast %c3_i32_79 : i32 to vector<8x8xi32>
    %287 = arith.cmpi eq, %61, %286 : vector<8x8xi32>
    %288 = vector.extract_strided_slice %260 {offsets = [0, 3], sizes = [8, 1], strides = [1, 1]} : vector<8x9xf32> to vector<8x1xf32>
    %cst_80 = arith.constant 0.000000e+00 : f32
    %289 = vector.shape_cast %288 : vector<8x1xf32> to vector<8x1xf32>
    %290 = vector.broadcast %289 : vector<8x1xf32> to vector<8x8xf32>
    %291 = vector.broadcast %cst_80 : f32 to vector<8x8xf32>
    %292 = arith.select %287, %290, %291 : vector<8x8xi1>, vector<8x8xf32>
    %293 = arith.addf %285, %292 : vector<8x8xf32>
    %c4_i32_81 = arith.constant 4 : i32
    %294 = vector.broadcast %c4_i32_81 : i32 to vector<8x8xi32>
    %295 = arith.cmpi eq, %61, %294 : vector<8x8xi32>
    %296 = vector.extract_strided_slice %260 {offsets = [0, 4], sizes = [8, 1], strides = [1, 1]} : vector<8x9xf32> to vector<8x1xf32>
    %cst_82 = arith.constant 0.000000e+00 : f32
    %297 = vector.shape_cast %296 : vector<8x1xf32> to vector<8x1xf32>
    %298 = vector.broadcast %297 : vector<8x1xf32> to vector<8x8xf32>
    %299 = vector.broadcast %cst_82 : f32 to vector<8x8xf32>
    %300 = arith.select %295, %298, %299 : vector<8x8xi1>, vector<8x8xf32>
    %301 = arith.addf %293, %300 : vector<8x8xf32>
    %c5_i32_83 = arith.constant 5 : i32
    %302 = vector.broadcast %c5_i32_83 : i32 to vector<8x8xi32>
    %303 = arith.cmpi eq, %61, %302 : vector<8x8xi32>
    %304 = vector.extract_strided_slice %260 {offsets = [0, 5], sizes = [8, 1], strides = [1, 1]} : vector<8x9xf32> to vector<8x1xf32>
    %cst_84 = arith.constant 0.000000e+00 : f32
    %305 = vector.shape_cast %304 : vector<8x1xf32> to vector<8x1xf32>
    %306 = vector.broadcast %305 : vector<8x1xf32> to vector<8x8xf32>
    %307 = vector.broadcast %cst_84 : f32 to vector<8x8xf32>
    %308 = arith.select %303, %306, %307 : vector<8x8xi1>, vector<8x8xf32>
    %309 = arith.addf %301, %308 : vector<8x8xf32>
    %c6_i32_85 = arith.constant 6 : i32
    %310 = vector.broadcast %c6_i32_85 : i32 to vector<8x8xi32>
    %311 = arith.cmpi eq, %61, %310 : vector<8x8xi32>
    %312 = vector.extract_strided_slice %260 {offsets = [0, 6], sizes = [8, 1], strides = [1, 1]} : vector<8x9xf32> to vector<8x1xf32>
    %cst_86 = arith.constant 0.000000e+00 : f32
    %313 = vector.shape_cast %312 : vector<8x1xf32> to vector<8x1xf32>
    %314 = vector.broadcast %313 : vector<8x1xf32> to vector<8x8xf32>
    %315 = vector.broadcast %cst_86 : f32 to vector<8x8xf32>
    %316 = arith.select %311, %314, %315 : vector<8x8xi1>, vector<8x8xf32>
    %317 = arith.addf %309, %316 : vector<8x8xf32>
    %c7_i32_87 = arith.constant 7 : i32
    %318 = vector.broadcast %c7_i32_87 : i32 to vector<8x8xi32>
    %319 = arith.cmpi eq, %61, %318 : vector<8x8xi32>
    %320 = vector.extract_strided_slice %260 {offsets = [0, 7], sizes = [8, 1], strides = [1, 1]} : vector<8x9xf32> to vector<8x1xf32>
    %cst_88 = arith.constant 0.000000e+00 : f32
    %321 = vector.shape_cast %320 : vector<8x1xf32> to vector<8x1xf32>
    %322 = vector.broadcast %321 : vector<8x1xf32> to vector<8x8xf32>
    %323 = vector.broadcast %cst_88 : f32 to vector<8x8xf32>
    %324 = arith.select %319, %322, %323 : vector<8x8xi1>, vector<8x8xf32>
    %325 = arith.addf %317, %324 : vector<8x8xf32>
    %c8_i32_89 = arith.constant 8 : i32
    %326 = vector.broadcast %c8_i32_89 : i32 to vector<8x8xi32>
    %327 = arith.cmpi eq, %61, %326 : vector<8x8xi32>
    %328 = vector.extract_strided_slice %260 {offsets = [0, 8], sizes = [8, 1], strides = [1, 1]} : vector<8x9xf32> to vector<8x1xf32>
    %cst_90 = arith.constant 0.000000e+00 : f32
    %329 = vector.shape_cast %328 : vector<8x1xf32> to vector<8x1xf32>
    %330 = vector.broadcast %329 : vector<8x1xf32> to vector<8x8xf32>
    %331 = vector.broadcast %cst_90 : f32 to vector<8x8xf32>
    %332 = arith.select %327, %330, %331 : vector<8x8xi1>, vector<8x8xf32>
    %333 = arith.addf %325, %332 : vector<8x8xf32>
    %334 = arith.addf %259, %333 : vector<8x8xf32>
    %335 = vector.broadcast %52 : vector<1x8xf32> to vector<8x8xf32>
    %336 = arith.addf %334, %335 : vector<8x8xf32>
    %cst_91 = arith.constant dense<0xFF800000> : vector<8xf32>
    %337 = vector.multi_reduction <maximumf>, %336, %cst_91 [1] : vector<8x8xf32> to vector<8xf32>
    %338 = vector.shape_cast %337 : vector<8xf32> to vector<8x1xf32>
    %339 = vector.broadcast %338 : vector<8x1xf32> to vector<8x8xf32>
    %340 = arith.subf %336, %339 : vector<8x8xf32>
    %341 = math.exp %340 : vector<8x8xf32>
    %cst_92 = arith.constant dense<0.000000e+00> : vector<8xf32>
    %342 = vector.multi_reduction <add>, %341, %cst_92 [1] : vector<8x8xf32> to vector<8xf32>
    %343 = vector.shape_cast %342 : vector<8xf32> to vector<8x1xf32>
    %344 = vector.broadcast %343 : vector<8x1xf32> to vector<8x8xf32>
    %345 = arith.divf %341, %344 : vector<8x8xf32>
    %346 = arith.truncf %345 : vector<8x8xf32> to vector<8x8xbf16>
    %cst_93 = arith.constant dense<0.000000e+00> : vector<8x8xf32>
    %347 = tpu.matmul %346, %257, %cst_93 {dimension_numbers = #tpu.dot_dimension_numbers<[1], [0], [0], [1], [0, 0, 1, 1], [], []>} : vector<8x8xbf16>, vector<8x8xbf16>, vector<8x8xf32> -> vector<8x8xf32>
    %348 = arith.truncf %347 : vector<8x8xf32> to vector<8x8xbf16>
    %c0_94 = arith.constant 0 : index
    %c16 = arith.constant 16 : index
    %349 = vector.load %arg13[%c0_94, %c16] : memref<8x32xbf16, #tpu.memory_space<vmem>>, vector<8x8xbf16>
    tpu.vector_store %arg13[%c0_94, %c16], %348 {strides = array<i32>} : memref<8x32xbf16, #tpu.memory_space<vmem>>, vector<8x8xbf16>,
    %350 = vector.extract_strided_slice %43 {offsets = [0, 24], sizes = [8, 8], strides = [1, 1]} : vector<8x32xbf16> to vector<8x8xbf16>
    %351 = vector.extract_strided_slice %49 {offsets = [0, 24], sizes = [8, 8], strides = [1, 1]} : vector<8x32xbf16> to vector<8x8xbf16>
    %352 = vector.extract_strided_slice %35 {offsets = [0, 24], sizes = [8, 8], strides = [1, 1]} : vector<8x32xbf16> to vector<8x8xbf16>
    %353 = vector.extract_strided_slice %37 {offsets = [0, 24], sizes = [8, 8], strides = [1, 1]} : vector<8x32xbf16> to vector<8x8xbf16>
    %354 = vector.extract_strided_slice %50 {offsets = [0, 24], sizes = [9, 8], strides = [1, 1]} : vector<9x32xbf16> to vector<9x8xbf16>
    %cst_95 = arith.constant dense<0.000000e+00> : vector<8x8xf32>
    %355 = tpu.matmul %350, %352, %cst_95 {dimension_numbers = #tpu.dot_dimension_numbers<[1], [1], [0], [0], [0, 0, 1, 0], [], []>} : vector<8x8xbf16>, vector<8x8xbf16>, vector<8x8xf32> -> vector<8x8xf32>
    %cst_96 = arith.constant dense<0.000000e+00> : vector<8x9xf32>
    %356 = tpu.matmul %351, %354, %cst_96 {dimension_numbers = #tpu.dot_dimension_numbers<[1], [1], [0], [0], [0, 0, 1, 0], [], []>} : vector<8x8xbf16>, vector<9x8xbf16>, vector<8x9xf32> -> vector<8x9xf32>
    %cst_97 = arith.constant 0.000000e+00 : f32
    %357 = vector.broadcast %cst_97 : f32 to vector<8x8xf32>
    %c0_i32_98 = arith.constant 0 : i32
    %358 = vector.broadcast %c0_i32_98 : i32 to vector<8x8xi32>
    %359 = arith.cmpi eq, %61, %358 : vector<8x8xi32>
    %360 = vector.extract_strided_slice %356 {offsets = [0, 0], sizes = [8, 1], strides = [1, 1]} : vector<8x9xf32> to vector<8x1xf32>
    %cst_99 = arith.constant 0.000000e+00 : f32
    %361 = vector.shape_cast %360 : vector<8x1xf32> to vector<8x1xf32>
    %362 = vector.broadcast %361 : vector<8x1xf32> to vector<8x8xf32>
    %363 = vector.broadcast %cst_99 : f32 to vector<8x8xf32>
    %364 = arith.select %359, %362, %363 : vector<8x8xi1>, vector<8x8xf32>
    %365 = arith.addf %357, %364 : vector<8x8xf32>
    %c1_i32_100 = arith.constant 1 : i32
    %366 = vector.broadcast %c1_i32_100 : i32 to vector<8x8xi32>
    %367 = arith.cmpi eq, %61, %366 : vector<8x8xi32>
    %368 = vector.extract_strided_slice %356 {offsets = [0, 1], sizes = [8, 1], strides = [1, 1]} : vector<8x9xf32> to vector<8x1xf32>
    %cst_101 = arith.constant 0.000000e+00 : f32
    %369 = vector.shape_cast %368 : vector<8x1xf32> to vector<8x1xf32>
    %370 = vector.broadcast %369 : vector<8x1xf32> to vector<8x8xf32>
    %371 = vector.broadcast %cst_101 : f32 to vector<8x8xf32>
    %372 = arith.select %367, %370, %371 : vector<8x8xi1>, vector<8x8xf32>
    %373 = arith.addf %365, %372 : vector<8x8xf32>
    %c2_i32_102 = arith.constant 2 : i32
    %374 = vector.broadcast %c2_i32_102 : i32 to vector<8x8xi32>
    %375 = arith.cmpi eq, %61, %374 : vector<8x8xi32>
    %376 = vector.extract_strided_slice %356 {offsets = [0, 2], sizes = [8, 1], strides = [1, 1]} : vector<8x9xf32> to vector<8x1xf32>
    %cst_103 = arith.constant 0.000000e+00 : f32
    %377 = vector.shape_cast %376 : vector<8x1xf32> to vector<8x1xf32>
    %378 = vector.broadcast %377 : vector<8x1xf32> to vector<8x8xf32>
    %379 = vector.broadcast %cst_103 : f32 to vector<8x8xf32>
    %380 = arith.select %375, %378, %379 : vector<8x8xi1>, vector<8x8xf32>
    %381 = arith.addf %373, %380 : vector<8x8xf32>
    %c3_i32_104 = arith.constant 3 : i32
    %382 = vector.broadcast %c3_i32_104 : i32 to vector<8x8xi32>
    %383 = arith.cmpi eq, %61, %382 : vector<8x8xi32>
    %384 = vector.extract_strided_slice %356 {offsets = [0, 3], sizes = [8, 1], strides = [1, 1]} : vector<8x9xf32> to vector<8x1xf32>
    %cst_105 = arith.constant 0.000000e+00 : f32
    %385 = vector.shape_cast %384 : vector<8x1xf32> to vector<8x1xf32>
    %386 = vector.broadcast %385 : vector<8x1xf32> to vector<8x8xf32>
    %387 = vector.broadcast %cst_105 : f32 to vector<8x8xf32>
    %388 = arith.select %383, %386, %387 : vector<8x8xi1>, vector<8x8xf32>
    %389 = arith.addf %381, %388 : vector<8x8xf32>
    %c4_i32_106 = arith.constant 4 : i32
    %390 = vector.broadcast %c4_i32_106 : i32 to vector<8x8xi32>
    %391 = arith.cmpi eq, %61, %390 : vector<8x8xi32>
    %392 = vector.extract_strided_slice %356 {offsets = [0, 4], sizes = [8, 1], strides = [1, 1]} : vector<8x9xf32> to vector<8x1xf32>
    %cst_107 = arith.constant 0.000000e+00 : f32
    %393 = vector.shape_cast %392 : vector<8x1xf32> to vector<8x1xf32>
    %394 = vector.broadcast %393 : vector<8x1xf32> to vector<8x8xf32>
    %395 = vector.broadcast %cst_107 : f32 to vector<8x8xf32>
    %396 = arith.select %391, %394, %395 : vector<8x8xi1>, vector<8x8xf32>
    %397 = arith.addf %389, %396 : vector<8x8xf32>
    %c5_i32_108 = arith.constant 5 : i32
    %398 = vector.broadcast %c5_i32_108 : i32 to vector<8x8xi32>
    %399 = arith.cmpi eq, %61, %398 : vector<8x8xi32>
    %400 = vector.extract_strided_slice %356 {offsets = [0, 5], sizes = [8, 1], strides = [1, 1]} : vector<8x9xf32> to vector<8x1xf32>
    %cst_109 = arith.constant 0.000000e+00 : f32
    %401 = vector.shape_cast %400 : vector<8x1xf32> to vector<8x1xf32>
    %402 = vector.broadcast %401 : vector<8x1xf32> to vector<8x8xf32>
    %403 = vector.broadcast %cst_109 : f32 to vector<8x8xf32>
    %404 = arith.select %399, %402, %403 : vector<8x8xi1>, vector<8x8xf32>
    %405 = arith.addf %397, %404 : vector<8x8xf32>
    %c6_i32_110 = arith.constant 6 : i32
    %406 = vector.broadcast %c6_i32_110 : i32 to vector<8x8xi32>
    %407 = arith.cmpi eq, %61, %406 : vector<8x8xi32>
    %408 = vector.extract_strided_slice %356 {offsets = [0, 6], sizes = [8, 1], strides = [1, 1]} : vector<8x9xf32> to vector<8x1xf32>
    %cst_111 = arith.constant 0.000000e+00 : f32
    %409 = vector.shape_cast %408 : vector<8x1xf32> to vector<8x1xf32>
    %410 = vector.broadcast %409 : vector<8x1xf32> to vector<8x8xf32>
    %411 = vector.broadcast %cst_111 : f32 to vector<8x8xf32>
    %412 = arith.select %407, %410, %411 : vector<8x8xi1>, vector<8x8xf32>
    %413 = arith.addf %405, %412 : vector<8x8xf32>
    %c7_i32_112 = arith.constant 7 : i32
    %414 = vector.broadcast %c7_i32_112 : i32 to vector<8x8xi32>
    %415 = arith.cmpi eq, %61, %414 : vector<8x8xi32>
    %416 = vector.extract_strided_slice %356 {offsets = [0, 7], sizes = [8, 1], strides = [1, 1]} : vector<8x9xf32> to vector<8x1xf32>
    %cst_113 = arith.constant 0.000000e+00 : f32
    %417 = vector.shape_cast %416 : vector<8x1xf32> to vector<8x1xf32>
    %418 = vector.broadcast %417 : vector<8x1xf32> to vector<8x8xf32>
    %419 = vector.broadcast %cst_113 : f32 to vector<8x8xf32>
    %420 = arith.select %415, %418, %419 : vector<8x8xi1>, vector<8x8xf32>
    %421 = arith.addf %413, %420 : vector<8x8xf32>
    %c8_i32_114 = arith.constant 8 : i32
    %422 = vector.broadcast %c8_i32_114 : i32 to vector<8x8xi32>
    %423 = arith.cmpi eq, %61, %422 : vector<8x8xi32>
    %424 = vector.extract_strided_slice %356 {offsets = [0, 8], sizes = [8, 1], strides = [1, 1]} : vector<8x9xf32> to vector<8x1xf32>
    %cst_115 = arith.constant 0.000000e+00 : f32
    %425 = vector.shape_cast %424 : vector<8x1xf32> to vector<8x1xf32>
    %426 = vector.broadcast %425 : vector<8x1xf32> to vector<8x8xf32>
    %427 = vector.broadcast %cst_115 : f32 to vector<8x8xf32>
    %428 = arith.select %423, %426, %427 : vector<8x8xi1>, vector<8x8xf32>
    %429 = arith.addf %421, %428 : vector<8x8xf32>
    %430 = arith.addf %355, %429 : vector<8x8xf32>
    %431 = vector.broadcast %52 : vector<1x8xf32> to vector<8x8xf32>
    %432 = arith.addf %430, %431 : vector<8x8xf32>
    %cst_116 = arith.constant dense<0xFF800000> : vector<8xf32>
    %433 = vector.multi_reduction <maximumf>, %432, %cst_116 [1] : vector<8x8xf32> to vector<8xf32>
    %434 = vector.shape_cast %433 : vector<8xf32> to vector<8x1xf32>
    %435 = vector.broadcast %434 : vector<8x1xf32> to vector<8x8xf32>
    %436 = arith.subf %432, %435 : vector<8x8xf32>
    %437 = math.exp %436 : vector<8x8xf32>
    %cst_117 = arith.constant dense<0.000000e+00> : vector<8xf32>
    %438 = vector.multi_reduction <add>, %437, %cst_117 [1] : vector<8x8xf32> to vector<8xf32>
    %439 = vector.shape_cast %438 : vector<8xf32> to vector<8x1xf32>
    %440 = vector.broadcast %439 : vector<8x1xf32> to vector<8x8xf32>
    %441 = arith.divf %437, %440 : vector<8x8xf32>
    %442 = arith.truncf %441 : vector<8x8xf32> to vector<8x8xbf16>
    %cst_118 = arith.constant dense<0.000000e+00> : vector<8x8xf32>
    %443 = tpu.matmul %442, %353, %cst_118 {dimension_numbers = #tpu.dot_dimension_numbers<[1], [0], [0], [1], [0, 0, 1, 1], [], []>} : vector<8x8xbf16>, vector<8x8xbf16>, vector<8x8xf32> -> vector<8x8xf32>
    %444 = arith.truncf %443 : vector<8x8xf32> to vector<8x8xbf16>
    %c0_119 = arith.constant 0 : index
    %c24 = arith.constant 24 : index
    %445 = vector.load %arg13[%c0_119, %c24] : memref<8x32xbf16, #tpu.memory_space<vmem>>, vector<8x8xbf16>
    tpu.vector_store %arg13[%c0_119, %c24], %444 {strides = array<i32>} : memref<8x32xbf16, #tpu.memory_space<vmem>>, vector<8x8xbf16>,
    %c0_120 = arith.constant 0 : index
    %c0_121 = arith.constant 0 : index
    %446 = vector.load %arg13[%c0_120, %c0_121] : memref<8x32xbf16, #tpu.memory_space<vmem>>, vector<8x32xbf16>
    %c0_122 = arith.constant 0 : index
    %c0_123 = arith.constant 0 : index
    %447 = vector.load %arg10[%c0_122, %c0_123] : memref<32x32xbf16, #tpu.memory_space<vmem>>, vector<32x32xbf16>
    %cst_124 = arith.constant dense<0.000000e+00> : vector<8x32xf32>
    %448 = tpu.matmul %446, %447, %cst_124 {dimension_numbers = #tpu.dot_dimension_numbers<[1], [0], [0], [1], [0, 0, 1, 1], [], []>} : vector<8x32xbf16>, vector<32x32xbf16>, vector<8x32xf32> -> vector<8x32xf32>
    %c0_125 = arith.constant 0 : index
    %c0_126 = arith.constant 0 : index
    %449 = vector.load %arg11[%c0_125, %c0_126] : memref<1x32xf32, #tpu.memory_space<vmem>>, vector<1x32xf32>
    %450 = vector.broadcast %449 : vector<1x32xf32> to vector<8x32xf32>
    %451 = arith.addf %448, %450 : vector<8x32xf32>
    %452 = arith.addf %2, %451 : vector<8x32xf32>
    %453 = vector.shape_cast %452 : vector<8x32xf32> to vector<1x8x32xf32>
    %454 = arith.truncf %453 : vector<1x8x32xf32> to vector<1x8x32xbf16>
    %c0_127 = arith.constant 0 : index
    %c0_128 = arith.constant 0 : index
    %c0_129 = arith.constant 0 : index
    %455 = vector.load %arg12[%c0_127, %c0_128, %c0_129] : memref<1x8x32xbf16, #tpu.memory_space<vmem>>, vector<1x8x32xbf16>
    tpu.vector_store %arg12[%c0_127, %c0_128, %c0_129], %454 {strides = array<i32>} : memref<1x8x32xbf16, #tpu.memory_space<vmem>>, vector<1x8x32xbf16>,
    return
  }
  func.func @transform_0(%arg0: i32) -> (i32, i32, i32) {
    %c0_i32 = arith.constant 0 : i32
    %c0_i32_0 = arith.constant 0 : i32
    %c0_i32_1 = arith.constant 0 : i32
    return %arg0, %c0_i32, %c0_i32_0 : i32, i32, i32
  }
  func.func @transform_1(%arg0: i32) -> (i32, i32) {
    %c0_i32 = arith.constant 0 : i32
    %c0_i32_0 = arith.constant 0 : i32
    %c0_i32_1 = arith.constant 0 : i32
    return %c0_i32, %c0_i32_0 : i32, i32
  }
  func.func @transform_2(%arg0: i32) -> (i32, i32) {
    %c0_i32 = arith.constant 0 : i32
    %c0_i32_0 = arith.constant 0 : i32
    %c0_i32_1 = arith.constant 0 : i32
    return %c0_i32, %c0_i32_0 : i32, i32
  }
  func.func @transform_3(%arg0: i32) -> (i32, i32) {
    %c0_i32 = arith.constant 0 : i32
    %c0_i32_0 = arith.constant 0 : i32
    %c0_i32_1 = arith.constant 0 : i32
    return %c0_i32, %c0_i32_0 : i32, i32
  }
  func.func @transform_4(%arg0: i32) -> (i32, i32) {
    %c0_i32 = arith.constant 0 : i32
    %c0_i32_0 = arith.constant 0 : i32
    %c0_i32_1 = arith.constant 0 : i32
    return %c0_i32, %c0_i32_0 : i32, i32
  }
  func.func @transform_5(%arg0: i32) -> (i32, i32) {
    %c0_i32 = arith.constant 0 : i32
    %c0_i32_0 = arith.constant 0 : i32
    %c0_i32_1 = arith.constant 0 : i32
    return %c0_i32, %c0_i32_0 : i32, i32
  }
  func.func @transform_6(%arg0: i32) -> (i32, i32) {
    %c0_i32 = arith.constant 0 : i32
    %c0_i32_0 = arith.constant 0 : i32
    %c0_i32_1 = arith.constant 0 : i32
    return %c0_i32, %c0_i32_0 : i32, i32
  }
  func.func @transform_7(%arg0: i32) -> (i32, i32) {
    %c0_i32 = arith.constant 0 : i32
    %c0_i32_0 = arith.constant 0 : i32
    %c0_i32_1 = arith.constant 0 : i32
    return %c0_i32, %c0_i32_0 : i32, i32
  }
  func.func @transform_8(%arg0: i32) -> (i32, i32, i32) {
    %c0_i32 = arith.constant 0 : i32
    %c0_i32_0 = arith.constant 0 : i32
    %c0_i32_1 = arith.constant 0 : i32
    return %arg0, %c0_i32, %c0_i32_0 : i32, i32, i32
  }
  func.func @transform_9(%arg0: i32) -> (i32, i32) {
    %c0_i32 = arith.constant 0 : i32
    %c0_i32_0 = arith.constant 0 : i32
    %c0_i32_1 = arith.constant 0 : i32
    return %c0_i32, %c0_i32_0 : i32, i32
  }
  func.func @transform_10(%arg0: i32) -> (i32, i32) {
    %c0_i32 = arith.constant 0 : i32
    %c0_i32_0 = arith.constant 0 : i32
    %c0_i32_1 = arith.constant 0 : i32
    return %c0_i32, %c0_i32_0 : i32, i32
  }
  func.func @transform_11(%arg0: i32) -> (i32, i32, i32) {
    %c0_i32 = arith.constant 0 : i32
    %c0_i32_0 = arith.constant 0 : i32
    %c0_i32_1 = arith.constant 0 : i32
    return %arg0, %c0_i32, %c0_i32_0 : i32, i32, i32
  }
}

module attributes {stable_mosaic.version = 11 : i64} {
  func.func @ff_ln_kernel(%arg0: i32, %arg1: memref<16x32xbf16, #tpu.memory_space<vmem>>, %arg2: memref<1x32xf32, #tpu.memory_space<vmem>>, %arg3: memref<1x32xf32, #tpu.memory_space<vmem>>, %arg4: memref<32x64xbf16, #tpu.memory_space<vmem>>, %arg5: memref<1x64xf32, #tpu.memory_space<vmem>>, %arg6: memref<64x32xbf16, #tpu.memory_space<vmem>>, %arg7: memref<1x32xf32, #tpu.memory_space<vmem>>, %arg8: memref<1x32xf32, #tpu.memory_space<vmem>>, %arg9: memref<1x32xf32, #tpu.memory_space<vmem>>, %arg10: memref<16x32xbf16, #tpu.memory_space<vmem>>) attributes {dimension_semantics = [#tpu.dimension_semantics<parallel>], iteration_bounds = array<i64: 1>, scalar_prefetch = 0 : i64, scratch_operands = 0 : i64, tpu.core_type = #tpu.core_type<tc>, window_params = [{transform_indices = @transform_0, window_bounds = array<i64: 16, 32>}, {pipeline_mode = #tpu.pipeline_mode<synchronous>, transform_indices = @transform_1, window_bounds = array<i64: 1, 32>}, {pipeline_mode = #tpu.pipeline_mode<synchronous>, transform_indices = @transform_2, window_bounds = array<i64: 1, 32>}, {pipeline_mode = #tpu.pipeline_mode<synchronous>, transform_indices = @transform_3, window_bounds = array<i64: 32, 64>}, {pipeline_mode = #tpu.pipeline_mode<synchronous>, transform_indices = @transform_4, window_bounds = array<i64: 1, 64>}, {pipeline_mode = #tpu.pipeline_mode<synchronous>, transform_indices = @transform_5, window_bounds = array<i64: 64, 32>}, {pipeline_mode = #tpu.pipeline_mode<synchronous>, transform_indices = @transform_6, window_bounds = array<i64: 1, 32>}, {pipeline_mode = #tpu.pipeline_mode<synchronous>, transform_indices = @transform_7, window_bounds = array<i64: 1, 32>}, {pipeline_mode = #tpu.pipeline_mode<synchronous>, transform_indices = @transform_8, window_bounds = array<i64: 1, 32>}, {transform_indices = @transform_9, window_bounds = array<i64: 16, 32>}]} {
    %c0 = arith.constant 0 : index
    %c0_0 = arith.constant 0 : index
    %0 = vector.load %arg1[%c0, %c0_0] : memref<16x32xbf16, #tpu.memory_space<vmem>>, vector<16x32xbf16>
    %c0_1 = arith.constant 0 : index
    %c0_2 = arith.constant 0 : index
    %1 = vector.load %arg2[%c0_1, %c0_2] : memref<1x32xf32, #tpu.memory_space<vmem>>, vector<1x32xf32>
    %c0_3 = arith.constant 0 : index
    %c0_4 = arith.constant 0 : index
    %2 = vector.load %arg3[%c0_3, %c0_4] : memref<1x32xf32, #tpu.memory_space<vmem>>, vector<1x32xf32>
    %c0_5 = arith.constant 0 : index
    %c0_6 = arith.constant 0 : index
    %3 = vector.load %arg4[%c0_5, %c0_6] : memref<32x64xbf16, #tpu.memory_space<vmem>>, vector<32x64xbf16>
    %c0_7 = arith.constant 0 : index
    %c0_8 = arith.constant 0 : index
    %4 = vector.load %arg5[%c0_7, %c0_8] : memref<1x64xf32, #tpu.memory_space<vmem>>, vector<1x64xf32>
    %c0_9 = arith.constant 0 : index
    %c0_10 = arith.constant 0 : index
    %5 = vector.load %arg6[%c0_9, %c0_10] : memref<64x32xbf16, #tpu.memory_space<vmem>>, vector<64x32xbf16>
    %c0_11 = arith.constant 0 : index
    %c0_12 = arith.constant 0 : index
    %6 = vector.load %arg7[%c0_11, %c0_12] : memref<1x32xf32, #tpu.memory_space<vmem>>, vector<1x32xf32>
    %7 = arith.extf %0 : vector<16x32xbf16> to vector<16x32xf32>
    %cst = arith.constant dense<0.000000e+00> : vector<16xf32>
    %8 = vector.multi_reduction <add>, %7, %cst [1] : vector<16x32xf32> to vector<16xf32>
    %9 = vector.shape_cast %8 : vector<16xf32> to vector<16x1xf32>
    %cst_13 = arith.constant 3.200000e+01 : f32
    %10 = vector.broadcast %cst_13 : f32 to vector<16x1xf32>
    %11 = arith.divf %9, %10 : vector<16x1xf32>
    %12 = vector.broadcast %11 : vector<16x1xf32> to vector<16x32xf32>
    %13 = arith.subf %7, %12 : vector<16x32xf32>
    %14 = arith.mulf %13, %13 : vector<16x32xf32>
    %cst_14 = arith.constant dense<0.000000e+00> : vector<16xf32>
    %15 = vector.multi_reduction <add>, %14, %cst_14 [1] : vector<16x32xf32> to vector<16xf32>
    %16 = vector.shape_cast %15 : vector<16xf32> to vector<16x1xf32>
    %cst_15 = arith.constant 3.200000e+01 : f32
    %17 = vector.broadcast %cst_15 : f32 to vector<16x1xf32>
    %18 = arith.divf %16, %17 : vector<16x1xf32>
    %19 = vector.broadcast %11 : vector<16x1xf32> to vector<16x32xf32>
    %20 = arith.subf %7, %19 : vector<16x32xf32>
    %cst_16 = arith.constant 9.99999974E-6 : f32
    %21 = vector.broadcast %cst_16 : f32 to vector<16x1xf32>
    %22 = arith.addf %18, %21 : vector<16x1xf32>
    %23 = math.rsqrt %22 : vector<16x1xf32>
    %24 = vector.broadcast %23 : vector<16x1xf32> to vector<16x32xf32>
    %25 = arith.mulf %20, %24 : vector<16x32xf32>
    %26 = vector.broadcast %1 : vector<1x32xf32> to vector<16x32xf32>
    %27 = arith.mulf %25, %26 : vector<16x32xf32>
    %28 = vector.broadcast %2 : vector<1x32xf32> to vector<16x32xf32>
    %29 = arith.addf %27, %28 : vector<16x32xf32>
    %30 = arith.truncf %29 : vector<16x32xf32> to vector<16x32xbf16>
    %cst_17 = arith.constant dense<0.000000e+00> : vector<16x64xf32>
    %31 = tpu.matmul %30, %3, %cst_17 {dimension_numbers = #tpu.dot_dimension_numbers<[1], [0], [0], [1], [0, 0, 1, 1], [], []>} : vector<16x32xbf16>, vector<32x64xbf16>, vector<16x64xf32> -> vector<16x64xf32>
    %32 = vector.broadcast %4 : vector<1x64xf32> to vector<16x64xf32>
    %33 = arith.addf %31, %32 : vector<16x64xf32>
    %34 = arith.negf %33 : vector<16x64xf32>
    %35 = math.exp %34 : vector<16x64xf32>
    %cst_18 = arith.constant 1.000000e+00 : f32
    %36 = vector.broadcast %cst_18 : f32 to vector<16x64xf32>
    %37 = arith.addf %36, %35 : vector<16x64xf32>
    %38 = arith.divf %36, %37 : vector<16x64xf32>
    %39 = arith.mulf %33, %38 : vector<16x64xf32>
    %40 = arith.truncf %39 : vector<16x64xf32> to vector<16x64xbf16>
    %cst_19 = arith.constant dense<0.000000e+00> : vector<16x32xf32>
    %41 = tpu.matmul %40, %5, %cst_19 {dimension_numbers = #tpu.dot_dimension_numbers<[1], [0], [0], [1], [0, 0, 1, 1], [], []>} : vector<16x64xbf16>, vector<64x32xbf16>, vector<16x32xf32> -> vector<16x32xf32>
    %42 = vector.broadcast %6 : vector<1x32xf32> to vector<16x32xf32>
    %43 = arith.addf %41, %42 : vector<16x32xf32>
    %cst_20 = arith.constant 5.000000e-01 : f32
    %44 = vector.broadcast %cst_20 : f32 to vector<16x32xf32>
    %45 = arith.mulf %44, %7 : vector<16x32xf32>
    %46 = arith.addf %45, %43 : vector<16x32xf32>
    %c0_21 = arith.constant 0 : index
    %c0_22 = arith.constant 0 : index
    %47 = vector.load %arg8[%c0_21, %c0_22] : memref<1x32xf32, #tpu.memory_space<vmem>>, vector<1x32xf32>
    %c0_23 = arith.constant 0 : index
    %c0_24 = arith.constant 0 : index
    %48 = vector.load %arg9[%c0_23, %c0_24] : memref<1x32xf32, #tpu.memory_space<vmem>>, vector<1x32xf32>
    %cst_25 = arith.constant dense<0.000000e+00> : vector<16xf32>
    %49 = vector.multi_reduction <add>, %46, %cst_25 [1] : vector<16x32xf32> to vector<16xf32>
    %50 = vector.shape_cast %49 : vector<16xf32> to vector<16x1xf32>
    %cst_26 = arith.constant 3.200000e+01 : f32
    %51 = vector.broadcast %cst_26 : f32 to vector<16x1xf32>
    %52 = arith.divf %50, %51 : vector<16x1xf32>
    %53 = vector.broadcast %52 : vector<16x1xf32> to vector<16x32xf32>
    %54 = arith.subf %46, %53 : vector<16x32xf32>
    %55 = arith.mulf %54, %54 : vector<16x32xf32>
    %cst_27 = arith.constant dense<0.000000e+00> : vector<16xf32>
    %56 = vector.multi_reduction <add>, %55, %cst_27 [1] : vector<16x32xf32> to vector<16xf32>
    %57 = vector.shape_cast %56 : vector<16xf32> to vector<16x1xf32>
    %cst_28 = arith.constant 3.200000e+01 : f32
    %58 = vector.broadcast %cst_28 : f32 to vector<16x1xf32>
    %59 = arith.divf %57, %58 : vector<16x1xf32>
    %60 = vector.broadcast %52 : vector<16x1xf32> to vector<16x32xf32>
    %61 = arith.subf %46, %60 : vector<16x32xf32>
    %cst_29 = arith.constant 9.99999974E-6 : f32
    %62 = vector.broadcast %cst_29 : f32 to vector<16x1xf32>
    %63 = arith.addf %59, %62 : vector<16x1xf32>
    %64 = math.rsqrt %63 : vector<16x1xf32>
    %65 = vector.broadcast %64 : vector<16x1xf32> to vector<16x32xf32>
    %66 = arith.mulf %61, %65 : vector<16x32xf32>
    %67 = vector.broadcast %47 : vector<1x32xf32> to vector<16x32xf32>
    %68 = arith.mulf %66, %67 : vector<16x32xf32>
    %69 = vector.broadcast %48 : vector<1x32xf32> to vector<16x32xf32>
    %70 = arith.addf %68, %69 : vector<16x32xf32>
    %71 = arith.truncf %70 : vector<16x32xf32> to vector<16x32xbf16>
    %c0_30 = arith.constant 0 : index
    %c0_31 = arith.constant 0 : index
    %72 = vector.load %arg10[%c0_30, %c0_31] : memref<16x32xbf16, #tpu.memory_space<vmem>>, vector<16x32xbf16>
    tpu.vector_store %arg10[%c0_30, %c0_31], %71 {strides = array<i32>} : memref<16x32xbf16, #tpu.memory_space<vmem>>, vector<16x32xbf16>,
    return
  }
  func.func @transform_0(%arg0: i32) -> (i32, i32) {
    %c0_i32 = arith.constant 0 : i32
    %c0_i32_0 = arith.constant 0 : i32
    return %arg0, %c0_i32 : i32, i32
  }
  func.func @transform_1(%arg0: i32) -> (i32, i32) {
    %c0_i32 = arith.constant 0 : i32
    %c0_i32_0 = arith.constant 0 : i32
    %c0_i32_1 = arith.constant 0 : i32
    return %c0_i32, %c0_i32_0 : i32, i32
  }
  func.func @transform_2(%arg0: i32) -> (i32, i32) {
    %c0_i32 = arith.constant 0 : i32
    %c0_i32_0 = arith.constant 0 : i32
    %c0_i32_1 = arith.constant 0 : i32
    return %c0_i32, %c0_i32_0 : i32, i32
  }
  func.func @transform_3(%arg0: i32) -> (i32, i32) {
    %c0_i32 = arith.constant 0 : i32
    %c0_i32_0 = arith.constant 0 : i32
    %c0_i32_1 = arith.constant 0 : i32
    return %c0_i32, %c0_i32_0 : i32, i32
  }
  func.func @transform_4(%arg0: i32) -> (i32, i32) {
    %c0_i32 = arith.constant 0 : i32
    %c0_i32_0 = arith.constant 0 : i32
    %c0_i32_1 = arith.constant 0 : i32
    return %c0_i32, %c0_i32_0 : i32, i32
  }
  func.func @transform_5(%arg0: i32) -> (i32, i32) {
    %c0_i32 = arith.constant 0 : i32
    %c0_i32_0 = arith.constant 0 : i32
    %c0_i32_1 = arith.constant 0 : i32
    return %c0_i32, %c0_i32_0 : i32, i32
  }
  func.func @transform_6(%arg0: i32) -> (i32, i32) {
    %c0_i32 = arith.constant 0 : i32
    %c0_i32_0 = arith.constant 0 : i32
    %c0_i32_1 = arith.constant 0 : i32
    return %c0_i32, %c0_i32_0 : i32, i32
  }
  func.func @transform_7(%arg0: i32) -> (i32, i32) {
    %c0_i32 = arith.constant 0 : i32
    %c0_i32_0 = arith.constant 0 : i32
    %c0_i32_1 = arith.constant 0 : i32
    return %c0_i32, %c0_i32_0 : i32, i32
  }
  func.func @transform_8(%arg0: i32) -> (i32, i32) {
    %c0_i32 = arith.constant 0 : i32
    %c0_i32_0 = arith.constant 0 : i32
    %c0_i32_1 = arith.constant 0 : i32
    return %c0_i32, %c0_i32_0 : i32, i32
  }
  func.func @transform_9(%arg0: i32) -> (i32, i32) {
    %c0_i32 = arith.constant 0 : i32
    %c0_i32_0 = arith.constant 0 : i32
    return %arg0, %c0_i32 : i32, i32
  }
}

module attributes {stable_mosaic.version = 11 : i64} {
  func.func @ff_ln_kernel(%arg0: i32, %arg1: memref<16x32xbf16, #tpu.memory_space<vmem>>, %arg2: memref<1x32xf32, #tpu.memory_space<vmem>>, %arg3: memref<1x32xf32, #tpu.memory_space<vmem>>, %arg4: memref<32x64xbf16, #tpu.memory_space<vmem>>, %arg5: memref<1x64xf32, #tpu.memory_space<vmem>>, %arg6: memref<64x32xbf16, #tpu.memory_space<vmem>>, %arg7: memref<1x32xf32, #tpu.memory_space<vmem>>, %arg8: memref<1x32xf32, #tpu.memory_space<vmem>>, %arg9: memref<1x32xf32, #tpu.memory_space<vmem>>, %arg10: memref<16x32xbf16, #tpu.memory_space<vmem>>) attributes {dimension_semantics = [#tpu.dimension_semantics<parallel>], iteration_bounds = array<i64: 1>, scalar_prefetch = 0 : i64, scratch_operands = 0 : i64, tpu.core_type = #tpu.core_type<tc>, window_params = [{transform_indices = @transform_0, window_bounds = array<i64: 16, 32>}, {pipeline_mode = #tpu.pipeline_mode<synchronous>, transform_indices = @transform_1, window_bounds = array<i64: 1, 32>}, {pipeline_mode = #tpu.pipeline_mode<synchronous>, transform_indices = @transform_2, window_bounds = array<i64: 1, 32>}, {pipeline_mode = #tpu.pipeline_mode<synchronous>, transform_indices = @transform_3, window_bounds = array<i64: 32, 64>}, {pipeline_mode = #tpu.pipeline_mode<synchronous>, transform_indices = @transform_4, window_bounds = array<i64: 1, 64>}, {pipeline_mode = #tpu.pipeline_mode<synchronous>, transform_indices = @transform_5, window_bounds = array<i64: 64, 32>}, {pipeline_mode = #tpu.pipeline_mode<synchronous>, transform_indices = @transform_6, window_bounds = array<i64: 1, 32>}, {pipeline_mode = #tpu.pipeline_mode<synchronous>, transform_indices = @transform_7, window_bounds = array<i64: 1, 32>}, {pipeline_mode = #tpu.pipeline_mode<synchronous>, transform_indices = @transform_8, window_bounds = array<i64: 1, 32>}, {transform_indices = @transform_9, window_bounds = array<i64: 16, 32>}]} {
    %c0 = arith.constant 0 : index
    %c0_0 = arith.constant 0 : index
    %0 = vector.load %arg1[%c0, %c0_0] : memref<16x32xbf16, #tpu.memory_space<vmem>>, vector<16x32xbf16>
    %c0_1 = arith.constant 0 : index
    %c0_2 = arith.constant 0 : index
    %1 = vector.load %arg2[%c0_1, %c0_2] : memref<1x32xf32, #tpu.memory_space<vmem>>, vector<1x32xf32>
    %c0_3 = arith.constant 0 : index
    %c0_4 = arith.constant 0 : index
    %2 = vector.load %arg3[%c0_3, %c0_4] : memref<1x32xf32, #tpu.memory_space<vmem>>, vector<1x32xf32>
    %c0_5 = arith.constant 0 : index
    %c0_6 = arith.constant 0 : index
    %3 = vector.load %arg4[%c0_5, %c0_6] : memref<32x64xbf16, #tpu.memory_space<vmem>>, vector<32x64xbf16>
    %c0_7 = arith.constant 0 : index
    %c0_8 = arith.constant 0 : index
    %4 = vector.load %arg5[%c0_7, %c0_8] : memref<1x64xf32, #tpu.memory_space<vmem>>, vector<1x64xf32>
    %c0_9 = arith.constant 0 : index
    %c0_10 = arith.constant 0 : index
    %5 = vector.load %arg6[%c0_9, %c0_10] : memref<64x32xbf16, #tpu.memory_space<vmem>>, vector<64x32xbf16>
    %c0_11 = arith.constant 0 : index
    %c0_12 = arith.constant 0 : index
    %6 = vector.load %arg7[%c0_11, %c0_12] : memref<1x32xf32, #tpu.memory_space<vmem>>, vector<1x32xf32>
    %7 = arith.extf %0 : vector<16x32xbf16> to vector<16x32xf32>
    %cst = arith.constant dense<0.000000e+00> : vector<16xf32>
    %8 = vector.multi_reduction <add>, %7, %cst [1] : vector<16x32xf32> to vector<16xf32>
    %9 = vector.shape_cast %8 : vector<16xf32> to vector<16x1xf32>
    %cst_13 = arith.constant 3.200000e+01 : f32
    %10 = vector.broadcast %cst_13 : f32 to vector<16x1xf32>
    %11 = arith.divf %9, %10 : vector<16x1xf32>
    %12 = vector.broadcast %11 : vector<16x1xf32> to vector<16x32xf32>
    %13 = arith.subf %7, %12 : vector<16x32xf32>
    %14 = arith.mulf %13, %13 : vector<16x32xf32>
    %cst_14 = arith.constant dense<0.000000e+00> : vector<16xf32>
    %15 = vector.multi_reduction <add>, %14, %cst_14 [1] : vector<16x32xf32> to vector<16xf32>
    %16 = vector.shape_cast %15 : vector<16xf32> to vector<16x1xf32>
    %cst_15 = arith.constant 3.200000e+01 : f32
    %17 = vector.broadcast %cst_15 : f32 to vector<16x1xf32>
    %18 = arith.divf %16, %17 : vector<16x1xf32>
    %19 = vector.broadcast %11 : vector<16x1xf32> to vector<16x32xf32>
    %20 = arith.subf %7, %19 : vector<16x32xf32>
    %cst_16 = arith.constant 9.99999974E-6 : f32
    %21 = vector.broadcast %cst_16 : f32 to vector<16x1xf32>
    %22 = arith.addf %18, %21 : vector<16x1xf32>
    %23 = math.rsqrt %22 : vector<16x1xf32>
    %24 = vector.broadcast %23 : vector<16x1xf32> to vector<16x32xf32>
    %25 = arith.mulf %20, %24 : vector<16x32xf32>
    %26 = vector.broadcast %1 : vector<1x32xf32> to vector<16x32xf32>
    %27 = arith.mulf %25, %26 : vector<16x32xf32>
    %28 = vector.broadcast %2 : vector<1x32xf32> to vector<16x32xf32>
    %29 = arith.addf %27, %28 : vector<16x32xf32>
    %30 = arith.truncf %29 : vector<16x32xf32> to vector<16x32xbf16>
    %cst_17 = arith.constant dense<0.000000e+00> : vector<16x64xf32>
    %31 = tpu.matmul %30, %3, %cst_17 {dimension_numbers = #tpu.dot_dimension_numbers<[1], [0], [0], [1], [0, 0, 1, 1], [], []>} : vector<16x32xbf16>, vector<32x64xbf16>, vector<16x64xf32> -> vector<16x64xf32>
    %32 = vector.broadcast %4 : vector<1x64xf32> to vector<16x64xf32>
    %33 = arith.addf %31, %32 : vector<16x64xf32>
    %34 = arith.negf %33 : vector<16x64xf32>
    %35 = math.exp %34 : vector<16x64xf32>
    %cst_18 = arith.constant 1.000000e+00 : f32
    %36 = vector.broadcast %cst_18 : f32 to vector<16x64xf32>
    %37 = arith.addf %36, %35 : vector<16x64xf32>
    %38 = arith.divf %36, %37 : vector<16x64xf32>
    %39 = arith.mulf %33, %38 : vector<16x64xf32>
    %40 = arith.truncf %39 : vector<16x64xf32> to vector<16x64xbf16>
    %cst_19 = arith.constant dense<0.000000e+00> : vector<16x32xf32>
    %41 = tpu.matmul %40, %5, %cst_19 {dimension_numbers = #tpu.dot_dimension_numbers<[1], [0], [0], [1], [0, 0, 1, 1], [], []>} : vector<16x64xbf16>, vector<64x32xbf16>, vector<16x32xf32> -> vector<16x32xf32>
    %42 = vector.broadcast %6 : vector<1x32xf32> to vector<16x32xf32>
    %43 = arith.addf %41, %42 : vector<16x32xf32>
    %cst_20 = arith.constant 5.000000e-01 : f32
    %44 = vector.broadcast %cst_20 : f32 to vector<16x32xf32>
    %45 = arith.mulf %44, %7 : vector<16x32xf32>
    %46 = arith.addf %45, %43 : vector<16x32xf32>
    %c0_21 = arith.constant 0 : index
    %c0_22 = arith.constant 0 : index
    %47 = vector.load %arg8[%c0_21, %c0_22] : memref<1x32xf32, #tpu.memory_space<vmem>>, vector<1x32xf32>
    %c0_23 = arith.constant 0 : index
    %c0_24 = arith.constant 0 : index
    %48 = vector.load %arg9[%c0_23, %c0_24] : memref<1x32xf32, #tpu.memory_space<vmem>>, vector<1x32xf32>
    %cst_25 = arith.constant dense<0.000000e+00> : vector<16xf32>
    %49 = vector.multi_reduction <add>, %46, %cst_25 [1] : vector<16x32xf32> to vector<16xf32>
    %50 = vector.shape_cast %49 : vector<16xf32> to vector<16x1xf32>
    %cst_26 = arith.constant 3.200000e+01 : f32
    %51 = vector.broadcast %cst_26 : f32 to vector<16x1xf32>
    %52 = arith.divf %50, %51 : vector<16x1xf32>
    %53 = vector.broadcast %52 : vector<16x1xf32> to vector<16x32xf32>
    %54 = arith.subf %46, %53 : vector<16x32xf32>
    %55 = arith.mulf %54, %54 : vector<16x32xf32>
    %cst_27 = arith.constant dense<0.000000e+00> : vector<16xf32>
    %56 = vector.multi_reduction <add>, %55, %cst_27 [1] : vector<16x32xf32> to vector<16xf32>
    %57 = vector.shape_cast %56 : vector<16xf32> to vector<16x1xf32>
    %cst_28 = arith.constant 3.200000e+01 : f32
    %58 = vector.broadcast %cst_28 : f32 to vector<16x1xf32>
    %59 = arith.divf %57, %58 : vector<16x1xf32>
    %60 = vector.broadcast %52 : vector<16x1xf32> to vector<16x32xf32>
    %61 = arith.subf %46, %60 : vector<16x32xf32>
    %cst_29 = arith.constant 9.99999974E-6 : f32
    %62 = vector.broadcast %cst_29 : f32 to vector<16x1xf32>
    %63 = arith.addf %59, %62 : vector<16x1xf32>
    %64 = math.rsqrt %63 : vector<16x1xf32>
    %65 = vector.broadcast %64 : vector<16x1xf32> to vector<16x32xf32>
    %66 = arith.mulf %61, %65 : vector<16x32xf32>
    %67 = vector.broadcast %47 : vector<1x32xf32> to vector<16x32xf32>
    %68 = arith.mulf %66, %67 : vector<16x32xf32>
    %69 = vector.broadcast %48 : vector<1x32xf32> to vector<16x32xf32>
    %70 = arith.addf %68, %69 : vector<16x32xf32>
    %71 = arith.truncf %70 : vector<16x32xf32> to vector<16x32xbf16>
    %c0_30 = arith.constant 0 : index
    %c0_31 = arith.constant 0 : index
    %72 = vector.load %arg10[%c0_30, %c0_31] : memref<16x32xbf16, #tpu.memory_space<vmem>>, vector<16x32xbf16>
    tpu.vector_store %arg10[%c0_30, %c0_31], %71 {strides = array<i32>} : memref<16x32xbf16, #tpu.memory_space<vmem>>, vector<16x32xbf16>,
    return
  }
  func.func @transform_0(%arg0: i32) -> (i32, i32) {
    %c0_i32 = arith.constant 0 : i32
    %c0_i32_0 = arith.constant 0 : i32
    return %arg0, %c0_i32 : i32, i32
  }
  func.func @transform_1(%arg0: i32) -> (i32, i32) {
    %c0_i32 = arith.constant 0 : i32
    %c0_i32_0 = arith.constant 0 : i32
    %c0_i32_1 = arith.constant 0 : i32
    return %c0_i32, %c0_i32_0 : i32, i32
  }
  func.func @transform_2(%arg0: i32) -> (i32, i32) {
    %c0_i32 = arith.constant 0 : i32
    %c0_i32_0 = arith.constant 0 : i32
    %c0_i32_1 = arith.constant 0 : i32
    return %c0_i32, %c0_i32_0 : i32, i32
  }
  func.func @transform_3(%arg0: i32) -> (i32, i32) {
    %c0_i32 = arith.constant 0 : i32
    %c0_i32_0 = arith.constant 0 : i32
    %c0_i32_1 = arith.constant 0 : i32
    return %c0_i32, %c0_i32_0 : i32, i32
  }
  func.func @transform_4(%arg0: i32) -> (i32, i32) {
    %c0_i32 = arith.constant 0 : i32
    %c0_i32_0 = arith.constant 0 : i32
    %c0_i32_1 = arith.constant 0 : i32
    return %c0_i32, %c0_i32_0 : i32, i32
  }
  func.func @transform_5(%arg0: i32) -> (i32, i32) {
    %c0_i32 = arith.constant 0 : i32
    %c0_i32_0 = arith.constant 0 : i32
    %c0_i32_1 = arith.constant 0 : i32
    return %c0_i32, %c0_i32_0 : i32, i32
  }
  func.func @transform_6(%arg0: i32) -> (i32, i32) {
    %c0_i32 = arith.constant 0 : i32
    %c0_i32_0 = arith.constant 0 : i32
    %c0_i32_1 = arith.constant 0 : i32
    return %c0_i32, %c0_i32_0 : i32, i32
  }
  func.func @transform_7(%arg0: i32) -> (i32, i32) {
    %c0_i32 = arith.constant 0 : i32
    %c0_i32_0 = arith.constant 0 : i32
    %c0_i32_1 = arith.constant 0 : i32
    return %c0_i32, %c0_i32_0 : i32, i32
  }
  func.func @transform_8(%arg0: i32) -> (i32, i32) {
    %c0_i32 = arith.constant 0 : i32
    %c0_i32_0 = arith.constant 0 : i32
    %c0_i32_1 = arith.constant 0 : i32
    return %c0_i32, %c0_i32_0 : i32, i32
  }
  func.func @transform_9(%arg0: i32) -> (i32, i32) {
    %c0_i32 = arith.constant 0 : i32
    %c0_i32_0 = arith.constant 0 : i32
    return %arg0, %c0_i32 : i32, i32
  }
}

</mosaic_0001>

<llo_original>
// kernel: tpu_custom_call.1
$region0: #{tpu_custom_call.1}
  #allocation0 [shape = 'u32[]', space=smem, size = 0x4, offset = 0x4, fixed_abs, tag = 'smem constant byte address 0x4 - core index']
  #allocation1 [shape = 'u32[144,128]{1,0:T(1,128)}', space=vmem, size = 0x12000, scoped, tag = 'internal scratch']
  %s0 = inlined_call_operand.hbm [shape: f32[8,128], index: 0, kind: input, shape index: {}]
  %s1 = inlined_call_operand.hbm [shape: f32[8,128], index: 1, kind: output, shape index: {}]
  %s2 = sld [smem:[#allocation0]]
  $region41: #{tpu_custom_call.1} parent=0
    _
  %s4 = ssub.s32 1, %s2
  %s5 = scalar_select 0, %s4, %s2
  $region1: #{tpu_custom_call.1} parent=0
    #allocation2 [shape = 'u8[4096]{0}', space=vmem, size = 0x1000, scoped, tag = 'input window, operand 0, single buffered']
    #allocation3 [shape = 's32[2]{0}', space=sflag, size = 0x8, scoped, tag = 'scoped memory for tpu_custom_call.1']
    #allocation4 [shape = 's32[2]{0}', space=sflag, size = 0x8, scoped, tag = 'scoped memory for tpu_custom_call.1']
    #allocation5 [shape = 'u8[4096]{0}', space=vmem, size = 0x1000, scoped, tag = 'output window, operand 0, single buffered']
    %6 = vsyncpa [#allocation3], 0
    %7 = vsyncpa [#allocation4], 0
    loop: start=0, step=1, limit=4
    $region2: #{tpu_custom_call.1} parent=1 // loop_pre_header
      _
    $region3: #{tpu_custom_call.1} parent=1 // loop_header
      %s9 = sphi 0, %s13
      %p10 = scmp.ge.s32.totalorder %s9, 4
      %s17 = sphi 0, %s17
      %s19 = sphi 0, %s17
      %s20 = sphi 0, %s19
      %s34 = sphi 0, %s20
      %s38 = sphi 0, %s38
      %s40 = sphi 0, %s38
      %s41 = sphi 0, %s40
      %s55 = sphi 0, %s41
    $region4: #{tpu_custom_call.1} parent=1 // loop_header_branch
      %12 = sbr.rel (%p10) target = $region8
    $region5: #{tpu_custom_call.1} parent=1 // loop_body
      %s14 = ssub.s32 %s9, 1
      %s15 = ssub.s32 %s9, 2
      %s16 = sadd.s32 %s9, 1
      %s18 = sadd.s32 %s17, 1
      %p21 = scmp.eq.s32.totalorder %s9, 1
      %p22 = scmp.ne.s32.totalorder %s17, %s19
      %p23 = scmp.eq.s32.totalorder %s9, 0
      %p24 = por %p22, %p23
      %p25 = scmp.ne.s32.totalorder %s17, %s19
      %p26 = scmp.eq.s32.totalorder %s14, 1
      %p27 = por %p25, %p26
      %p28 = scmp.ne.s32.totalorder %s19, %s20
      %p29 = scmp.eq.s32.totalorder %s14, 0
      %p30 = por %p28, %p29
      %p31 = scmp.ne.s32.totalorder %s19, %s20
      %p32 = scmp.eq.s32.totalorder %s15, 1
      %p33 = por %p31, %p32
      %p35 = scmp.ne.s32.totalorder %s20, %s34
      %p36 = scmp.eq.s32.totalorder %s15, 0
      %p37 = por %p35, %p36
      %s39 = sadd.s32 %s38, 1
      %p42 = scmp.eq.s32.totalorder %s9, 1
      %p43 = scmp.ne.s32.totalorder %s38, %s40
      %p44 = scmp.eq.s32.totalorder %s9, 0
      %p45 = por %p43, %p44
      %p46 = scmp.ne.s32.totalorder %s38, %s40
      %p47 = scmp.eq.s32.totalorder %s14, 1
      %p48 = por %p46, %p47
      %p49 = scmp.ne.s32.totalorder %s40, %s41
      %p50 = scmp.eq.s32.totalorder %s14, 0
      %p51 = por %p49, %p50
      %p52 = scmp.ne.s32.totalorder %s40, %s41
      %p53 = scmp.eq.s32.totalorder %s15, 1
      %p54 = por %p52, %p53
      %p56 = scmp.ne.s32.totalorder %s41, %s55
      %p57 = scmp.eq.s32.totalorder %s15, 0
      %p58 = por %p56, %p57
      %p59 = scmp.le.s32.totalorder 1, %s9
      %p60 = scmp.lt.s32.totalorder %s9, 3
      %p61 = pnand %p59, %p60
      %p62 = pneg %p61
      // Predicated region
      $region9: #{tpu_custom_call.1} parent=5 // pred_check
        _
      $region10: #{tpu_custom_call.1} parent=5 // pred_check_branch
        %64 = sbr.rel (%p61) target = $region12
      $region11: #{tpu_custom_call.1} parent=5 // pred_region
        %s65 = ssub.s32 %s9, 1
        // Predicated region
        $region13: #{tpu_custom_call.1} parent=11 // pred_check
          %p66 = pneg %p30
        $region14: #{tpu_custom_call.1} parent=11 // pred_check_branch
          %68 = sbr.rel (%p66) target = $region16
        $region15: #{tpu_custom_call.1} parent=11 // pred_region
          %s70 = ssub.s32 128, 128
          %71 = vsyncadd [#allocation3], %s70
          %s73 = sshll.u32 [#allocation2], 4
          %s74 = int_to_ptr.vmem [resolvable:$true] %s73
          %76 = dma.hbm_to_vmem [thread:$0]  %s0, 128, %s74, [#allocation3]
        $region16: #{tpu_custom_call.1} parent=11 // pred_fallthru
          _
      $region12: #{tpu_custom_call.1} parent=5 // pred_fallthru
        _
      %p77 = scmp.lt.s32.totalorder %s9, 2
      // Predicated region
      $region17: #{tpu_custom_call.1} parent=5 // pred_check
        %p78 = pneg %p77
      $region18: #{tpu_custom_call.1} parent=5 // pred_check_branch
        %80 = sbr.rel (%p78) target = $region20
      $region19: #{tpu_custom_call.1} parent=5 // pred_region
        _
      $region20: #{tpu_custom_call.1} parent=5 // pred_fallthru
        _
      %p81 = scmp.le.s32.totalorder 1, %s9
      %p82 = scmp.lt.s32.totalorder %s9, 3
      %p83 = pnand %p81, %p82
      %p84 = pneg %p83
      // Predicated region
      $region21: #{tpu_custom_call.1} parent=5 // pred_check
        _
      $region22: #{tpu_custom_call.1} parent=5 // pred_check_branch
        %86 = sbr.rel (%p83) target = $region24
      $region23: #{tpu_custom_call.1} parent=5 // pred_region
        %s87 = ssub.s32 %s9, 1
        // Predicated region
        $region25: #{tpu_custom_call.1} parent=23 // pred_check
          %p88 = pneg %p30
        $region26: #{tpu_custom_call.1} parent=23 // pred_check_branch
          %90 = sbr.rel (%p88) target = $region28
        $region27: #{tpu_custom_call.1} parent=23 // pred_region
          %91 = dma.done [#allocation3], 128
        $region28: #{tpu_custom_call.1} parent=23 // pred_fallthru
          _
        %p92 = pneg %p30
        %p93 = pneg %p27
        %p94 = pneg %p51
        %p95 = pneg %p48
        %v96 = vld [vmem:[#allocation2] sm:$0xff]
        %v97 = vadd.f32 %v96, 1.0
        %98 = vst [vmem:[#allocation5] sm:$0xff] %v97
        // Predicated region
        $region29: #{tpu_custom_call.1} parent=23 // pred_check
          %p99 = pneg %p48
        $region30: #{tpu_custom_call.1} parent=23 // pred_check_branch
          %101 = sbr.rel (%p99) target = $region32
        $region31: #{tpu_custom_call.1} parent=23 // pred_region
          %s103 = ssub.s32 128, 128
          %104 = vsyncadd [#allocation4], %s103
          %s106 = sshll.u32 [#allocation5], 4
          %s107 = int_to_ptr.vmem [resolvable:$true] %s106
          %109 = dma.vmem_to_hbm [thread:$0]  %s107, 128, %s1, [#allocation4]
        $region32: #{tpu_custom_call.1} parent=23 // pred_fallthru
          _
        // Predicated region
        $region33: #{tpu_custom_call.1} parent=23 // pred_check
          %p110 = pneg %p48
        $region34: #{tpu_custom_call.1} parent=23 // pred_check_branch
          %112 = sbr.rel (%p110) target = $region36
        $region35: #{tpu_custom_call.1} parent=23 // pred_region
          %113 = dma.done [#allocation4], 128
        $region36: #{tpu_custom_call.1} parent=23 // pred_fallthru
          _
      $region24: #{tpu_custom_call.1} parent=5 // pred_fallthru
        _
      %p114 = scmp.le.s32.totalorder 2, %s9
      // Predicated region
      $region37: #{tpu_custom_call.1} parent=5 // pred_check
        %p115 = pneg %p114
      $region38: #{tpu_custom_call.1} parent=5 // pred_check_branch
        %117 = sbr.rel (%p115) target = $region40
      $region39: #{tpu_custom_call.1} parent=5 // pred_region
        %s118 = ssub.s32 %s9, 2
      $region40: #{tpu_custom_call.1} parent=5 // pred_fallthru
        _
    $region6: #{tpu_custom_call.1} parent=1 // loop_footer
      %s13 = sadd.s32 1, %s9
    $region7: #{tpu_custom_call.1} parent=1 // loop_footer_branch
      %8 = sbr.rel target = $region3
    $region8: #{tpu_custom_call.1} parent=1 // loop_exit
      _
    %119 = vsyncpa [#allocation3], 1
    %s120 = scalar_lea.sflag [#allocation3], 1
    %121 = vsyncpa %s120, 1
    %122 = vsyncpa [#allocation4], 1
    %s123 = scalar_lea.sflag [#allocation4], 1
    %124 = vsyncpa %s123, 1

// kernel: encoder_forward.9
$region0: #{encoder_forward.9}
  #allocation0 [shape = 'u32[]', space=smem, size = 0x4, offset = 0x4, fixed_abs, tag = 'smem constant byte address 0x4 - core index']
  #allocation1 [shape = 'u32[144,128]{1,0:T(1,128)}', space=vmem, size = 0x12000, scoped, tag = 'internal scratch']
  %s0 = inlined_call_operand.vmem [shape: f32[16,16], index: 0, kind: input, shape index: {}]
  %s1 = inlined_call_operand.vmem [shape: bf16[16,32], index: 1, kind: input, shape index: {}]
  %s2 = inlined_call_operand.vmem [shape: f32[1,32], index: 2, kind: input, shape index: {}]
  %s3 = inlined_call_operand.vmem [shape: bf16[16,32], index: 3, kind: output, shape index: {}]
  %s4 = sld [smem:[#allocation0]]
  $region22: #{encoder_forward.9} parent=0
    _
  %s6 = ssub.s32 1, %s4
  %s7 = scalar_select 0, %s6, %s4
  // Predicated region
  $region2: #{encoder_forward.9} parent=0 // pred_check
    _
  $region3: #{encoder_forward.9} parent=0 // pred_check_branch
    %9 = sbr.rel (0) target = $region5
  $region4: #{encoder_forward.9} parent=0 // pred_region
    _
  $region5: #{encoder_forward.9} parent=0 // pred_fallthru
    _
  // Predicated region
  $region6: #{encoder_forward.9} parent=0 // pred_check
    _
  $region7: #{encoder_forward.9} parent=0 // pred_check_branch
    %11 = sbr.rel (0) target = $region9
  $region8: #{encoder_forward.9} parent=0 // pred_region
    _
  $region9: #{encoder_forward.9} parent=0 // pred_fallthru
    _
  // Predicated region
  $region10: #{encoder_forward.9} parent=0 // pred_check
    _
  $region11: #{encoder_forward.9} parent=0 // pred_check_branch
    %13 = sbr.rel (0) target = $region13
  $region12: #{encoder_forward.9} parent=0 // pred_region
    _
  $region13: #{encoder_forward.9} parent=0 // pred_fallthru
    _
  %v15 = vld [vmem:[%s0] sm:$0xff]
  %v16 = vld [vmem:[%s0 + $0x8] sm:$0xff]
  %v17 = vpack.c.bf16 %v16, %v15
  %v18 = vld [vmem:[%s1] sm:$0xf]
  %v19 = vld [vmem:[%s1 + $0x4] sm:$0xf]
  %v20 = vld [vmem:[%s2] sm:$0x1]
  %v22 = vlaneseq
  %v23 = vshrl.u32 %v22, 7
  %v24 = vsub.s32 0, %v23
  %v25 = vrot.slane %v20, %v24
  %v29 = vunpack.c.l.b16 %v18
  %v30 = vunpack.c.l.b16 %v19
  %v31 = vpack.c.b16 %v30, %v29
  %vm33 = vcmask 130048
  %v35 = vsel %vm33, %v17, 0
  %37 = vmatprep.subr.bf16.mxu0 0
  %38 = vmatpush1.bf16.msra.mxu0 %v31
  %39 = vmatprep.subr.bf16.mxu0 0
  %40 = vmatpush1.bf16.msra.mxu0 0
  %41 = vmatprep.subr.bf16.mxu0 0
  %42 = vmatpush1.bf16.msra.mxu0 0
  %43 = vmatprep.subr.bf16.mxu0 0
  %44 = vmatpush1.bf16.msra.mxu0 0
  %45 = vmatprep.subr.bf16.mxu0 0
  %46 = vmatpush1.bf16.msra.mxu0 0
  %47 = vmatprep.subr.bf16.mxu0 0
  %48 = vmatpush1.bf16.msra.mxu0 0
  %49 = vmatprep.subr.bf16.mxu0 0
  %50 = vmatpush1.bf16.msra.mxu0 0
  %51 = vmatprep.subr.bf16.mxu0 0
  %52 = vmatpush1.bf16.msra.mxu0 0
  %53 = vmatprep.subr.bf16.mxu0 0
  %54 = vmatpush1.bf16.msra.mxu0 0
  %55 = vmatprep.subr.bf16.mxu0 0
  %56 = vmatpush1.bf16.msra.mxu0 0
  %57 = vmatprep.subr.bf16.mxu0 0
  %58 = vmatpush1.bf16.msra.mxu0 0
  %59 = vmatprep.subr.bf16.mxu0 0
  %60 = vmatpush1.bf16.msra.mxu0 0
  %61 = vmatprep.subr.bf16.mxu0 0
  %62 = vmatpush1.bf16.msra.mxu0 0
  %63 = vmatprep.subr.bf16.mxu0 0
  %64 = vmatpush1.bf16.msra.mxu0 0
  %65 = vmatprep.subr.bf16.mxu0 0
  %66 = vmatpush1.bf16.msra.mxu0 0
  %67 = vmatprep.subr.bf16.mxu0 0
  %68 = vmatpush1.bf16.msra.mxu0 0
  %69 = vmatprep.mubr.bf16.mxu0 0
  %70 = vmatmul.mubr.bf16.gmra.mrb[0].mxu0 %v35
  %v71 = vpop.f32.mrb[0].mxu0
  %v72 = vadd.f32 %v25, %v71
  %v73 = vpop.f32.mrb[0].mxu0
  %v74 = vpop.f32.mrb[0].mxu0
  %v75 = vadd.f32 %v25, %v74
  %v76 = vpop.f32.mrb[0].mxu0
  %77 = vdwg.mxu0
  %v78 = vpack.c.bf16 %v75, %v72
  %v80 = vunpack.c.l.b16 %v78
  %v81 = vunpack.c.h.b16 %v78
  %v82 = vpack.c.b16 %v80, %v80
  %v83 = vpack.c.b16 %v81, %v81
  %vm86 = vcmask 257024
  %87 = vst.msk [vmem:[%s3] sm:$0xf] %vm86, %v82
  %88 = vst.msk [vmem:[%s3 + $0x4] sm:$0xf] %vm86, %v83
  // Predicated region
  $region14: #{encoder_forward.9} parent=0 // pred_check
    _
  $region15: #{encoder_forward.9} parent=0 // pred_check_branch
    %90 = sbr.rel (0) target = $region17
  $region16: #{encoder_forward.9} parent=0 // pred_region
    _
  $region17: #{encoder_forward.9} parent=0 // pred_fallthru
    _
  // Predicated region
  $region18: #{encoder_forward.9} parent=0 // pred_check
    _
  $region19: #{encoder_forward.9} parent=0 // pred_check_branch
    %92 = sbr.rel (0) target = $region21
  $region20: #{encoder_forward.9} parent=0 // pred_region
    _
  $region21: #{encoder_forward.9} parent=0 // pred_fallthru
    _

// kernel: encoder_forward.10
$region0: #{encoder_forward.10}
  #allocation0 [shape = 'u32[]', space=smem, size = 0x4, offset = 0x4, fixed_abs, tag = 'smem constant byte address 0x4 - core index']
  #allocation1 [shape = 'u32[144,128]{1,0:T(1,128)}', space=vmem, size = 0x12000, scoped, tag = 'internal scratch']
  %s0 = inlined_call_operand.vmem [shape: bf16[16,32], index: 0, kind: input, shape index: {}]
  %s1 = inlined_call_operand.vmem [shape: f32[1,32], index: 1, kind: input, shape index: {}]
  %s2 = inlined_call_operand.vmem [shape: f32[1,32], index: 2, kind: input, shape index: {}]
  %s3 = inlined_call_operand.vmem [shape: bf16[32,64], index: 3, kind: input, shape index: {}]
  %s4 = inlined_call_operand.vmem [shape: f32[1,64], index: 4, kind: input, shape index: {}]
  %s5 = inlined_call_operand.vmem [shape: bf16[64,32], index: 5, kind: input, shape index: {}]
  %s6 = inlined_call_operand.vmem [shape: f32[1,32], index: 6, kind: input, shape index: {}]
  %s7 = inlined_call_operand.vmem [shape: bf16[16,32], index: 7, kind: output, shape index: {}]
  %s8 = sld [smem:[#allocation0]]
  $region38: #{encoder_forward.10} parent=0
    _
  %s10 = ssub.s32 1, %s8
  %s11 = scalar_select 0, %s10, %s8
  // Predicated region
  $region2: #{encoder_forward.10} parent=0 // pred_check
    _
  $region3: #{encoder_forward.10} parent=0 // pred_check_branch
    %13 = sbr.rel (0) target = $region5
  $region4: #{encoder_forward.10} parent=0 // pred_region
    _
  $region5: #{encoder_forward.10} parent=0 // pred_fallthru
    _
  // Predicated region
  $region6: #{encoder_forward.10} parent=0 // pred_check
    _
  $region7: #{encoder_forward.10} parent=0 // pred_check_branch
    %15 = sbr.rel (0) target = $region9
  $region8: #{encoder_forward.10} parent=0 // pred_region
    _
  $region9: #{encoder_forward.10} parent=0 // pred_fallthru
    _
  // Predicated region
  $region10: #{encoder_forward.10} parent=0 // pred_check
    _
  $region11: #{encoder_forward.10} parent=0 // pred_check_branch
    %17 = sbr.rel (0) target = $region13
  $region12: #{encoder_forward.10} parent=0 // pred_region
    _
  $region13: #{encoder_forward.10} parent=0 // pred_fallthru
    _
  // Predicated region
  $region14: #{encoder_forward.10} parent=0 // pred_check
    _
  $region15: #{encoder_forward.10} parent=0 // pred_check_branch
    %19 = sbr.rel (0) target = $region17
  $region16: #{encoder_forward.10} parent=0 // pred_region
    _
  $region17: #{encoder_forward.10} parent=0 // pred_fallthru
    _
  // Predicated region
  $region18: #{encoder_forward.10} parent=0 // pred_check
    _
  $region19: #{encoder_forward.10} parent=0 // pred_check_branch
    %21 = sbr.rel (0) target = $region21
  $region20: #{encoder_forward.10} parent=0 // pred_region
    _
  $region21: #{encoder_forward.10} parent=0 // pred_fallthru
    _
  // Predicated region
  $region22: #{encoder_forward.10} parent=0 // pred_check
    _
  $region23: #{encoder_forward.10} parent=0 // pred_check_branch
    %23 = sbr.rel (0) target = $region25
  $region24: #{encoder_forward.10} parent=0 // pred_region
    _
  $region25: #{encoder_forward.10} parent=0 // pred_fallthru
    _
  // Predicated region
  $region26: #{encoder_forward.10} parent=0 // pred_check
    _
  $region27: #{encoder_forward.10} parent=0 // pred_check_branch
    %25 = sbr.rel (0) target = $region29
  $region28: #{encoder_forward.10} parent=0 // pred_region
    _
  $region29: #{encoder_forward.10} parent=0 // pred_fallthru
    _
  %v27 = vld [vmem:[%s0] sm:$0xf]
  %v28 = vld [vmem:[%s0 + $0x4] sm:$0xf]
  %v29 = vld [vmem:[%s1] sm:$0x1]
  %v30 = vld [vmem:[%s2] sm:$0x1]
  %v31 = vld [vmem:[%s3] sm:$0xf]
  %v32 = vld [vmem:[%s3 + $0x4] sm:$0xf]
  %v33 = vld [vmem:[%s3 + $0x8] sm:$0xf]
  %v34 = vld [vmem:[%s3 + $0xc] sm:$0xf]
  %v35 = vld [vmem:[%s4] sm:$0x1]
  %v36 = vld [vmem:[%s5] sm:$0xf]
  %v37 = vld [vmem:[%s5 + $0x4] sm:$0xf]
  %v38 = vld [vmem:[%s5 + $0x8] sm:$0xf]
  %v39 = vld [vmem:[%s5 + $0xc] sm:$0xf]
  %v40 = vld [vmem:[%s5 + $0x10] sm:$0xf]
  %v41 = vld [vmem:[%s5 + $0x14] sm:$0xf]
  %v42 = vld [vmem:[%s5 + $0x18] sm:$0xf]
  %v43 = vld [vmem:[%s5 + $0x1c] sm:$0xf]
  %v44 = vld [vmem:[%s6] sm:$0x1]
  %v45 = vunpack.c.l.bf16 %v27
  %v46 = vunpack.c.l.bf16 %v28
  %vm47 = vcmask 261120
  %v48 = vsel %vm47, %v45, 0.0
  %49 = vadd.xlane.f32.xlu0 %v48
  %v50 = vpop.xlane.xlu0 %49
  %v51 = vsel %vm47, %v46, 0.0
  %52 = vadd.xlane.f32.xlu0 %v51
  %v53 = vpop.xlane.xlu0 %52
  %v54 = vrcp.pop 32.0
  %v55 = vmul.f32 %v50, %v54
  %v56 = vmul.f32 %v53, %v54
  %v57 = vsub.f32 %v45, %v55
  %v58 = vsub.f32 %v46, %v56
  %v59 = vmul.f32 %v57, %v57
  %v60 = vmul.f32 %v58, %v58
  %v61 = vsel %vm47, %v59, 0.0
  %62 = vadd.xlane.f32.xlu0 %v61
  %v63 = vpop.xlane.xlu0 %62
  %v64 = vsel %vm47, %v60, 0.0
  %65 = vadd.xlane.f32.xlu0 %v64
  %v66 = vpop.xlane.xlu0 %65
  %v67 = vmul.f32 %v63, %v54
  %v68 = vmul.f32 %v66, %v54
  %v69 = vadd.f32 %v67, 1e-05
  %v70 = vadd.f32 %v68, 1e-05
  %v71 = vrsqrt.pop %v69
  %v72 = vrsqrt.pop %v70
  %v73 = vmul.f32 %v57, %v71
  %v74 = vmul.f32 %v58, %v72
  %v76 = vlaneseq
  %v77 = vshrl.u32 %v76, 7
  %v78 = vsub.s32 0, %v77
  %v79 = vrot.slane %v29, %v78
  %v81 = vmul.f32 %v73, %v79
  %v82 = vmul.f32 %v74, %v79
  %v84 = vlaneseq
  %v85 = vshrl.u32 %v84, 7
  %v86 = vsub.s32 0, %v85
  %v87 = vrot.slane %v30, %v86
  %v89 = vadd.f32 %v81, %v87
  %v90 = vadd.f32 %v82, %v87
  %v91 = vpack.c.bf16 %v90, %v89
  %v93 = vlaneseq
  %v94 = vshrl.u32 %v93, 7
  %v95 = vsub.s32 0, %v94
  %v96 = vrot.slane %v35, %v95
  %v102 = vunpack.c.l.b16 %v31
  %v103 = vunpack.c.l.b16 %v32
  %v104 = vunpack.c.l.b16 %v33
  %v105 = vunpack.c.l.b16 %v34
  %v106 = vpack.c.b16 %v103, %v102
  %v107 = vpack.c.b16 %v105, %v104
  %v111 = vsel %vm47, %v91, 0
  %113 = vmatprep.subr.bf16.mxu0 0
  %114 = vmatpush1.bf16.msra.mxu0 %v106
  %115 = vmatprep.subr.bf16.mxu0 0
  %116 = vmatpush1.bf16.msra.mxu0 %v107
  %117 = vmatprep.subr.bf16.mxu0 0
  %118 = vmatpush1.bf16.msra.mxu0 0
  %119 = vmatprep.subr.bf16.mxu0 0
  %120 = vmatpush1.bf16.msra.mxu0 0
  %121 = vmatprep.subr.bf16.mxu0 0
  %122 = vmatpush1.bf16.msra.mxu0 0
  %123 = vmatprep.subr.bf16.mxu0 0
  %124 = vmatpush1.bf16.msra.mxu0 0
  %125 = vmatprep.subr.bf16.mxu0 0
  %126 = vmatpush1.bf16.msra.mxu0 0
  %127 = vmatprep.subr.bf16.mxu0 0
  %128 = vmatpush1.bf16.msra.mxu0 0
  %129 = vmatprep.subr.bf16.mxu0 0
  %130 = vmatpush1.bf16.msra.mxu0 0
  %131 = vmatprep.subr.bf16.mxu0 0
  %132 = vmatpush1.bf16.msra.mxu0 0
  %133 = vmatprep.subr.bf16.mxu0 0
  %134 = vmatpush1.bf16.msra.mxu0 0
  %135 = vmatprep.subr.bf16.mxu0 0
  %136 = vmatpush1.bf16.msra.mxu0 0
  %137 = vmatprep.subr.bf16.mxu0 0
  %138 = vmatpush1.bf16.msra.mxu0 0
  %139 = vmatprep.subr.bf16.mxu0 0
  %140 = vmatpush1.bf16.msra.mxu0 0
  %141 = vmatprep.subr.bf16.mxu0 0
  %142 = vmatpush1.bf16.msra.mxu0 0
  %143 = vmatprep.subr.bf16.mxu0 0
  %144 = vmatpush1.bf16.msra.mxu0 0
  %145 = vmatprep.mubr.bf16.mxu0 0
  %146 = vmatmul.mubr.bf16.gmra.mrb[0].mxu0 %v111
  %v147 = vpop.f32.mrb[0].mxu0
  %v148 = vadd.f32 %v96, %v147
  %v149 = vpop.f32.mrb[0].mxu0
  %v150 = vpop.f32.mrb[0].mxu0
  %v151 = vadd.f32 %v96, %v150
  %v152 = vpop.f32.mrb[0].mxu0
  %153 = vdwg.mxu0
  %v154 = vxor.u32 %v148, 2147483648
  %v155 = vxor.u32 %v151, 2147483648
  %v156 = vmul.f32 %v154, 1.442695
  %v157 = vpow.pop %v156
  %v158 = vmul.f32 %v155, 1.442695
  %v159 = vpow.pop %v158
  %v160 = vadd.f32 %v157, 1.0
  %v161 = vadd.f32 %v159, 1.0
  %v162 = vrcp.pop %v160
  %v163 = vmul.f32 1.0, %v162
  %v164 = vrcp.pop %v161
  %v165 = vmul.f32 1.0, %v164
  %v166 = vmul.f32 %v148, %v163
  %v167 = vmul.f32 %v151, %v165
  %v168 = vpack.c.bf16 %v167, %v166
  %v170 = vlaneseq
  %v171 = vshrl.u32 %v170, 7
  %v172 = vsub.s32 0, %v171
  %v173 = vrot.slane %v44, %v172
  %v183 = vunpack.c.l.b16 %v36
  %v184 = vunpack.c.l.b16 %v37
  %v185 = vunpack.c.l.b16 %v38
  %v186 = vunpack.c.l.b16 %v39
  %v187 = vunpack.c.l.b16 %v40
  %v188 = vunpack.c.l.b16 %v41
  %v189 = vunpack.c.l.b16 %v42
  %v190 = vunpack.c.l.b16 %v43
  %v191 = vpack.c.b16 %v184, %v183
  %v192 = vpack.c.b16 %v186, %v185
  %v193 = vpack.c.b16 %v188, %v187
  %v194 = vpack.c.b16 %v190, %v189
  %vm199 = vcmask 523264
  %v201 = vsel %vm199, %v168, 0
  %203 = vmatprep.subr.bf16.mxu0 0
  %204 = vmatpush1.bf16.msra.mxu0 %v191
  %205 = vmatprep.subr.bf16.mxu0 0
  %206 = vmatpush1.bf16.msra.mxu0 %v192
  %207 = vmatprep.subr.bf16.mxu0 0
  %208 = vmatpush1.bf16.msra.mxu0 %v193
  %209 = vmatprep.subr.bf16.mxu0 0
  %210 = vmatpush1.bf16.msra.mxu0 %v194
  %211 = vmatprep.subr.bf16.mxu0 0
  %212 = vmatpush1.bf16.msra.mxu0 0
  %213 = vmatprep.subr.bf16.mxu0 0
  %214 = vmatpush1.bf16.msra.mxu0 0
  %215 = vmatprep.subr.bf16.mxu0 0
  %216 = vmatpush1.bf16.msra.mxu0 0
  %217 = vmatprep.subr.bf16.mxu0 0
  %218 = vmatpush1.bf16.msra.mxu0 0
  %219 = vmatprep.subr.bf16.mxu0 0
  %220 = vmatpush1.bf16.msra.mxu0 0
  %221 = vmatprep.subr.bf16.mxu0 0
  %222 = vmatpush1.bf16.msra.mxu0 0
  %223 = vmatprep.subr.bf16.mxu0 0
  %224 = vmatpush1.bf16.msra.mxu0 0
  %225 = vmatprep.subr.bf16.mxu0 0
  %226 = vmatpush1.bf16.msra.mxu0 0
  %227 = vmatprep.subr.bf16.mxu0 0
  %228 = vmatpush1.bf16.msra.mxu0 0
  %229 = vmatprep.subr.bf16.mxu0 0
  %230 = vmatpush1.bf16.msra.mxu0 0
  %231 = vmatprep.subr.bf16.mxu0 0
  %232 = vmatpush1.bf16.msra.mxu0 0
  %233 = vmatprep.subr.bf16.mxu0 0
  %234 = vmatpush1.bf16.msra.mxu0 0
  %235 = vmatprep.mubr.bf16.mxu0 0
  %236 = vmatmul.mubr.bf16.gmra.mrb[0].mxu0 %v201
  %v237 = vpop.f32.mrb[0].mxu0
  %v238 = vadd.f32 %v173, %v237
  %v239 = vpop.f32.mrb[0].mxu0
  %v240 = vpop.f32.mrb[0].mxu0
  %v241 = vadd.f32 %v173, %v240
  %v242 = vpop.f32.mrb[0].mxu0
  %243 = vdwg.mxu0
  %v244 = vmul.f32 %v45, 0.5
  %v245 = vmul.f32 %v46, 0.5
  %v246 = vadd.f32 %v244, %v238
  %v247 = vadd.f32 %v245, %v241
  %v248 = vpack.c.bf16 %v247, %v246
  %v250 = vunpack.c.l.b16 %v248
  %v251 = vunpack.c.h.b16 %v248
  %v252 = vpack.c.b16 %v250, %v250
  %v253 = vpack.c.b16 %v251, %v251
  %vm256 = vcmask 257024
  %257 = vst.msk [vmem:[%s7] sm:$0xf] %vm256, %v252
  %258 = vst.msk [vmem:[%s7 + $0x4] sm:$0xf] %vm256, %v253
  // Predicated region
  $region30: #{encoder_forward.10} parent=0 // pred_check
    _
  $region31: #{encoder_forward.10} parent=0 // pred_check_branch
    %260 = sbr.rel (0) target = $region33
  $region32: #{encoder_forward.10} parent=0 // pred_region
    _
  $region33: #{encoder_forward.10} parent=0 // pred_fallthru
    _
  // Predicated region
  $region34: #{encoder_forward.10} parent=0 // pred_check
    _
  $region35: #{encoder_forward.10} parent=0 // pred_check_branch
    %262 = sbr.rel (0) target = $region37
  $region36: #{encoder_forward.10} parent=0 // pred_region
    _
  $region37: #{encoder_forward.10} parent=0 // pred_fallthru
    _

// kernel: encoder_forward.11
$region0: #{encoder_forward.11}
  #allocation0 [shape = 'u32[]', space=smem, size = 0x4, offset = 0x4, fixed_abs, tag = 'smem constant byte address 0x4 - core index']
  #allocation1 [shape = 'u32[144,128]{1,0:T(1,128)}', space=vmem, size = 0x12000, scoped, tag = 'internal scratch']
  #allocation2 [shape = 'f32[10,32]{1,0:T(8,128)}', space=vmem, size = 0x2000, scoped, tag = 'scratch operand']
  %s0 = inlined_call_operand.vmem [shape: bf16[2,8,32], index: 0, kind: input, shape index: {}]
  %s1 = inlined_call_operand.vmem [shape: f32[1,32], index: 1, kind: input, shape index: {}]
  %s2 = inlined_call_operand.vmem [shape: f32[1,32], index: 2, kind: input, shape index: {}]
  %s3 = inlined_call_operand.vmem [shape: bf16[32,64], index: 3, kind: input, shape index: {}]
  %s4 = inlined_call_operand.vmem [shape: f32[1,64], index: 4, kind: input, shape index: {}]
  %s5 = inlined_call_operand.vmem [shape: f32[3,32], index: 5, kind: input, shape index: {}]
  %s6 = inlined_call_operand.vmem [shape: f32[1,32], index: 6, kind: input, shape index: {}]
  %s7 = inlined_call_operand.vmem [shape: f32[1,32], index: 7, kind: input, shape index: {}]
  %s8 = inlined_call_operand.vmem [shape: f32[1,32], index: 8, kind: input, shape index: {}]
  %s9 = inlined_call_operand.vmem [shape: bf16[32,32], index: 9, kind: input, shape index: {}]
  %s10 = inlined_call_operand.vmem [shape: f32[1,32], index: 10, kind: input, shape index: {}]
  %s11 = inlined_call_operand.vmem [shape: bf16[2,8,32], index: 11, kind: output, shape index: {}]
  %s12 = sld [smem:[#allocation0]]
  $region77: #{encoder_forward.11} parent=0
    _
  %s14 = ssub.s32 1, %s12
  %s15 = scalar_select 0, %s14, %s12
  loop: start=0, step=1, limit=4
  $region2: #{encoder_forward.11} parent=0 // loop_pre_header
    _
  $region3: #{encoder_forward.11} parent=0 // loop_header
    %s17 = sphi 0, %s21
    %p18 = scmp.ge.s32.totalorder %s17, 4
    %s27 = sphi 0, %s29
    %s30 = sphi 0, %s27
    %s31 = sphi 0, %s30
    %s47 = sphi 0, %s31
    %s51 = sphi 0, %s51
    %s53 = sphi 0, %s51
    %s54 = sphi 0, %s53
    %s68 = sphi 0, %s54
    %s72 = sphi 0, %s72
    %s74 = sphi 0, %s72
    %s75 = sphi 0, %s74
    %s89 = sphi 0, %s75
    %s93 = sphi 0, %s93
    %s95 = sphi 0, %s93
    %s96 = sphi 0, %s95
    %s110 = sphi 0, %s96
    %s114 = sphi 0, %s114
    %s116 = sphi 0, %s114
    %s117 = sphi 0, %s116
    %s131 = sphi 0, %s117
    %s135 = sphi 0, %s135
    %s137 = sphi 0, %s135
    %s138 = sphi 0, %s137
    %s152 = sphi 0, %s138
    %s156 = sphi 0, %s156
    %s158 = sphi 0, %s156
    %s159 = sphi 0, %s158
    %s173 = sphi 0, %s159
    %s177 = sphi 0, %s177
    %s179 = sphi 0, %s177
    %s180 = sphi 0, %s179
    %s194 = sphi 0, %s180
    %s198 = sphi 0, %s198
    %s200 = sphi 0, %s198
    %s201 = sphi 0, %s200
    %s215 = sphi 0, %s201
    %s219 = sphi 0, %s219
    %s221 = sphi 0, %s219
    %s222 = sphi 0, %s221
    %s236 = sphi 0, %s222
    %s240 = sphi 0, %s240
    %s242 = sphi 0, %s240
    %s243 = sphi 0, %s242
    %s257 = sphi 0, %s243
    %s263 = sphi 0, %s265
    %s266 = sphi 0, %s263
    %s267 = sphi 0, %s266
    %s283 = sphi 0, %s267
  $region4: #{encoder_forward.11} parent=0 // loop_header_branch
    %20 = sbr.rel (%p18) target = $region8
  $region5: #{encoder_forward.11} parent=0 // loop_body
    %s22 = ssub.s32 %s17, 1
    %s23 = ssub.s32 %s17, 2
    %s24 = sadd.s32 %s17, 1
    %s25 = ssub.s32 %s17, %s24
    %p26 = scmp.eq.s32.totalorder %s25, 0
    %s28 = sadd.s32 %s27, 1
    %s29 = scalar_select %p26, %s27, %s28
    %p32 = pneg %p26
    %p33 = scmp.eq.s32.totalorder %s17, 1
    %p34 = por %p32, %p33
    %p35 = scmp.ne.s32.totalorder %s27, %s30
    %p36 = scmp.eq.s32.totalorder %s17, 0
    %p37 = por %p35, %p36
    %p38 = scmp.ne.s32.totalorder %s27, %s30
    %p39 = scmp.eq.s32.totalorder %s22, 1
    %p40 = por %p38, %p39
    %p41 = scmp.ne.s32.totalorder %s30, %s31
    %p42 = scmp.eq.s32.totalorder %s22, 0
    %p43 = por %p41, %p42
    %p44 = scmp.ne.s32.totalorder %s30, %s31
    %p45 = scmp.eq.s32.totalorder %s23, 1
    %p46 = por %p44, %p45
    %p48 = scmp.ne.s32.totalorder %s31, %s47
    %p49 = scmp.eq.s32.totalorder %s23, 0
    %p50 = por %p48, %p49
    %s52 = sadd.s32 %s51, 1
    %p55 = scmp.eq.s32.totalorder %s17, 1
    %p56 = scmp.ne.s32.totalorder %s51, %s53
    %p57 = scmp.eq.s32.totalorder %s17, 0
    %p58 = por %p56, %p57
    %p59 = scmp.ne.s32.totalorder %s51, %s53
    %p60 = scmp.eq.s32.totalorder %s22, 1
    %p61 = por %p59, %p60
    %p62 = scmp.ne.s32.totalorder %s53, %s54
    %p63 = scmp.eq.s32.totalorder %s22, 0
    %p64 = por %p62, %p63
    %p65 = scmp.ne.s32.totalorder %s53, %s54
    %p66 = scmp.eq.s32.totalorder %s23, 1
    %p67 = por %p65, %p66
    %p69 = scmp.ne.s32.totalorder %s54, %s68
    %p70 = scmp.eq.s32.totalorder %s23, 0
    %p71 = por %p69, %p70
    %s73 = sadd.s32 %s72, 1
    %p76 = scmp.eq.s32.totalorder %s17, 1
    %p77 = scmp.ne.s32.totalorder %s72, %s74
    %p78 = scmp.eq.s32.totalorder %s17, 0
    %p79 = por %p77, %p78
    %p80 = scmp.ne.s32.totalorder %s72, %s74
    %p81 = scmp.eq.s32.totalorder %s22, 1
    %p82 = por %p80, %p81
    %p83 = scmp.ne.s32.totalorder %s74, %s75
    %p84 = scmp.eq.s32.totalorder %s22, 0
    %p85 = por %p83, %p84
    %p86 = scmp.ne.s32.totalorder %s74, %s75
    %p87 = scmp.eq.s32.totalorder %s23, 1
    %p88 = por %p86, %p87
    %p90 = scmp.ne.s32.totalorder %s75, %s89
    %p91 = scmp.eq.s32.totalorder %s23, 0
    %p92 = por %p90, %p91
    %s94 = sadd.s32 %s93, 1
    %p97 = scmp.eq.s32.totalorder %s17, 1
    %p98 = scmp.ne.s32.totalorder %s93, %s95
    %p99 = scmp.eq.s32.totalorder %s17, 0
    %p100 = por %p98, %p99
    %p101 = scmp.ne.s32.totalorder %s93, %s95
    %p102 = scmp.eq.s32.totalorder %s22, 1
    %p103 = por %p101, %p102
    %p104 = scmp.ne.s32.totalorder %s95, %s96
    %p105 = scmp.eq.s32.totalorder %s22, 0
    %p106 = por %p104, %p105
    %p107 = scmp.ne.s32.totalorder %s95, %s96
    %p108 = scmp.eq.s32.totalorder %s23, 1
    %p109 = por %p107, %p108
    %p111 = scmp.ne.s32.totalorder %s96, %s110
    %p112 = scmp.eq.s32.totalorder %s23, 0
    %p113 = por %p111, %p112
    %s115 = sadd.s32 %s114, 1
    %p118 = scmp.eq.s32.totalorder %s17, 1
    %p119 = scmp.ne.s32.totalorder %s114, %s116
    %p120 = scmp.eq.s32.totalorder %s17, 0
    %p121 = por %p119, %p120
    %p122 = scmp.ne.s32.totalorder %s114, %s116
    %p123 = scmp.eq.s32.totalorder %s22, 1
    %p124 = por %p122, %p123
    %p125 = scmp.ne.s32.totalorder %s116, %s117
    %p126 = scmp.eq.s32.totalorder %s22, 0
    %p127 = por %p125, %p126
    %p128 = scmp.ne.s32.totalorder %s116, %s117
    %p129 = scmp.eq.s32.totalorder %s23, 1
    %p130 = por %p128, %p129
    %p132 = scmp.ne.s32.totalorder %s117, %s131
    %p133 = scmp.eq.s32.totalorder %s23, 0
    %p134 = por %p132, %p133
    %s136 = sadd.s32 %s135, 1
    %p139 = scmp.eq.s32.totalorder %s17, 1
    %p140 = scmp.ne.s32.totalorder %s135, %s137
    %p141 = scmp.eq.s32.totalorder %s17, 0
    %p142 = por %p140, %p141
    %p143 = scmp.ne.s32.totalorder %s135, %s137
    %p144 = scmp.eq.s32.totalorder %s22, 1
    %p145 = por %p143, %p144
    %p146 = scmp.ne.s32.totalorder %s137, %s138
    %p147 = scmp.eq.s32.totalorder %s22, 0
    %p148 = por %p146, %p147
    %p149 = scmp.ne.s32.totalorder %s137, %s138
    %p150 = scmp.eq.s32.totalorder %s23, 1
    %p151 = por %p149, %p150
    %p153 = scmp.ne.s32.totalorder %s138, %s152
    %p154 = scmp.eq.s32.totalorder %s23, 0
    %p155 = por %p153, %p154
    %s157 = sadd.s32 %s156, 1
    %p160 = scmp.eq.s32.totalorder %s17, 1
    %p161 = scmp.ne.s32.totalorder %s156, %s158
    %p162 = scmp.eq.s32.totalorder %s17, 0
    %p163 = por %p161, %p162
    %p164 = scmp.ne.s32.totalorder %s156, %s158
    %p165 = scmp.eq.s32.totalorder %s22, 1
    %p166 = por %p164, %p165
    %p167 = scmp.ne.s32.totalorder %s158, %s159
    %p168 = scmp.eq.s32.totalorder %s22, 0
    %p169 = por %p167, %p168
    %p170 = scmp.ne.s32.totalorder %s158, %s159
    %p171 = scmp.eq.s32.totalorder %s23, 1
    %p172 = por %p170, %p171
    %p174 = scmp.ne.s32.totalorder %s159, %s173
    %p175 = scmp.eq.s32.totalorder %s23, 0
    %p176 = por %p174, %p175
    %s178 = sadd.s32 %s177, 1
    %p181 = scmp.eq.s32.totalorder %s17, 1
    %p182 = scmp.ne.s32.totalorder %s177, %s179
    %p183 = scmp.eq.s32.totalorder %s17, 0
    %p184 = por %p182, %p183
    %p185 = scmp.ne.s32.totalorder %s177, %s179
    %p186 = scmp.eq.s32.totalorder %s22, 1
    %p187 = por %p185, %p186
    %p188 = scmp.ne.s32.totalorder %s179, %s180
    %p189 = scmp.eq.s32.totalorder %s22, 0
    %p190 = por %p188, %p189
    %p191 = scmp.ne.s32.totalorder %s179, %s180
    %p192 = scmp.eq.s32.totalorder %s23, 1
    %p193 = por %p191, %p192
    %p195 = scmp.ne.s32.totalorder %s180, %s194
    %p196 = scmp.eq.s32.totalorder %s23, 0
    %p197 = por %p195, %p196
    %s199 = sadd.s32 %s198, 1
    %p202 = scmp.eq.s32.totalorder %s17, 1
    %p203 = scmp.ne.s32.totalorder %s198, %s200
    %p204 = scmp.eq.s32.totalorder %s17, 0
    %p205 = por %p203, %p204
    %p206 = scmp.ne.s32.totalorder %s198, %s200
    %p207 = scmp.eq.s32.totalorder %s22, 1
    %p208 = por %p206, %p207
    %p209 = scmp.ne.s32.totalorder %s200, %s201
    %p210 = scmp.eq.s32.totalorder %s22, 0
    %p211 = por %p209, %p210
    %p212 = scmp.ne.s32.totalorder %s200, %s201
    %p213 = scmp.eq.s32.totalorder %s23, 1
    %p214 = por %p212, %p213
    %p216 = scmp.ne.s32.totalorder %s201, %s215
    %p217 = scmp.eq.s32.totalorder %s23, 0
    %p218 = por %p216, %p217
    %s220 = sadd.s32 %s219, 1
    %p223 = scmp.eq.s32.totalorder %s17, 1
    %p224 = scmp.ne.s32.totalorder %s219, %s221
    %p225 = scmp.eq.s32.totalorder %s17, 0
    %p226 = por %p224, %p225
    %p227 = scmp.ne.s32.totalorder %s219, %s221
    %p228 = scmp.eq.s32.totalorder %s22, 1
    %p229 = por %p227, %p228
    %p230 = scmp.ne.s32.totalorder %s221, %s222
    %p231 = scmp.eq.s32.totalorder %s22, 0
    %p232 = por %p230, %p231
    %p233 = scmp.ne.s32.totalorder %s221, %s222
    %p234 = scmp.eq.s32.totalorder %s23, 1
    %p235 = por %p233, %p234
    %p237 = scmp.ne.s32.totalorder %s222, %s236
    %p238 = scmp.eq.s32.totalorder %s23, 0
    %p239 = por %p237, %p238
    %s241 = sadd.s32 %s240, 1
    %p244 = scmp.eq.s32.totalorder %s17, 1
    %p245 = scmp.ne.s32.totalorder %s240, %s242
    %p246 = scmp.eq.s32.totalorder %s17, 0
    %p247 = por %p245, %p246
    %p248 = scmp.ne.s32.totalorder %s240, %s242
    %p249 = scmp.eq.s32.totalorder %s22, 1
    %p250 = por %p248, %p249
    %p251 = scmp.ne.s32.totalorder %s242, %s243
    %p252 = scmp.eq.s32.totalorder %s22, 0
    %p253 = por %p251, %p252
    %p254 = scmp.ne.s32.totalorder %s242, %s243
    %p255 = scmp.eq.s32.totalorder %s23, 1
    %p256 = por %p254, %p255
    %p258 = scmp.ne.s32.totalorder %s243, %s257
    %p259 = scmp.eq.s32.totalorder %s23, 0
    %p260 = por %p258, %p259
    %s261 = ssub.s32 %s17, %s24
    %p262 = scmp.eq.s32.totalorder %s261, 0
    %s264 = sadd.s32 %s263, 1
    %s265 = scalar_select %p262, %s263, %s264
    %p268 = pneg %p262
    %p269 = scmp.eq.s32.totalorder %s17, 1
    %p270 = por %p268, %p269
    %p271 = scmp.ne.s32.totalorder %s263, %s266
    %p272 = scmp.eq.s32.totalorder %s17, 0
    %p273 = por %p271, %p272
    %p274 = scmp.ne.s32.totalorder %s263, %s266
    %p275 = scmp.eq.s32.totalorder %s22, 1
    %p276 = por %p274, %p275
    %p277 = scmp.ne.s32.totalorder %s266, %s267
    %p278 = scmp.eq.s32.totalorder %s22, 0
    %p279 = por %p277, %p278
    %p280 = scmp.ne.s32.totalorder %s266, %s267
    %p281 = scmp.eq.s32.totalorder %s23, 1
    %p282 = por %p280, %p281
    %p284 = scmp.ne.s32.totalorder %s267, %s283
    %p285 = scmp.eq.s32.totalorder %s23, 0
    %p286 = por %p284, %p285
    %p287 = scmp.le.s32.totalorder 1, %s17
    %p288 = scmp.lt.s32.totalorder %s17, 3
    %p289 = pnand %p287, %p288
    %p290 = pneg %p289
    // Predicated region
    $region9: #{encoder_forward.11} parent=5 // pred_check
      _
    $region10: #{encoder_forward.11} parent=5 // pred_check_branch
      %292 = sbr.rel (%p289) target = $region12
    $region11: #{encoder_forward.11} parent=5 // pred_region
      %s293 = ssub.s32 %s17, 1
      // Predicated region
      $region13: #{encoder_forward.11} parent=11 // pred_check
        %p294 = pneg %p64
      $region14: #{encoder_forward.11} parent=11 // pred_check_branch
        %296 = sbr.rel (%p294) target = $region16
      $region15: #{encoder_forward.11} parent=11 // pred_region
        _
      $region16: #{encoder_forward.11} parent=11 // pred_fallthru
        _
      // Predicated region
      $region17: #{encoder_forward.11} parent=11 // pred_check
        %p297 = pneg %p85
      $region18: #{encoder_forward.11} parent=11 // pred_check_branch
        %299 = sbr.rel (%p297) target = $region20
      $region19: #{encoder_forward.11} parent=11 // pred_region
        _
      $region20: #{encoder_forward.11} parent=11 // pred_fallthru
        _
      // Predicated region
      $region21: #{encoder_forward.11} parent=11 // pred_check
        %p300 = pneg %p106
      $region22: #{encoder_forward.11} parent=11 // pred_check_branch
        %302 = sbr.rel (%p300) target = $region24
      $region23: #{encoder_forward.11} parent=11 // pred_region
        _
      $region24: #{encoder_forward.11} parent=11 // pred_fallthru
        _
      // Predicated region
      $region25: #{encoder_forward.11} parent=11 // pred_check
        %p303 = pneg %p127
      $region26: #{encoder_forward.11} parent=11 // pred_check_branch
        %305 = sbr.rel (%p303) target = $region28
      $region27: #{encoder_forward.11} parent=11 // pred_region
        _
      $region28: #{encoder_forward.11} parent=11 // pred_fallthru
        _
      // Predicated region
      $region29: #{encoder_forward.11} parent=11 // pred_check
        %p306 = pneg %p148
      $region30: #{encoder_forward.11} parent=11 // pred_check_branch
        %308 = sbr.rel (%p306) target = $region32
      $region31: #{encoder_forward.11} parent=11 // pred_region
        _
      $region32: #{encoder_forward.11} parent=11 // pred_fallthru
        _
      // Predicated region
      $region33: #{encoder_forward.11} parent=11 // pred_check
        %p309 = pneg %p169
      $region34: #{encoder_forward.11} parent=11 // pred_check_branch
        %311 = sbr.rel (%p309) target = $region36
      $region35: #{encoder_forward.11} parent=11 // pred_region
        _
      $region36: #{encoder_forward.11} parent=11 // pred_fallthru
        _
      // Predicated region
      $region37: #{encoder_forward.11} parent=11 // pred_check
        %p312 = pneg %p190
      $region38: #{encoder_forward.11} parent=11 // pred_check_branch
        %314 = sbr.rel (%p312) target = $region40
      $region39: #{encoder_forward.11} parent=11 // pred_region
        _
      $region40: #{encoder_forward.11} parent=11 // pred_fallthru
        _
      // Predicated region
      $region41: #{encoder_forward.11} parent=11 // pred_check
        %p315 = pneg %p211
      $region42: #{encoder_forward.11} parent=11 // pred_check_branch
        %317 = sbr.rel (%p315) target = $region44
      $region43: #{encoder_forward.11} parent=11 // pred_region
        _
      $region44: #{encoder_forward.11} parent=11 // pred_fallthru
        _
      // Predicated region
      $region45: #{encoder_forward.11} parent=11 // pred_check
        %p318 = pneg %p232
      $region46: #{encoder_forward.11} parent=11 // pred_check_branch
        %320 = sbr.rel (%p318) target = $region48
      $region47: #{encoder_forward.11} parent=11 // pred_region
        _
      $region48: #{encoder_forward.11} parent=11 // pred_fallthru
        _
      // Predicated region
      $region49: #{encoder_forward.11} parent=11 // pred_check
        %p321 = pneg %p253
      $region50: #{encoder_forward.11} parent=11 // pred_check_branch
        %323 = sbr.rel (%p321) target = $region52
      $region51: #{encoder_forward.11} parent=11 // pred_region
        _
      $region52: #{encoder_forward.11} parent=11 // pred_fallthru
        _
    $region12: #{encoder_forward.11} parent=5 // pred_fallthru
      _
    %p324 = scmp.lt.s32.totalorder %s17, 2
    // Predicated region
    $region53: #{encoder_forward.11} parent=5 // pred_check
      %p325 = pneg %p324
    $region54: #{encoder_forward.11} parent=5 // pred_check_branch
      %327 = sbr.rel (%p325) target = $region56
    $region55: #{encoder_forward.11} parent=5 // pred_region
      // Predicated region
      $region57: #{encoder_forward.11} parent=55 // pred_check
        %p328 = pneg %p37
      $region58: #{encoder_forward.11} parent=55 // pred_check_branch
        %330 = sbr.rel (%p328) target = $region60
      $region59: #{encoder_forward.11} parent=55 // pred_region
        %p331 = scmp.lt.s32.totalorder %s17, 1
        %s332 = scalar_select %p331, %s17, 1
        %s333 = smul.addr %s332, 4
        %s334 = scalar_lea.vmem %s0, %s333
      $region60: #{encoder_forward.11} parent=55 // pred_fallthru
        _
    $region56: #{encoder_forward.11} parent=5 // pred_fallthru
      _
    %p335 = scmp.le.s32.totalorder 1, %s17
    %p336 = scmp.lt.s32.totalorder %s17, 3
    %p337 = pnand %p335, %p336
    %p338 = pneg %p337
    // Predicated region
    $region61: #{encoder_forward.11} parent=5 // pred_check
      _
    $region62: #{encoder_forward.11} parent=5 // pred_check_branch
      %340 = sbr.rel (%p337) target = $region64
    $region63: #{encoder_forward.11} parent=5 // pred_region
      %s341 = ssub.s32 %s17, 1
      %p342 = scmp.lt.s32.totalorder %s22, 1
      %s343 = scalar_select %p342, %s22, 1
      %s344 = smul.addr %s343, 4
      %s345 = scalar_lea.vmem %s0, %s344
      %p346 = pneg %p43
      %p347 = pneg %p40
      %p348 = pneg %p64
      %p349 = pneg %p61
      %p350 = pneg %p85
      %p351 = pneg %p82
      %p352 = pneg %p106
      %p353 = pneg %p103
      %p354 = pneg %p127
      %p355 = pneg %p124
      %p356 = pneg %p148
      %p357 = pneg %p145
      %p358 = pneg %p169
      %p359 = pneg %p166
      %p360 = pneg %p190
      %p361 = pneg %p187
      %p362 = pneg %p211
      %p363 = pneg %p208
      %p364 = pneg %p232
      %p365 = pneg %p229
      %p366 = pneg %p253
      %p367 = pneg %p250
      %p368 = pneg %p279
      %p369 = pneg %p276
      %p370 = scmp.lt.s32.totalorder %s22, 1
      %s371 = scalar_select %p370, %s22, 1
      %s372 = smul.addr %s371, 4
      %s373 = scalar_lea.vmem %s11, %s372
      %p374 = scmp.lt.s32.totalorder %s22, 1
      %s375 = scalar_select %p374, %s22, 1
      %s376 = smul.addr %s375, 4
      %s377 = scalar_lea.vmem %s0, %s376
      %p378 = scmp.lt.s32.totalorder %s22, 1
      %s379 = scalar_select %p378, %s22, 1
      %s380 = smul.addr %s379, 4
      %s381 = scalar_lea.vmem %s11, %s380
      %v383 = vld [vmem:[%s377] sm:$0xf]
      %v384 = vunpack.c.l.bf16 %v383
      %v385 = vld [vmem:[%s1] sm:$0x1]
      %v386 = vld [vmem:[%s2] sm:$0x1]
      %vm387 = vcmask 261120
      %v388 = vsel %vm387, %v384, 0.0
      %389 = vadd.xlane.f32.xlu0 %v388
      %v390 = vpop.xlane.xlu0 %389
      %v391 = vrcp.pop 32.0
      %v392 = vmul.f32 %v390, %v391
      %v393 = vsub.f32 %v384, %v392
      %v394 = vmul.f32 %v393, %v393
      %v395 = vsel %vm387, %v394, 0.0
      %396 = vadd.xlane.f32.xlu0 %v395
      %v397 = vpop.xlane.xlu0 %396
      %v398 = vmul.f32 %v397, %v391
      %v399 = vadd.f32 %v398, 1e-05
      %v400 = vrsqrt.pop %v399
      %v401 = vmul.f32 %v393, %v400
      %v403 = vlaneseq
      %v404 = vshrl.u32 %v403, 7
      %v405 = vsub.s32 0, %v404
      %v406 = vrot.slane %v385, %v405
      %v408 = vmul.f32 %v401, %v406
      %v410 = vlaneseq
      %v411 = vshrl.u32 %v410, 7
      %v412 = vsub.s32 0, %v411
      %v413 = vrot.slane %v386, %v412
      %v415 = vadd.f32 %v408, %v413
      %v416 = vpack.c.bf16 %v415, %v415
      %v417 = vld [vmem:[%s3] sm:$0xf]
      %v418 = vld [vmem:[%s3 + $0x4] sm:$0xf]
      %v419 = vld [vmem:[%s3 + $0x8] sm:$0xf]
      %v420 = vld [vmem:[%s3 + $0xc] sm:$0xf]
      %v421 = vld [vmem:[%s4] sm:$0x1]
      %v423 = vlaneseq
      %v424 = vshrl.u32 %v423, 7
      %v425 = vsub.s32 0, %v424
      %v426 = vrot.slane %v421, %v425
      %v432 = vunpack.c.l.b16 %v417
      %v433 = vunpack.c.l.b16 %v418
      %v434 = vunpack.c.l.b16 %v419
      %v435 = vunpack.c.l.b16 %v420
      %v436 = vpack.c.b16 %v433, %v432
      %v437 = vpack.c.b16 %v435, %v434
      %v441 = vsel %vm387, %v416, 0
      %443 = vmatprep.subr.bf16.mxu0 0
      %444 = vmatpush1.bf16.msra.mxu0 %v436
      %445 = vmatprep.subr.bf16.mxu0 0
      %446 = vmatpush1.bf16.msra.mxu0 %v437
      %447 = vmatprep.subr.bf16.mxu0 0
      %448 = vmatpush1.bf16.msra.mxu0 0
      %449 = vmatprep.subr.bf16.mxu0 0
      %450 = vmatpush1.bf16.msra.mxu0 0
      %451 = vmatprep.subr.bf16.mxu0 0
      %452 = vmatpush1.bf16.msra.mxu0 0
      %453 = vmatprep.subr.bf16.mxu0 0
      %454 = vmatpush1.bf16.msra.mxu0 0
      %455 = vmatprep.subr.bf16.mxu0 0
      %456 = vmatpush1.bf16.msra.mxu0 0
      %457 = vmatprep.subr.bf16.mxu0 0
      %458 = vmatpush1.bf16.msra.mxu0 0
      %459 = vmatprep.subr.bf16.mxu0 0
      %460 = vmatpush1.bf16.msra.mxu0 0
      %461 = vmatprep.subr.bf16.mxu0 0
      %462 = vmatpush1.bf16.msra.mxu0 0
      %463 = vmatprep.subr.bf16.mxu0 0
      %464 = vmatpush1.bf16.msra.mxu0 0
      %465 = vmatprep.subr.bf16.mxu0 0
      %466 = vmatpush1.bf16.msra.mxu0 0
      %467 = vmatprep.subr.bf16.mxu0 0
      %468 = vmatpush1.bf16.msra.mxu0 0
      %469 = vmatprep.subr.bf16.mxu0 0
      %470 = vmatpush1.bf16.msra.mxu0 0
      %471 = vmatprep.subr.bf16.mxu0 0
      %472 = vmatpush1.bf16.msra.mxu0 0
      %473 = vmatprep.subr.bf16.mxu0 0
      %474 = vmatpush1.bf16.msra.mxu0 0
      %475 = vmatprep.mubr.bf16.mxu0 0
      %476 = vmatmul.mubr.bf16.gmra.mrb[0].mxu0 %v441
      %v477 = vpop.f32.mrb[0].mxu0
      %v478 = vadd.f32 %v426, %v477
      %v479 = vpop.f32.mrb[0].mxu0
      %v480 = vpop.f32.mrb[0].mxu0
      %v481 = vpop.f32.mrb[0].mxu0
      %482 = vdwg.mxu0
      %v483 = vxor.u32 %v478, 2147483648
      %v484 = vmul.f32 %v483, 1.442695
      %v485 = vpow.pop %v484
      %v486 = vadd.f32 %v485, 1.0
      %v487 = vrcp.pop %v486
      %v488 = vmul.f32 1.0, %v487
      %490 = vrot.lane.b32.xlu0 %v488, 96
      %v491 = vpop.permute.xlu0 %490
      %v493 = vmul.f32 %v478, %v491
      %vm494 = vcmask 253952
      %495 = vst.msk [vmem:[#allocation2] sm:$0x1] %vm494, 0.0
      %496 = vst.msk [vmem:[#allocation2 + $0x9] sm:$0x1] %vm494, 0.0
      %497 = vst.msk [vmem:[#allocation2 + $0x1] sm:$0xff] %vm387, %v493
      %v498 = vld [vmem:[#allocation2] sm:$0xff]
      %v499 = vld [vmem:[#allocation2 + $0x8] sm:$0x3]
      %v500 = vld [vmem:[%s5] sm:$0x7]
      %v501 = vld [vmem:[%s6] sm:$0x1]
      %v503 = vlaneseq
      %v504 = vshrl.u32 %v503, 7
      %v505 = vsub.s32 0, %v504
      %v506 = vrot.slane %v501, %v505
      %v508 = vadd.f32 %v506, 0.0
      %v509 = vlaneseq
      %v510 = vshrl.u32 %v509, 7
      %v511 = vsub.s32 0, %v510
      %v512 = vrot.slane %v500, %v511
      %v513 = vmul.f32 %v498, %v512
      %v514 = vadd.f32 %v508, %v513
      %v515 = vlaneseq
      %v516 = vshrl.u32 %v515, 7
      %v517 = vsub.s32 1, %v516
      %v518 = vrot.slane %v500, %v517
      %v519 = vmul.f32 %v498, %v518
      %v520 = vmul.f32 %v499, %v518
      %vm523 = vcmask 1046528
      %v524 = vrot.slane %v519, 1
      %v525 = vrot.slane %v520, 1
      %v526 = vsel %vm523, %v524, %v525
      %v528 = vadd.f32 %v514, %v526
      %v529 = vlaneseq
      %v530 = vshrl.u32 %v529, 7
      %v531 = vsub.s32 2, %v530
      %v532 = vrot.slane %v500, %v531
      %v533 = vmul.f32 %v498, %v532
      %v534 = vmul.f32 %v499, %v532
      %vm537 = vcmask 1045504
      %v538 = vrot.slane %v533, 2
      %v539 = vrot.slane %v534, 2
      %v540 = vsel %vm537, %v538, %v539
      %v542 = vadd.f32 %v528, %v540
      %v543 = vld [vmem:[%s7] sm:$0x1]
      %v545 = vlaneseq
      %v546 = vshrl.u32 %v545, 7
      %v547 = vsub.s32 0, %v546
      %v548 = vrot.slane %v543, %v547
      %v550 = vmul.f32 %v542, %v548
      %v551 = vld [vmem:[%s8] sm:$0x1]
      %v553 = vlaneseq
      %v554 = vshrl.u32 %v553, 7
      %v555 = vsub.s32 0, %v554
      %v556 = vrot.slane %v551, %v555
      %v558 = vadd.f32 %v550, %v556
      %v559 = vxor.u32 %v558, 2147483648
      %v560 = vmul.f32 %v559, 1.442695
      %v561 = vpow.pop %v560
      %v562 = vadd.f32 %v561, 1.0
      %v563 = vrcp.pop %v562
      %v564 = vmul.f32 1.0, %v563
      %v565 = vmul.f32 %v558, %v564
      %v566 = vpack.c.bf16 %v565, %v565
      %v567 = vld [vmem:[%s9] sm:$0xf]
      %v568 = vld [vmem:[%s9 + $0x4] sm:$0xf]
      %v569 = vld [vmem:[%s9 + $0x8] sm:$0xf]
      %v570 = vld [vmem:[%s9 + $0xc] sm:$0xf]
      %v571 = vld [vmem:[%s10] sm:$0x1]
      %v573 = vlaneseq
      %v574 = vshrl.u32 %v573, 7
      %v575 = vsub.s32 0, %v574
      %v576 = vrot.slane %v571, %v575
      %v582 = vunpack.c.l.b16 %v567
      %v583 = vunpack.c.l.b16 %v568
      %v584 = vunpack.c.l.b16 %v569
      %v585 = vunpack.c.l.b16 %v570
      %v586 = vpack.c.b16 %v583, %v582
      %v587 = vpack.c.b16 %v585, %v584
      %v591 = vsel %vm387, %v566, 0
      %593 = vmatprep.subr.bf16.mxu0 0
      %594 = vmatpush1.bf16.msra.mxu0 %v586
      %595 = vmatprep.subr.bf16.mxu0 0
      %596 = vmatpush1.bf16.msra.mxu0 %v587
      %597 = vmatprep.subr.bf16.mxu0 0
      %598 = vmatpush1.bf16.msra.mxu0 0
      %599 = vmatprep.subr.bf16.mxu0 0
      %600 = vmatpush1.bf16.msra.mxu0 0
      %601 = vmatprep.subr.bf16.mxu0 0
      %602 = vmatpush1.bf16.msra.mxu0 0
      %603 = vmatprep.subr.bf16.mxu0 0
      %604 = vmatpush1.bf16.msra.mxu0 0
      %605 = vmatprep.subr.bf16.mxu0 0
      %606 = vmatpush1.bf16.msra.mxu0 0
      %607 = vmatprep.subr.bf16.mxu0 0
      %608 = vmatpush1.bf16.msra.mxu0 0
      %609 = vmatprep.subr.bf16.mxu0 0
      %610 = vmatpush1.bf16.msra.mxu0 0
      %611 = vmatprep.subr.bf16.mxu0 0
      %612 = vmatpush1.bf16.msra.mxu0 0
      %613 = vmatprep.subr.bf16.mxu0 0
      %614 = vmatpush1.bf16.msra.mxu0 0
      %615 = vmatprep.subr.bf16.mxu0 0
      %616 = vmatpush1.bf16.msra.mxu0 0
      %617 = vmatprep.subr.bf16.mxu0 0
      %618 = vmatpush1.bf16.msra.mxu0 0
      %619 = vmatprep.subr.bf16.mxu0 0
      %620 = vmatpush1.bf16.msra.mxu0 0
      %621 = vmatprep.subr.bf16.mxu0 0
      %622 = vmatpush1.bf16.msra.mxu0 0
      %623 = vmatprep.subr.bf16.mxu0 0
      %624 = vmatpush1.bf16.msra.mxu0 0
      %625 = vmatprep.mubr.bf16.mxu0 0
      %626 = vmatmul.mubr.bf16.gmra.mrb[0].mxu0 %v591
      %v627 = vpop.f32.mrb[0].mxu0
      %v628 = vadd.f32 %v576, %v627
      %v629 = vpop.f32.mrb[0].mxu0
      %v630 = vpop.f32.mrb[0].mxu0
      %v631 = vpop.f32.mrb[0].mxu0
      %632 = vdwg.mxu0
      %v633 = vadd.f32 %v384, %v628
      %v634 = vpack.c.bf16 %v633, %v633
      %vm635 = vcmask 257024
      %636 = vst.msk [vmem:[%s381] sm:$0xf] %vm635, %v634
      %p637 = scmp.lt.s32.totalorder %s22, 1
      %s638 = scalar_select %p637, %s22, 1
      %s639 = smul.addr %s638, 4
      %s640 = scalar_lea.vmem %s11, %s639
      // Predicated region
      $region65: #{encoder_forward.11} parent=63 // pred_check
        %p641 = pneg %p276
      $region66: #{encoder_forward.11} parent=63 // pred_check_branch
        %643 = sbr.rel (%p641) target = $region68
      $region67: #{encoder_forward.11} parent=63 // pred_region
        _
      $region68: #{encoder_forward.11} parent=63 // pred_fallthru
        _
    $region64: #{encoder_forward.11} parent=5 // pred_fallthru
      _
    %p644 = scmp.le.s32.totalorder 2, %s17
    // Predicated region
    $region69: #{encoder_forward.11} parent=5 // pred_check
      %p645 = pneg %p644
    $region70: #{encoder_forward.11} parent=5 // pred_check_branch
      %647 = sbr.rel (%p645) target = $region72
    $region71: #{encoder_forward.11} parent=5 // pred_region
      %s648 = ssub.s32 %s17, 2
      // Predicated region
      $region73: #{encoder_forward.11} parent=71 // pred_check
        %p649 = pneg %p282
      $region74: #{encoder_forward.11} parent=71 // pred_check_branch
        %651 = sbr.rel (%p649) target = $region76
      $region75: #{encoder_forward.11} parent=71 // pred_region
        %p652 = scmp.lt.s32.totalorder %s23, 1
        %s653 = scalar_select %p652, %s23, 1
        %s654 = smul.addr %s653, 4
        %s655 = scalar_lea.vmem %s11, %s654
      $region76: #{encoder_forward.11} parent=71 // pred_fallthru
        _
    $region72: #{encoder_forward.11} parent=5 // pred_fallthru
      _
  $region6: #{encoder_forward.11} parent=0 // loop_footer
    %s21 = sadd.s32 1, %s17
  $region7: #{encoder_forward.11} parent=0 // loop_footer_branch
    %16 = sbr.rel target = $region3
  $region8: #{encoder_forward.11} parent=0 // loop_exit
    _

// kernel: encoder_forward.13
$region0: #{encoder_forward.13}
  #allocation0 [shape = 'u32[]', space=smem, size = 0x4, offset = 0x4, fixed_abs, tag = 'smem constant byte address 0x4 - core index']
  #allocation1 [shape = 'u32[144,128]{1,0:T(1,128)}', space=vmem, size = 0x12000, scoped, tag = 'internal scratch']
  %s0 = inlined_call_operand.vmem [shape: bf16[16,32], index: 0, kind: input, shape index: {}]
  %s1 = inlined_call_operand.vmem [shape: f32[1,32], index: 1, kind: input, shape index: {}]
  %s2 = inlined_call_operand.vmem [shape: f32[1,32], index: 2, kind: input, shape index: {}]
  %s3 = inlined_call_operand.vmem [shape: bf16[32,64], index: 3, kind: input, shape index: {}]
  %s4 = inlined_call_operand.vmem [shape: f32[1,64], index: 4, kind: input, shape index: {}]
  %s5 = inlined_call_operand.vmem [shape: bf16[64,32], index: 5, kind: input, shape index: {}]
  %s6 = inlined_call_operand.vmem [shape: f32[1,32], index: 6, kind: input, shape index: {}]
  %s7 = inlined_call_operand.vmem [shape: f32[1,32], index: 7, kind: input, shape index: {}]
  %s8 = inlined_call_operand.vmem [shape: f32[1,32], index: 8, kind: input, shape index: {}]
  %s9 = inlined_call_operand.vmem [shape: bf16[16,32], index: 9, kind: output, shape index: {}]
  %s10 = sld [smem:[#allocation0]]
  $region46: #{encoder_forward.13} parent=0
    _
  %s12 = ssub.s32 1, %s10
  %s13 = scalar_select 0, %s12, %s10
  // Predicated region
  $region2: #{encoder_forward.13} parent=0 // pred_check
    _
  $region3: #{encoder_forward.13} parent=0 // pred_check_branch
    %15 = sbr.rel (0) target = $region5
  $region4: #{encoder_forward.13} parent=0 // pred_region
    _
  $region5: #{encoder_forward.13} parent=0 // pred_fallthru
    _
  // Predicated region
  $region6: #{encoder_forward.13} parent=0 // pred_check
    _
  $region7: #{encoder_forward.13} parent=0 // pred_check_branch
    %17 = sbr.rel (0) target = $region9
  $region8: #{encoder_forward.13} parent=0 // pred_region
    _
  $region9: #{encoder_forward.13} parent=0 // pred_fallthru
    _
  // Predicated region
  $region10: #{encoder_forward.13} parent=0 // pred_check
    _
  $region11: #{encoder_forward.13} parent=0 // pred_check_branch
    %19 = sbr.rel (0) target = $region13
  $region12: #{encoder_forward.13} parent=0 // pred_region
    _
  $region13: #{encoder_forward.13} parent=0 // pred_fallthru
    _
  // Predicated region
  $region14: #{encoder_forward.13} parent=0 // pred_check
    _
  $region15: #{encoder_forward.13} parent=0 // pred_check_branch
    %21 = sbr.rel (0) target = $region17
  $region16: #{encoder_forward.13} parent=0 // pred_region
    _
  $region17: #{encoder_forward.13} parent=0 // pred_fallthru
    _
  // Predicated region
  $region18: #{encoder_forward.13} parent=0 // pred_check
    _
  $region19: #{encoder_forward.13} parent=0 // pred_check_branch
    %23 = sbr.rel (0) target = $region21
  $region20: #{encoder_forward.13} parent=0 // pred_region
    _
  $region21: #{encoder_forward.13} parent=0 // pred_fallthru
    _
  // Predicated region
  $region22: #{encoder_forward.13} parent=0 // pred_check
    _
  $region23: #{encoder_forward.13} parent=0 // pred_check_branch
    %25 = sbr.rel (0) target = $region25
  $region24: #{encoder_forward.13} parent=0 // pred_region
    _
  $region25: #{encoder_forward.13} parent=0 // pred_fallthru
    _
  // Predicated region
  $region26: #{encoder_forward.13} parent=0 // pred_check
    _
  $region27: #{encoder_forward.13} parent=0 // pred_check_branch
    %27 = sbr.rel (0) target = $region29
  $region28: #{encoder_forward.13} parent=0 // pred_region
    _
  $region29: #{encoder_forward.13} parent=0 // pred_fallthru
    _
  // Predicated region
  $region30: #{encoder_forward.13} parent=0 // pred_check
    _
  $region31: #{encoder_forward.13} parent=0 // pred_check_branch
    %29 = sbr.rel (0) target = $region33
  $region32: #{encoder_forward.13} parent=0 // pred_region
    _
  $region33: #{encoder_forward.13} parent=0 // pred_fallthru
    _
  // Predicated region
  $region34: #{encoder_forward.13} parent=0 // pred_check
    _
  $region35: #{encoder_forward.13} parent=0 // pred_check_branch
    %31 = sbr.rel (0) target = $region37
  $region36: #{encoder_forward.13} parent=0 // pred_region
    _
  $region37: #{encoder_forward.13} parent=0 // pred_fallthru
    _
  %v33 = vld [vmem:[%s0] sm:$0xf]
  %v34 = vld [vmem:[%s0 + $0x4] sm:$0xf]
  %v35 = vld [vmem:[%s1] sm:$0x1]
  %v36 = vld [vmem:[%s2] sm:$0x1]
  %v37 = vld [vmem:[%s3] sm:$0xf]
  %v38 = vld [vmem:[%s3 + $0x4] sm:$0xf]
  %v39 = vld [vmem:[%s3 + $0x8] sm:$0xf]
  %v40 = vld [vmem:[%s3 + $0xc] sm:$0xf]
  %v41 = vld [vmem:[%s4] sm:$0x1]
  %v42 = vld [vmem:[%s5] sm:$0xf]
  %v43 = vld [vmem:[%s5 + $0x4] sm:$0xf]
  %v44 = vld [vmem:[%s5 + $0x8] sm:$0xf]
  %v45 = vld [vmem:[%s5 + $0xc] sm:$0xf]
  %v46 = vld [vmem:[%s5 + $0x10] sm:$0xf]
  %v47 = vld [vmem:[%s5 + $0x14] sm:$0xf]
  %v48 = vld [vmem:[%s5 + $0x18] sm:$0xf]
  %v49 = vld [vmem:[%s5 + $0x1c] sm:$0xf]
  %v50 = vld [vmem:[%s6] sm:$0x1]
  %v51 = vunpack.c.l.bf16 %v33
  %v52 = vunpack.c.l.bf16 %v34
  %vm53 = vcmask 261120
  %v54 = vsel %vm53, %v51, 0.0
  %55 = vadd.xlane.f32.xlu0 %v54
  %v56 = vpop.xlane.xlu0 %55
  %v57 = vsel %vm53, %v52, 0.0
  %58 = vadd.xlane.f32.xlu0 %v57
  %v59 = vpop.xlane.xlu0 %58
  %v60 = vrcp.pop 32.0
  %v61 = vmul.f32 %v56, %v60
  %v62 = vmul.f32 %v59, %v60
  %v63 = vsub.f32 %v51, %v61
  %v64 = vsub.f32 %v52, %v62
  %v65 = vmul.f32 %v63, %v63
  %v66 = vmul.f32 %v64, %v64
  %v67 = vsel %vm53, %v65, 0.0
  %68 = vadd.xlane.f32.xlu0 %v67
  %v69 = vpop.xlane.xlu0 %68
  %v70 = vsel %vm53, %v66, 0.0
  %71 = vadd.xlane.f32.xlu0 %v70
  %v72 = vpop.xlane.xlu0 %71
  %v73 = vmul.f32 %v69, %v60
  %v74 = vmul.f32 %v72, %v60
  %v75 = vadd.f32 %v73, 1e-05
  %v76 = vadd.f32 %v74, 1e-05
  %v77 = vrsqrt.pop %v75
  %v78 = vrsqrt.pop %v76
  %v79 = vmul.f32 %v63, %v77
  %v80 = vmul.f32 %v64, %v78
  %v82 = vlaneseq
  %v83 = vshrl.u32 %v82, 7
  %v84 = vsub.s32 0, %v83
  %v85 = vrot.slane %v35, %v84
  %v87 = vmul.f32 %v79, %v85
  %v88 = vmul.f32 %v80, %v85
  %v90 = vlaneseq
  %v91 = vshrl.u32 %v90, 7
  %v92 = vsub.s32 0, %v91
  %v93 = vrot.slane %v36, %v92
  %v95 = vadd.f32 %v87, %v93
  %v96 = vadd.f32 %v88, %v93
  %v97 = vpack.c.bf16 %v96, %v95
  %v99 = vlaneseq
  %v100 = vshrl.u32 %v99, 7
  %v101 = vsub.s32 0, %v100
  %v102 = vrot.slane %v41, %v101
  %v108 = vunpack.c.l.b16 %v37
  %v109 = vunpack.c.l.b16 %v38
  %v110 = vunpack.c.l.b16 %v39
  %v111 = vunpack.c.l.b16 %v40
  %v112 = vpack.c.b16 %v109, %v108
  %v113 = vpack.c.b16 %v111, %v110
  %v117 = vsel %vm53, %v97, 0
  %119 = vmatprep.subr.bf16.mxu0 0
  %120 = vmatpush1.bf16.msra.mxu0 %v112
  %121 = vmatprep.subr.bf16.mxu0 0
  %122 = vmatpush1.bf16.msra.mxu0 %v113
  %123 = vmatprep.subr.bf16.mxu0 0
  %124 = vmatpush1.bf16.msra.mxu0 0
  %125 = vmatprep.subr.bf16.mxu0 0
  %126 = vmatpush1.bf16.msra.mxu0 0
  %127 = vmatprep.subr.bf16.mxu0 0
  %128 = vmatpush1.bf16.msra.mxu0 0
  %129 = vmatprep.subr.bf16.mxu0 0
  %130 = vmatpush1.bf16.msra.mxu0 0
  %131 = vmatprep.subr.bf16.mxu0 0
  %132 = vmatpush1.bf16.msra.mxu0 0
  %133 = vmatprep.subr.bf16.mxu0 0
  %134 = vmatpush1.bf16.msra.mxu0 0
  %135 = vmatprep.subr.bf16.mxu0 0
  %136 = vmatpush1.bf16.msra.mxu0 0
  %137 = vmatprep.subr.bf16.mxu0 0
  %138 = vmatpush1.bf16.msra.mxu0 0
  %139 = vmatprep.subr.bf16.mxu0 0
  %140 = vmatpush1.bf16.msra.mxu0 0
  %141 = vmatprep.subr.bf16.mxu0 0
  %142 = vmatpush1.bf16.msra.mxu0 0
  %143 = vmatprep.subr.bf16.mxu0 0
  %144 = vmatpush1.bf16.msra.mxu0 0
  %145 = vmatprep.subr.bf16.mxu0 0
  %146 = vmatpush1.bf16.msra.mxu0 0
  %147 = vmatprep.subr.bf16.mxu0 0
  %148 = vmatpush1.bf16.msra.mxu0 0
  %149 = vmatprep.subr.bf16.mxu0 0
  %150 = vmatpush1.bf16.msra.mxu0 0
  %151 = vmatprep.mubr.bf16.mxu0 0
  %152 = vmatmul.mubr.bf16.gmra.mrb[0].mxu0 %v117
  %v153 = vpop.f32.mrb[0].mxu0
  %v154 = vadd.f32 %v102, %v153
  %v155 = vpop.f32.mrb[0].mxu0
  %v156 = vpop.f32.mrb[0].mxu0
  %v157 = vadd.f32 %v102, %v156
  %v158 = vpop.f32.mrb[0].mxu0
  %159 = vdwg.mxu0
  %v160 = vxor.u32 %v154, 2147483648
  %v161 = vxor.u32 %v157, 2147483648
  %v162 = vmul.f32 %v160, 1.442695
  %v163 = vpow.pop %v162
  %v164 = vmul.f32 %v161, 1.442695
  %v165 = vpow.pop %v164
  %v166 = vadd.f32 %v163, 1.0
  %v167 = vadd.f32 %v165, 1.0
  %v168 = vrcp.pop %v166
  %v169 = vmul.f32 1.0, %v168
  %v170 = vrcp.pop %v167
  %v171 = vmul.f32 1.0, %v170
  %v172 = vmul.f32 %v154, %v169
  %v173 = vmul.f32 %v157, %v171
  %v174 = vpack.c.bf16 %v173, %v172
  %v176 = vlaneseq
  %v177 = vshrl.u32 %v176, 7
  %v178 = vsub.s32 0, %v177
  %v179 = vrot.slane %v50, %v178
  %v189 = vunpack.c.l.b16 %v42
  %v190 = vunpack.c.l.b16 %v43
  %v191 = vunpack.c.l.b16 %v44
  %v192 = vunpack.c.l.b16 %v45
  %v193 = vunpack.c.l.b16 %v46
  %v194 = vunpack.c.l.b16 %v47
  %v195 = vunpack.c.l.b16 %v48
  %v196 = vunpack.c.l.b16 %v49
  %v197 = vpack.c.b16 %v190, %v189
  %v198 = vpack.c.b16 %v192, %v191
  %v199 = vpack.c.b16 %v194, %v193
  %v200 = vpack.c.b16 %v196, %v195
  %vm205 = vcmask 523264
  %v207 = vsel %vm205, %v174, 0
  %209 = vmatprep.subr.bf16.mxu0 0
  %210 = vmatpush1.bf16.msra.mxu0 %v197
  %211 = vmatprep.subr.bf16.mxu0 0
  %212 = vmatpush1.bf16.msra.mxu0 %v198
  %213 = vmatprep.subr.bf16.mxu0 0
  %214 = vmatpush1.bf16.msra.mxu0 %v199
  %215 = vmatprep.subr.bf16.mxu0 0
  %216 = vmatpush1.bf16.msra.mxu0 %v200
  %217 = vmatprep.subr.bf16.mxu0 0
  %218 = vmatpush1.bf16.msra.mxu0 0
  %219 = vmatprep.subr.bf16.mxu0 0
  %220 = vmatpush1.bf16.msra.mxu0 0
  %221 = vmatprep.subr.bf16.mxu0 0
  %222 = vmatpush1.bf16.msra.mxu0 0
  %223 = vmatprep.subr.bf16.mxu0 0
  %224 = vmatpush1.bf16.msra.mxu0 0
  %225 = vmatprep.subr.bf16.mxu0 0
  %226 = vmatpush1.bf16.msra.mxu0 0
  %227 = vmatprep.subr.bf16.mxu0 0
  %228 = vmatpush1.bf16.msra.mxu0 0
  %229 = vmatprep.subr.bf16.mxu0 0
  %230 = vmatpush1.bf16.msra.mxu0 0
  %231 = vmatprep.subr.bf16.mxu0 0
  %232 = vmatpush1.bf16.msra.mxu0 0
  %233 = vmatprep.subr.bf16.mxu0 0
  %234 = vmatpush1.bf16.msra.mxu0 0
  %235 = vmatprep.subr.bf16.mxu0 0
  %236 = vmatpush1.bf16.msra.mxu0 0
  %237 = vmatprep.subr.bf16.mxu0 0
  %238 = vmatpush1.bf16.msra.mxu0 0
  %239 = vmatprep.subr.bf16.mxu0 0
  %240 = vmatpush1.bf16.msra.mxu0 0
  %241 = vmatprep.mubr.bf16.mxu0 0
  %242 = vmatmul.mubr.bf16.gmra.mrb[0].mxu0 %v207
  %v243 = vpop.f32.mrb[0].mxu0
  %v244 = vadd.f32 %v179, %v243
  %v245 = vpop.f32.mrb[0].mxu0
  %v246 = vpop.f32.mrb[0].mxu0
  %v247 = vadd.f32 %v179, %v246
  %v248 = vpop.f32.mrb[0].mxu0
  %249 = vdwg.mxu0
  %v250 = vmul.f32 %v51, 0.5
  %v251 = vmul.f32 %v52, 0.5
  %v252 = vadd.f32 %v250, %v244
  %v253 = vadd.f32 %v251, %v247
  %v254 = vld [vmem:[%s7] sm:$0x1]
  %v255 = vld [vmem:[%s8] sm:$0x1]
  %v256 = vsel %vm53, %v252, 0.0
  %257 = vadd.xlane.f32.xlu0 %v256
  %v258 = vpop.xlane.xlu0 %257
  %v259 = vsel %vm53, %v253, 0.0
  %260 = vadd.xlane.f32.xlu0 %v259
  %v261 = vpop.xlane.xlu0 %260
  %v262 = vmul.f32 %v258, %v60
  %v263 = vmul.f32 %v261, %v60
  %v264 = vsub.f32 %v252, %v262
  %v265 = vsub.f32 %v253, %v263
  %v266 = vmul.f32 %v264, %v264
  %v267 = vmul.f32 %v265, %v265
  %v268 = vsel %vm53, %v266, 0.0
  %269 = vadd.xlane.f32.xlu0 %v268
  %v270 = vpop.xlane.xlu0 %269
  %v271 = vsel %vm53, %v267, 0.0
  %272 = vadd.xlane.f32.xlu0 %v271
  %v273 = vpop.xlane.xlu0 %272
  %v274 = vmul.f32 %v270, %v60
  %v275 = vmul.f32 %v273, %v60
  %v276 = vadd.f32 %v274, 1e-05
  %v277 = vadd.f32 %v275, 1e-05
  %v278 = vrsqrt.pop %v276
  %v279 = vrsqrt.pop %v277
  %v280 = vmul.f32 %v264, %v278
  %v281 = vmul.f32 %v265, %v279
  %v283 = vlaneseq
  %v284 = vshrl.u32 %v283, 7
  %v285 = vsub.s32 0, %v284
  %v286 = vrot.slane %v254, %v285
  %v288 = vmul.f32 %v280, %v286
  %v289 = vmul.f32 %v281, %v286
  %v291 = vlaneseq
  %v292 = vshrl.u32 %v291, 7
  %v293 = vsub.s32 0, %v292
  %v294 = vrot.slane %v255, %v293
  %v296 = vadd.f32 %v288, %v294
  %v297 = vadd.f32 %v289, %v294
  %v298 = vpack.c.bf16 %v297, %v296
  %v300 = vunpack.c.l.b16 %v298
  %v301 = vunpack.c.h.b16 %v298
  %v302 = vpack.c.b16 %v300, %v300
  %v303 = vpack.c.b16 %v301, %v301
  %vm306 = vcmask 257024
  %307 = vst.msk [vmem:[%s9] sm:$0xf] %vm306, %v302
  %308 = vst.msk [vmem:[%s9 + $0x4] sm:$0xf] %vm306, %v303
  // Predicated region
  $region38: #{encoder_forward.13} parent=0 // pred_check
    _
  $region39: #{encoder_forward.13} parent=0 // pred_check_branch
    %310 = sbr.rel (0) target = $region41
  $region40: #{encoder_forward.13} parent=0 // pred_region
    _
  $region41: #{encoder_forward.13} parent=0 // pred_fallthru
    _
  // Predicated region
  $region42: #{encoder_forward.13} parent=0 // pred_check
    _
  $region43: #{encoder_forward.13} parent=0 // pred_check_branch
    %312 = sbr.rel (0) target = $region45
  $region44: #{encoder_forward.13} parent=0 // pred_region
    _
  $region45: #{encoder_forward.13} parent=0 // pred_fallthru
    _

// kernel: encoder_forward.17
$region0: #{encoder_forward.17}
  #allocation0 [shape = 'u32[]', space=smem, size = 0x4, offset = 0x4, fixed_abs, tag = 'smem constant byte address 0x4 - core index']
  #allocation1 [shape = 'u32[144,128]{1,0:T(1,128)}', space=vmem, size = 0x12000, scoped, tag = 'internal scratch']
  %s0 = inlined_call_operand.vmem [shape: bf16[16,32], index: 0, kind: input, shape index: {}]
  %s1 = inlined_call_operand.vmem [shape: f32[1,32], index: 1, kind: input, shape index: {}]
  %s2 = inlined_call_operand.vmem [shape: f32[1,32], index: 2, kind: input, shape index: {}]
  %s3 = inlined_call_operand.vmem [shape: bf16[32,64], index: 3, kind: input, shape index: {}]
  %s4 = inlined_call_operand.vmem [shape: f32[1,64], index: 4, kind: input, shape index: {}]
  %s5 = inlined_call_operand.vmem [shape: bf16[64,32], index: 5, kind: input, shape index: {}]
  %s6 = inlined_call_operand.vmem [shape: f32[1,32], index: 6, kind: input, shape index: {}]
  %s7 = inlined_call_operand.vmem [shape: f32[1,32], index: 7, kind: input, shape index: {}]
  %s8 = inlined_call_operand.vmem [shape: f32[1,32], index: 8, kind: input, shape index: {}]
  %s9 = inlined_call_operand.hbm [shape: bf16[16,32], index: 9, kind: output, shape index: {}]
  %s10 = sld [smem:[#allocation0]]
  $region46: #{encoder_forward.17} parent=0
    _
  %s12 = ssub.s32 1, %s10
  %s13 = scalar_select 0, %s12, %s10
  $region1: #{encoder_forward.17} parent=0
    #allocation2 [shape = 'u8[4096]{0}', space=vmem, size = 0x1000, scoped, tag = 'output window, operand 0, single buffered']
    #allocation3 [shape = 's32[1]{0}', space=sflag, size = 0x4, scoped, tag = 'scoped memory for encoder_forward.17']
    %14 = vsyncpa [#allocation3], 0
    // Predicated region
    $region2: #{encoder_forward.17} parent=1 // pred_check
      _
    $region3: #{encoder_forward.17} parent=1 // pred_check_branch
      %16 = sbr.rel (0) target = $region5
    $region4: #{encoder_forward.17} parent=1 // pred_region
      _
    $region5: #{encoder_forward.17} parent=1 // pred_fallthru
      _
    // Predicated region
    $region6: #{encoder_forward.17} parent=1 // pred_check
      _
    $region7: #{encoder_forward.17} parent=1 // pred_check_branch
      %18 = sbr.rel (0) target = $region9
    $region8: #{encoder_forward.17} parent=1 // pred_region
      _
    $region9: #{encoder_forward.17} parent=1 // pred_fallthru
      _
    // Predicated region
    $region10: #{encoder_forward.17} parent=1 // pred_check
      _
    $region11: #{encoder_forward.17} parent=1 // pred_check_branch
      %20 = sbr.rel (0) target = $region13
    $region12: #{encoder_forward.17} parent=1 // pred_region
      _
    $region13: #{encoder_forward.17} parent=1 // pred_fallthru
      _
    // Predicated region
    $region14: #{encoder_forward.17} parent=1 // pred_check
      _
    $region15: #{encoder_forward.17} parent=1 // pred_check_branch
      %22 = sbr.rel (0) target = $region17
    $region16: #{encoder_forward.17} parent=1 // pred_region
      _
    $region17: #{encoder_forward.17} parent=1 // pred_fallthru
      _
    // Predicated region
    $region18: #{encoder_forward.17} parent=1 // pred_check
      _
    $region19: #{encoder_forward.17} parent=1 // pred_check_branch
      %24 = sbr.rel (0) target = $region21
    $region20: #{encoder_forward.17} parent=1 // pred_region
      _
    $region21: #{encoder_forward.17} parent=1 // pred_fallthru
      _
    // Predicated region
    $region22: #{encoder_forward.17} parent=1 // pred_check
      _
    $region23: #{encoder_forward.17} parent=1 // pred_check_branch
      %26 = sbr.rel (0) target = $region25
    $region24: #{encoder_forward.17} parent=1 // pred_region
      _
    $region25: #{encoder_forward.17} parent=1 // pred_fallthru
      _
    // Predicated region
    $region26: #{encoder_forward.17} parent=1 // pred_check
      _
    $region27: #{encoder_forward.17} parent=1 // pred_check_branch
      %28 = sbr.rel (0) target = $region29
    $region28: #{encoder_forward.17} parent=1 // pred_region
      _
    $region29: #{encoder_forward.17} parent=1 // pred_fallthru
      _
    // Predicated region
    $region30: #{encoder_forward.17} parent=1 // pred_check
      _
    $region31: #{encoder_forward.17} parent=1 // pred_check_branch
      %30 = sbr.rel (0) target = $region33
    $region32: #{encoder_forward.17} parent=1 // pred_region
      _
    $region33: #{encoder_forward.17} parent=1 // pred_fallthru
      _
    // Predicated region
    $region34: #{encoder_forward.17} parent=1 // pred_check
      _
    $region35: #{encoder_forward.17} parent=1 // pred_check_branch
      %32 = sbr.rel (0) target = $region37
    $region36: #{encoder_forward.17} parent=1 // pred_region
      _
    $region37: #{encoder_forward.17} parent=1 // pred_fallthru
      _
    %v34 = vld [vmem:[%s0] sm:$0xf]
    %v35 = vld [vmem:[%s0 + $0x4] sm:$0xf]
    %v36 = vld [vmem:[%s1] sm:$0x1]
    %v37 = vld [vmem:[%s2] sm:$0x1]
    %v38 = vld [vmem:[%s3] sm:$0xf]
    %v39 = vld [vmem:[%s3 + $0x4] sm:$0xf]
    %v40 = vld [vmem:[%s3 + $0x8] sm:$0xf]
    %v41 = vld [vmem:[%s3 + $0xc] sm:$0xf]
    %v42 = vld [vmem:[%s4] sm:$0x1]
    %v43 = vld [vmem:[%s5] sm:$0xf]
    %v44 = vld [vmem:[%s5 + $0x4] sm:$0xf]
    %v45 = vld [vmem:[%s5 + $0x8] sm:$0xf]
    %v46 = vld [vmem:[%s5 + $0xc] sm:$0xf]
    %v47 = vld [vmem:[%s5 + $0x10] sm:$0xf]
    %v48 = vld [vmem:[%s5 + $0x14] sm:$0xf]
    %v49 = vld [vmem:[%s5 + $0x18] sm:$0xf]
    %v50 = vld [vmem:[%s5 + $0x1c] sm:$0xf]
    %v51 = vld [vmem:[%s6] sm:$0x1]
    %v52 = vunpack.c.l.bf16 %v34
    %v53 = vunpack.c.l.bf16 %v35
    %vm54 = vcmask 261120
    %v55 = vsel %vm54, %v52, 0.0
    %56 = vadd.xlane.f32.xlu0 %v55
    %v57 = vpop.xlane.xlu0 %56
    %v58 = vsel %vm54, %v53, 0.0
    %59 = vadd.xlane.f32.xlu0 %v58
    %v60 = vpop.xlane.xlu0 %59
    %v61 = vrcp.pop 32.0
    %v62 = vmul.f32 %v57, %v61
    %v63 = vmul.f32 %v60, %v61
    %v64 = vsub.f32 %v52, %v62
    %v65 = vsub.f32 %v53, %v63
    %v66 = vmul.f32 %v64, %v64
    %v67 = vmul.f32 %v65, %v65
    %v68 = vsel %vm54, %v66, 0.0
    %69 = vadd.xlane.f32.xlu0 %v68
    %v70 = vpop.xlane.xlu0 %69
    %v71 = vsel %vm54, %v67, 0.0
    %72 = vadd.xlane.f32.xlu0 %v71
    %v73 = vpop.xlane.xlu0 %72
    %v74 = vmul.f32 %v70, %v61
    %v75 = vmul.f32 %v73, %v61
    %v76 = vadd.f32 %v74, 1e-05
    %v77 = vadd.f32 %v75, 1e-05
    %v78 = vrsqrt.pop %v76
    %v79 = vrsqrt.pop %v77
    %v80 = vmul.f32 %v64, %v78
    %v81 = vmul.f32 %v65, %v79
    %v83 = vlaneseq
    %v84 = vshrl.u32 %v83, 7
    %v85 = vsub.s32 0, %v84
    %v86 = vrot.slane %v36, %v85
    %v88 = vmul.f32 %v80, %v86
    %v89 = vmul.f32 %v81, %v86
    %v91 = vlaneseq
    %v92 = vshrl.u32 %v91, 7
    %v93 = vsub.s32 0, %v92
    %v94 = vrot.slane %v37, %v93
    %v96 = vadd.f32 %v88, %v94
    %v97 = vadd.f32 %v89, %v94
    %v98 = vpack.c.bf16 %v97, %v96
    %v100 = vlaneseq
    %v101 = vshrl.u32 %v100, 7
    %v102 = vsub.s32 0, %v101
    %v103 = vrot.slane %v42, %v102
    %v109 = vunpack.c.l.b16 %v38
    %v110 = vunpack.c.l.b16 %v39
    %v111 = vunpack.c.l.b16 %v40
    %v112 = vunpack.c.l.b16 %v41
    %v113 = vpack.c.b16 %v110, %v109
    %v114 = vpack.c.b16 %v112, %v111
    %v118 = vsel %vm54, %v98, 0
    %120 = vmatprep.subr.bf16.mxu0 0
    %121 = vmatpush1.bf16.msra.mxu0 %v113
    %122 = vmatprep.subr.bf16.mxu0 0
    %123 = vmatpush1.bf16.msra.mxu0 %v114
    %124 = vmatprep.subr.bf16.mxu0 0
    %125 = vmatpush1.bf16.msra.mxu0 0
    %126 = vmatprep.subr.bf16.mxu0 0
    %127 = vmatpush1.bf16.msra.mxu0 0
    %128 = vmatprep.subr.bf16.mxu0 0
    %129 = vmatpush1.bf16.msra.mxu0 0
    %130 = vmatprep.subr.bf16.mxu0 0
    %131 = vmatpush1.bf16.msra.mxu0 0
    %132 = vmatprep.subr.bf16.mxu0 0
    %133 = vmatpush1.bf16.msra.mxu0 0
    %134 = vmatprep.subr.bf16.mxu0 0
    %135 = vmatpush1.bf16.msra.mxu0 0
    %136 = vmatprep.subr.bf16.mxu0 0
    %137 = vmatpush1.bf16.msra.mxu0 0
    %138 = vmatprep.subr.bf16.mxu0 0
    %139 = vmatpush1.bf16.msra.mxu0 0
    %140 = vmatprep.subr.bf16.mxu0 0
    %141 = vmatpush1.bf16.msra.mxu0 0
    %142 = vmatprep.subr.bf16.mxu0 0
    %143 = vmatpush1.bf16.msra.mxu0 0
    %144 = vmatprep.subr.bf16.mxu0 0
    %145 = vmatpush1.bf16.msra.mxu0 0
    %146 = vmatprep.subr.bf16.mxu0 0
    %147 = vmatpush1.bf16.msra.mxu0 0
    %148 = vmatprep.subr.bf16.mxu0 0
    %149 = vmatpush1.bf16.msra.mxu0 0
    %150 = vmatprep.subr.bf16.mxu0 0
    %151 = vmatpush1.bf16.msra.mxu0 0
    %152 = vmatprep.mubr.bf16.mxu0 0
    %153 = vmatmul.mubr.bf16.gmra.mrb[0].mxu0 %v118
    %v154 = vpop.f32.mrb[0].mxu0
    %v155 = vadd.f32 %v103, %v154
    %v156 = vpop.f32.mrb[0].mxu0
    %v157 = vpop.f32.mrb[0].mxu0
    %v158 = vadd.f32 %v103, %v157
    %v159 = vpop.f32.mrb[0].mxu0
    %160 = vdwg.mxu0
    %v161 = vxor.u32 %v155, 2147483648
    %v162 = vxor.u32 %v158, 2147483648
    %v163 = vmul.f32 %v161, 1.442695
    %v164 = vpow.pop %v163
    %v165 = vmul.f32 %v162, 1.442695
    %v166 = vpow.pop %v165
    %v167 = vadd.f32 %v164, 1.0
    %v168 = vadd.f32 %v166, 1.0
    %v169 = vrcp.pop %v167
    %v170 = vmul.f32 1.0, %v169
    %v171 = vrcp.pop %v168
    %v172 = vmul.f32 1.0, %v171
    %v173 = vmul.f32 %v155, %v170
    %v174 = vmul.f32 %v158, %v172
    %v175 = vpack.c.bf16 %v174, %v173
    %v177 = vlaneseq
    %v178 = vshrl.u32 %v177, 7
    %v179 = vsub.s32 0, %v178
    %v180 = vrot.slane %v51, %v179
    %v190 = vunpack.c.l.b16 %v43
    %v191 = vunpack.c.l.b16 %v44
    %v192 = vunpack.c.l.b16 %v45
    %v193 = vunpack.c.l.b16 %v46
    %v194 = vunpack.c.l.b16 %v47
    %v195 = vunpack.c.l.b16 %v48
    %v196 = vunpack.c.l.b16 %v49
    %v197 = vunpack.c.l.b16 %v50
    %v198 = vpack.c.b16 %v191, %v190
    %v199 = vpack.c.b16 %v193, %v192
    %v200 = vpack.c.b16 %v195, %v194
    %v201 = vpack.c.b16 %v197, %v196
    %vm206 = vcmask 523264
    %v208 = vsel %vm206, %v175, 0
    %210 = vmatprep.subr.bf16.mxu0 0
    %211 = vmatpush1.bf16.msra.mxu0 %v198
    %212 = vmatprep.subr.bf16.mxu0 0
    %213 = vmatpush1.bf16.msra.mxu0 %v199
    %214 = vmatprep.subr.bf16.mxu0 0
    %215 = vmatpush1.bf16.msra.mxu0 %v200
    %216 = vmatprep.subr.bf16.mxu0 0
    %217 = vmatpush1.bf16.msra.mxu0 %v201
    %218 = vmatprep.subr.bf16.mxu0 0
    %219 = vmatpush1.bf16.msra.mxu0 0
    %220 = vmatprep.subr.bf16.mxu0 0
    %221 = vmatpush1.bf16.msra.mxu0 0
    %222 = vmatprep.subr.bf16.mxu0 0
    %223 = vmatpush1.bf16.msra.mxu0 0
    %224 = vmatprep.subr.bf16.mxu0 0
    %225 = vmatpush1.bf16.msra.mxu0 0
    %226 = vmatprep.subr.bf16.mxu0 0
    %227 = vmatpush1.bf16.msra.mxu0 0
    %228 = vmatprep.subr.bf16.mxu0 0
    %229 = vmatpush1.bf16.msra.mxu0 0
    %230 = vmatprep.subr.bf16.mxu0 0
    %231 = vmatpush1.bf16.msra.mxu0 0
    %232 = vmatprep.subr.bf16.mxu0 0
    %233 = vmatpush1.bf16.msra.mxu0 0
    %234 = vmatprep.subr.bf16.mxu0 0
    %235 = vmatpush1.bf16.msra.mxu0 0
    %236 = vmatprep.subr.bf16.mxu0 0
    %237 = vmatpush1.bf16.msra.mxu0 0
    %238 = vmatprep.subr.bf16.mxu0 0
    %239 = vmatpush1.bf16.msra.mxu0 0
    %240 = vmatprep.subr.bf16.mxu0 0
    %241 = vmatpush1.bf16.msra.mxu0 0
    %242 = vmatprep.mubr.bf16.mxu0 0
    %243 = vmatmul.mubr.bf16.gmra.mrb[0].mxu0 %v208
    %v244 = vpop.f32.mrb[0].mxu0
    %v245 = vadd.f32 %v180, %v244
    %v246 = vpop.f32.mrb[0].mxu0
    %v247 = vpop.f32.mrb[0].mxu0
    %v248 = vadd.f32 %v180, %v247
    %v249 = vpop.f32.mrb[0].mxu0
    %250 = vdwg.mxu0
    %v251 = vmul.f32 %v52, 0.5
    %v252 = vmul.f32 %v53, 0.5
    %v253 = vadd.f32 %v251, %v245
    %v254 = vadd.f32 %v252, %v248
    %v255 = vld [vmem:[%s7] sm:$0x1]
    %v256 = vld [vmem:[%s8] sm:$0x1]
    %v257 = vsel %vm54, %v253, 0.0
    %258 = vadd.xlane.f32.xlu0 %v257
    %v259 = vpop.xlane.xlu0 %258
    %v260 = vsel %vm54, %v254, 0.0
    %261 = vadd.xlane.f32.xlu0 %v260
    %v262 = vpop.xlane.xlu0 %261
    %v263 = vmul.f32 %v259, %v61
    %v264 = vmul.f32 %v262, %v61
    %v265 = vsub.f32 %v253, %v263
    %v266 = vsub.f32 %v254, %v264
    %v267 = vmul.f32 %v265, %v265
    %v268 = vmul.f32 %v266, %v266
    %v269 = vsel %vm54, %v267, 0.0
    %270 = vadd.xlane.f32.xlu0 %v269
    %v271 = vpop.xlane.xlu0 %270
    %v272 = vsel %vm54, %v268, 0.0
    %273 = vadd.xlane.f32.xlu0 %v272
    %v274 = vpop.xlane.xlu0 %273
    %v275 = vmul.f32 %v271, %v61
    %v276 = vmul.f32 %v274, %v61
    %v277 = vadd.f32 %v275, 1e-05
    %v278 = vadd.f32 %v276, 1e-05
    %v279 = vrsqrt.pop %v277
    %v280 = vrsqrt.pop %v278
    %v281 = vmul.f32 %v265, %v279
    %v282 = vmul.f32 %v266, %v280
    %v284 = vlaneseq
    %v285 = vshrl.u32 %v284, 7
    %v286 = vsub.s32 0, %v285
    %v287 = vrot.slane %v255, %v286
    %v289 = vmul.f32 %v281, %v287
    %v290 = vmul.f32 %v282, %v287
    %v292 = vlaneseq
    %v293 = vshrl.u32 %v292, 7
    %v294 = vsub.s32 0, %v293
    %v295 = vrot.slane %v256, %v294
    %v297 = vadd.f32 %v289, %v295
    %v298 = vadd.f32 %v290, %v295
    %v299 = vpack.c.bf16 %v298, %v297
    %v301 = vunpack.c.l.b16 %v299
    %v302 = vunpack.c.h.b16 %v299
    %v303 = vpack.c.b16 %v301, %v301
    %v304 = vpack.c.b16 %v302, %v302
    %vm307 = vcmask 257024
    %308 = vst.msk [vmem:[#allocation2] sm:$0xf] %vm307, %v303
    %309 = vst.msk [vmem:[#allocation2 + $0x4] sm:$0xf] %vm307, %v304
    // Predicated region
    $region38: #{encoder_forward.17} parent=1 // pred_check
      _
    $region39: #{encoder_forward.17} parent=1 // pred_check_branch
      %311 = sbr.rel (0) target = $region41
    $region40: #{encoder_forward.17} parent=1 // pred_region
      %s313 = ssub.s32 128, 128
      %314 = vsyncadd [#allocation3], %s313
      %s315 = sshll.u32 [#allocation2], 4
      %s316 = int_to_ptr.vmem [resolvable:$true] %s315
      %321 = dma.vmem_to_hbm [thread:$0]  %s316, 128, %s9, [#allocation3], 64, 64, 4
    $region41: #{encoder_forward.17} parent=1 // pred_fallthru
      _
    // Predicated region
    $region42: #{encoder_forward.17} parent=1 // pred_check
      _
    $region43: #{encoder_forward.17} parent=1 // pred_check_branch
      %323 = sbr.rel (0) target = $region45
    $region44: #{encoder_forward.17} parent=1 // pred_region
      %324 = dma.done [#allocation3], 128
    $region45: #{encoder_forward.17} parent=1 // pred_fallthru
      _
    %325 = vsyncpa [#allocation3], 1

// kernel: encoder_forward.12
$region0: #{encoder_forward.12}
  #allocation0 [shape = 'u32[]', space=smem, size = 0x4, offset = 0x4, fixed_abs, tag = 'smem constant byte address 0x4 - core index']
  #allocation1 [shape = 'u32[144,128]{1,0:T(1,128)}', space=vmem, size = 0x12000, scoped, tag = 'internal scratch']
  #allocation2 [shape = 'bf16[8,32]{1,0:T(8,128)(2,1)}', space=vmem, size = 0x800, scoped, tag = 'scratch operand']
  %s0 = inlined_call_operand.vmem [shape: bf16[2,8,32], index: 0, kind: input, shape index: {}]
  %s1 = inlined_call_operand.vmem [shape: f32[1,32], index: 1, kind: input, shape index: {}]
  %s2 = inlined_call_operand.vmem [shape: f32[1,32], index: 2, kind: input, shape index: {}]
  %s3 = inlined_call_operand.vmem [shape: bf16[32,96], index: 3, kind: input, shape index: {}]
  %s4 = inlined_call_operand.vmem [shape: f32[1,96], index: 4, kind: input, shape index: {}]
  %s5 = inlined_call_operand.vmem [shape: f32[1,32], index: 5, kind: input, shape index: {}]
  %s6 = inlined_call_operand.vmem [shape: f32[1,32], index: 6, kind: input, shape index: {}]
  %s7 = inlined_call_operand.vmem [shape: bf16[9,32], index: 7, kind: input, shape index: {}]
  %s8 = inlined_call_operand.vmem [shape: f32[2,1,8], index: 8, kind: input, shape index: {}]
  %s9 = inlined_call_operand.vmem [shape: bf16[32,32], index: 9, kind: input, shape index: {}]
  %s10 = inlined_call_operand.vmem [shape: f32[1,32], index: 10, kind: input, shape index: {}]
  %s11 = inlined_call_operand.vmem [shape: bf16[2,8,32], index: 11, kind: output, shape index: {}]
  %s12 = sld [smem:[#allocation0]]
  $region77: #{encoder_forward.12} parent=0
    _
  %s14 = ssub.s32 1, %s12
  %s15 = scalar_select 0, %s14, %s12
  loop: start=0, step=1, limit=4
  $region2: #{encoder_forward.12} parent=0 // loop_pre_header
    _
  $region3: #{encoder_forward.12} parent=0 // loop_header
    %s17 = sphi 0, %s21
    %p18 = scmp.ge.s32.totalorder %s17, 4
    %s27 = sphi 0, %s29
    %s30 = sphi 0, %s27
    %s31 = sphi 0, %s30
    %s47 = sphi 0, %s31
    %s51 = sphi 0, %s51
    %s53 = sphi 0, %s51
    %s54 = sphi 0, %s53
    %s68 = sphi 0, %s54
    %s72 = sphi 0, %s72
    %s74 = sphi 0, %s72
    %s75 = sphi 0, %s74
    %s89 = sphi 0, %s75
    %s93 = sphi 0, %s93
    %s95 = sphi 0, %s93
    %s96 = sphi 0, %s95
    %s110 = sphi 0, %s96
    %s114 = sphi 0, %s114
    %s116 = sphi 0, %s114
    %s117 = sphi 0, %s116
    %s131 = sphi 0, %s117
    %s135 = sphi 0, %s135
    %s137 = sphi 0, %s135
    %s138 = sphi 0, %s137
    %s152 = sphi 0, %s138
    %s156 = sphi 0, %s156
    %s158 = sphi 0, %s156
    %s159 = sphi 0, %s158
    %s173 = sphi 0, %s159
    %s177 = sphi 0, %s177
    %s179 = sphi 0, %s177
    %s180 = sphi 0, %s179
    %s194 = sphi 0, %s180
    %s200 = sphi 0, %s202
    %s203 = sphi 0, %s200
    %s204 = sphi 0, %s203
    %s220 = sphi 0, %s204
    %s224 = sphi 0, %s224
    %s226 = sphi 0, %s224
    %s227 = sphi 0, %s226
    %s241 = sphi 0, %s227
    %s245 = sphi 0, %s245
    %s247 = sphi 0, %s245
    %s248 = sphi 0, %s247
    %s262 = sphi 0, %s248
    %s268 = sphi 0, %s270
    %s271 = sphi 0, %s268
    %s272 = sphi 0, %s271
    %s288 = sphi 0, %s272
  $region4: #{encoder_forward.12} parent=0 // loop_header_branch
    %20 = sbr.rel (%p18) target = $region8
  $region5: #{encoder_forward.12} parent=0 // loop_body
    %s22 = ssub.s32 %s17, 1
    %s23 = ssub.s32 %s17, 2
    %s24 = sadd.s32 %s17, 1
    %s25 = ssub.s32 %s17, %s24
    %p26 = scmp.eq.s32.totalorder %s25, 0
    %s28 = sadd.s32 %s27, 1
    %s29 = scalar_select %p26, %s27, %s28
    %p32 = pneg %p26
    %p33 = scmp.eq.s32.totalorder %s17, 1
    %p34 = por %p32, %p33
    %p35 = scmp.ne.s32.totalorder %s27, %s30
    %p36 = scmp.eq.s32.totalorder %s17, 0
    %p37 = por %p35, %p36
    %p38 = scmp.ne.s32.totalorder %s27, %s30
    %p39 = scmp.eq.s32.totalorder %s22, 1
    %p40 = por %p38, %p39
    %p41 = scmp.ne.s32.totalorder %s30, %s31
    %p42 = scmp.eq.s32.totalorder %s22, 0
    %p43 = por %p41, %p42
    %p44 = scmp.ne.s32.totalorder %s30, %s31
    %p45 = scmp.eq.s32.totalorder %s23, 1
    %p46 = por %p44, %p45
    %p48 = scmp.ne.s32.totalorder %s31, %s47
    %p49 = scmp.eq.s32.totalorder %s23, 0
    %p50 = por %p48, %p49
    %s52 = sadd.s32 %s51, 1
    %p55 = scmp.eq.s32.totalorder %s17, 1
    %p56 = scmp.ne.s32.totalorder %s51, %s53
    %p57 = scmp.eq.s32.totalorder %s17, 0
    %p58 = por %p56, %p57
    %p59 = scmp.ne.s32.totalorder %s51, %s53
    %p60 = scmp.eq.s32.totalorder %s22, 1
    %p61 = por %p59, %p60
    %p62 = scmp.ne.s32.totalorder %s53, %s54
    %p63 = scmp.eq.s32.totalorder %s22, 0
    %p64 = por %p62, %p63
    %p65 = scmp.ne.s32.totalorder %s53, %s54
    %p66 = scmp.eq.s32.totalorder %s23, 1
    %p67 = por %p65, %p66
    %p69 = scmp.ne.s32.totalorder %s54, %s68
    %p70 = scmp.eq.s32.totalorder %s23, 0
    %p71 = por %p69, %p70
    %s73 = sadd.s32 %s72, 1
    %p76 = scmp.eq.s32.totalorder %s17, 1
    %p77 = scmp.ne.s32.totalorder %s72, %s74
    %p78 = scmp.eq.s32.totalorder %s17, 0
    %p79 = por %p77, %p78
    %p80 = scmp.ne.s32.totalorder %s72, %s74
    %p81 = scmp.eq.s32.totalorder %s22, 1
    %p82 = por %p80, %p81
    %p83 = scmp.ne.s32.totalorder %s74, %s75
    %p84 = scmp.eq.s32.totalorder %s22, 0
    %p85 = por %p83, %p84
    %p86 = scmp.ne.s32.totalorder %s74, %s75
    %p87 = scmp.eq.s32.totalorder %s23, 1
    %p88 = por %p86, %p87
    %p90 = scmp.ne.s32.totalorder %s75, %s89
    %p91 = scmp.eq.s32.totalorder %s23, 0
    %p92 = por %p90, %p91
    %s94 = sadd.s32 %s93, 1
    %p97 = scmp.eq.s32.totalorder %s17, 1
    %p98 = scmp.ne.s32.totalorder %s93, %s95
    %p99 = scmp.eq.s32.totalorder %s17, 0
    %p100 = por %p98, %p99
    %p101 = scmp.ne.s32.totalorder %s93, %s95
    %p102 = scmp.eq.s32.totalorder %s22, 1
    %p103 = por %p101, %p102
    %p104 = scmp.ne.s32.totalorder %s95, %s96
    %p105 = scmp.eq.s32.totalorder %s22, 0
    %p106 = por %p104, %p105
    %p107 = scmp.ne.s32.totalorder %s95, %s96
    %p108 = scmp.eq.s32.totalorder %s23, 1
    %p109 = por %p107, %p108
    %p111 = scmp.ne.s32.totalorder %s96, %s110
    %p112 = scmp.eq.s32.totalorder %s23, 0
    %p113 = por %p111, %p112
    %s115 = sadd.s32 %s114, 1
    %p118 = scmp.eq.s32.totalorder %s17, 1
    %p119 = scmp.ne.s32.totalorder %s114, %s116
    %p120 = scmp.eq.s32.totalorder %s17, 0
    %p121 = por %p119, %p120
    %p122 = scmp.ne.s32.totalorder %s114, %s116
    %p123 = scmp.eq.s32.totalorder %s22, 1
    %p124 = por %p122, %p123
    %p125 = scmp.ne.s32.totalorder %s116, %s117
    %p126 = scmp.eq.s32.totalorder %s22, 0
    %p127 = por %p125, %p126
    %p128 = scmp.ne.s32.totalorder %s116, %s117
    %p129 = scmp.eq.s32.totalorder %s23, 1
    %p130 = por %p128, %p129
    %p132 = scmp.ne.s32.totalorder %s117, %s131
    %p133 = scmp.eq.s32.totalorder %s23, 0
    %p134 = por %p132, %p133
    %s136 = sadd.s32 %s135, 1
    %p139 = scmp.eq.s32.totalorder %s17, 1
    %p140 = scmp.ne.s32.totalorder %s135, %s137
    %p141 = scmp.eq.s32.totalorder %s17, 0
    %p142 = por %p140, %p141
    %p143 = scmp.ne.s32.totalorder %s135, %s137
    %p144 = scmp.eq.s32.totalorder %s22, 1
    %p145 = por %p143, %p144
    %p146 = scmp.ne.s32.totalorder %s137, %s138
    %p147 = scmp.eq.s32.totalorder %s22, 0
    %p148 = por %p146, %p147
    %p149 = scmp.ne.s32.totalorder %s137, %s138
    %p150 = scmp.eq.s32.totalorder %s23, 1
    %p151 = por %p149, %p150
    %p153 = scmp.ne.s32.totalorder %s138, %s152
    %p154 = scmp.eq.s32.totalorder %s23, 0
    %p155 = por %p153, %p154
    %s157 = sadd.s32 %s156, 1
    %p160 = scmp.eq.s32.totalorder %s17, 1
    %p161 = scmp.ne.s32.totalorder %s156, %s158
    %p162 = scmp.eq.s32.totalorder %s17, 0
    %p163 = por %p161, %p162
    %p164 = scmp.ne.s32.totalorder %s156, %s158
    %p165 = scmp.eq.s32.totalorder %s22, 1
    %p166 = por %p164, %p165
    %p167 = scmp.ne.s32.totalorder %s158, %s159
    %p168 = scmp.eq.s32.totalorder %s22, 0
    %p169 = por %p167, %p168
    %p170 = scmp.ne.s32.totalorder %s158, %s159
    %p171 = scmp.eq.s32.totalorder %s23, 1
    %p172 = por %p170, %p171
    %p174 = scmp.ne.s32.totalorder %s159, %s173
    %p175 = scmp.eq.s32.totalorder %s23, 0
    %p176 = por %p174, %p175
    %s178 = sadd.s32 %s177, 1
    %p181 = scmp.eq.s32.totalorder %s17, 1
    %p182 = scmp.ne.s32.totalorder %s177, %s179
    %p183 = scmp.eq.s32.totalorder %s17, 0
    %p184 = por %p182, %p183
    %p185 = scmp.ne.s32.totalorder %s177, %s179
    %p186 = scmp.eq.s32.totalorder %s22, 1
    %p187 = por %p185, %p186
    %p188 = scmp.ne.s32.totalorder %s179, %s180
    %p189 = scmp.eq.s32.totalorder %s22, 0
    %p190 = por %p188, %p189
    %p191 = scmp.ne.s32.totalorder %s179, %s180
    %p192 = scmp.eq.s32.totalorder %s23, 1
    %p193 = por %p191, %p192
    %p195 = scmp.ne.s32.totalorder %s180, %s194
    %p196 = scmp.eq.s32.totalorder %s23, 0
    %p197 = por %p195, %p196
    %s198 = ssub.s32 %s17, %s24
    %p199 = scmp.eq.s32.totalorder %s198, 0
    %s201 = sadd.s32 %s200, 1
    %s202 = scalar_select %p199, %s200, %s201
    %p205 = pneg %p199
    %p206 = scmp.eq.s32.totalorder %s17, 1
    %p207 = por %p205, %p206
    %p208 = scmp.ne.s32.totalorder %s200, %s203
    %p209 = scmp.eq.s32.totalorder %s17, 0
    %p210 = por %p208, %p209
    %p211 = scmp.ne.s32.totalorder %s200, %s203
    %p212 = scmp.eq.s32.totalorder %s22, 1
    %p213 = por %p211, %p212
    %p214 = scmp.ne.s32.totalorder %s203, %s204
    %p215 = scmp.eq.s32.totalorder %s22, 0
    %p216 = por %p214, %p215
    %p217 = scmp.ne.s32.totalorder %s203, %s204
    %p218 = scmp.eq.s32.totalorder %s23, 1
    %p219 = por %p217, %p218
    %p221 = scmp.ne.s32.totalorder %s204, %s220
    %p222 = scmp.eq.s32.totalorder %s23, 0
    %p223 = por %p221, %p222
    %s225 = sadd.s32 %s224, 1
    %p228 = scmp.eq.s32.totalorder %s17, 1
    %p229 = scmp.ne.s32.totalorder %s224, %s226
    %p230 = scmp.eq.s32.totalorder %s17, 0
    %p231 = por %p229, %p230
    %p232 = scmp.ne.s32.totalorder %s224, %s226
    %p233 = scmp.eq.s32.totalorder %s22, 1
    %p234 = por %p232, %p233
    %p235 = scmp.ne.s32.totalorder %s226, %s227
    %p236 = scmp.eq.s32.totalorder %s22, 0
    %p237 = por %p235, %p236
    %p238 = scmp.ne.s32.totalorder %s226, %s227
    %p239 = scmp.eq.s32.totalorder %s23, 1
    %p240 = por %p238, %p239
    %p242 = scmp.ne.s32.totalorder %s227, %s241
    %p243 = scmp.eq.s32.totalorder %s23, 0
    %p244 = por %p242, %p243
    %s246 = sadd.s32 %s245, 1
    %p249 = scmp.eq.s32.totalorder %s17, 1
    %p250 = scmp.ne.s32.totalorder %s245, %s247
    %p251 = scmp.eq.s32.totalorder %s17, 0
    %p252 = por %p250, %p251
    %p253 = scmp.ne.s32.totalorder %s245, %s247
    %p254 = scmp.eq.s32.totalorder %s22, 1
    %p255 = por %p253, %p254
    %p256 = scmp.ne.s32.totalorder %s247, %s248
    %p257 = scmp.eq.s32.totalorder %s22, 0
    %p258 = por %p256, %p257
    %p259 = scmp.ne.s32.totalorder %s247, %s248
    %p260 = scmp.eq.s32.totalorder %s23, 1
    %p261 = por %p259, %p260
    %p263 = scmp.ne.s32.totalorder %s248, %s262
    %p264 = scmp.eq.s32.totalorder %s23, 0
    %p265 = por %p263, %p264
    %s266 = ssub.s32 %s17, %s24
    %p267 = scmp.eq.s32.totalorder %s266, 0
    %s269 = sadd.s32 %s268, 1
    %s270 = scalar_select %p267, %s268, %s269
    %p273 = pneg %p267
    %p274 = scmp.eq.s32.totalorder %s17, 1
    %p275 = por %p273, %p274
    %p276 = scmp.ne.s32.totalorder %s268, %s271
    %p277 = scmp.eq.s32.totalorder %s17, 0
    %p278 = por %p276, %p277
    %p279 = scmp.ne.s32.totalorder %s268, %s271
    %p280 = scmp.eq.s32.totalorder %s22, 1
    %p281 = por %p279, %p280
    %p282 = scmp.ne.s32.totalorder %s271, %s272
    %p283 = scmp.eq.s32.totalorder %s22, 0
    %p284 = por %p282, %p283
    %p285 = scmp.ne.s32.totalorder %s271, %s272
    %p286 = scmp.eq.s32.totalorder %s23, 1
    %p287 = por %p285, %p286
    %p289 = scmp.ne.s32.totalorder %s272, %s288
    %p290 = scmp.eq.s32.totalorder %s23, 0
    %p291 = por %p289, %p290
    %p292 = scmp.le.s32.totalorder 1, %s17
    %p293 = scmp.lt.s32.totalorder %s17, 3
    %p294 = pnand %p292, %p293
    %p295 = pneg %p294
    // Predicated region
    $region9: #{encoder_forward.12} parent=5 // pred_check
      _
    $region10: #{encoder_forward.12} parent=5 // pred_check_branch
      %297 = sbr.rel (%p294) target = $region12
    $region11: #{encoder_forward.12} parent=5 // pred_region
      %s298 = ssub.s32 %s17, 1
      // Predicated region
      $region13: #{encoder_forward.12} parent=11 // pred_check
        %p299 = pneg %p64
      $region14: #{encoder_forward.12} parent=11 // pred_check_branch
        %301 = sbr.rel (%p299) target = $region16
      $region15: #{encoder_forward.12} parent=11 // pred_region
        _
      $region16: #{encoder_forward.12} parent=11 // pred_fallthru
        _
      // Predicated region
      $region17: #{encoder_forward.12} parent=11 // pred_check
        %p302 = pneg %p85
      $region18: #{encoder_forward.12} parent=11 // pred_check_branch
        %304 = sbr.rel (%p302) target = $region20
      $region19: #{encoder_forward.12} parent=11 // pred_region
        _
      $region20: #{encoder_forward.12} parent=11 // pred_fallthru
        _
      // Predicated region
      $region21: #{encoder_forward.12} parent=11 // pred_check
        %p305 = pneg %p106
      $region22: #{encoder_forward.12} parent=11 // pred_check_branch
        %307 = sbr.rel (%p305) target = $region24
      $region23: #{encoder_forward.12} parent=11 // pred_region
        _
      $region24: #{encoder_forward.12} parent=11 // pred_fallthru
        _
      // Predicated region
      $region25: #{encoder_forward.12} parent=11 // pred_check
        %p308 = pneg %p127
      $region26: #{encoder_forward.12} parent=11 // pred_check_branch
        %310 = sbr.rel (%p308) target = $region28
      $region27: #{encoder_forward.12} parent=11 // pred_region
        _
      $region28: #{encoder_forward.12} parent=11 // pred_fallthru
        _
      // Predicated region
      $region29: #{encoder_forward.12} parent=11 // pred_check
        %p311 = pneg %p148
      $region30: #{encoder_forward.12} parent=11 // pred_check_branch
        %313 = sbr.rel (%p311) target = $region32
      $region31: #{encoder_forward.12} parent=11 // pred_region
        _
      $region32: #{encoder_forward.12} parent=11 // pred_fallthru
        _
      // Predicated region
      $region33: #{encoder_forward.12} parent=11 // pred_check
        %p314 = pneg %p169
      $region34: #{encoder_forward.12} parent=11 // pred_check_branch
        %316 = sbr.rel (%p314) target = $region36
      $region35: #{encoder_forward.12} parent=11 // pred_region
        _
      $region36: #{encoder_forward.12} parent=11 // pred_fallthru
        _
      // Predicated region
      $region37: #{encoder_forward.12} parent=11 // pred_check
        %p317 = pneg %p190
      $region38: #{encoder_forward.12} parent=11 // pred_check_branch
        %319 = sbr.rel (%p317) target = $region40
      $region39: #{encoder_forward.12} parent=11 // pred_region
        _
      $region40: #{encoder_forward.12} parent=11 // pred_fallthru
        _
      // Predicated region
      $region41: #{encoder_forward.12} parent=11 // pred_check
        %p320 = pneg %p237
      $region42: #{encoder_forward.12} parent=11 // pred_check_branch
        %322 = sbr.rel (%p320) target = $region44
      $region43: #{encoder_forward.12} parent=11 // pred_region
        _
      $region44: #{encoder_forward.12} parent=11 // pred_fallthru
        _
      // Predicated region
      $region45: #{encoder_forward.12} parent=11 // pred_check
        %p323 = pneg %p258
      $region46: #{encoder_forward.12} parent=11 // pred_check_branch
        %325 = sbr.rel (%p323) target = $region48
      $region47: #{encoder_forward.12} parent=11 // pred_region
        _
      $region48: #{encoder_forward.12} parent=11 // pred_fallthru
        _
    $region12: #{encoder_forward.12} parent=5 // pred_fallthru
      _
    %p326 = scmp.lt.s32.totalorder %s17, 2
    // Predicated region
    $region49: #{encoder_forward.12} parent=5 // pred_check
      %p327 = pneg %p326
    $region50: #{encoder_forward.12} parent=5 // pred_check_branch
      %329 = sbr.rel (%p327) target = $region52
    $region51: #{encoder_forward.12} parent=5 // pred_region
      // Predicated region
      $region53: #{encoder_forward.12} parent=51 // pred_check
        %p330 = pneg %p37
      $region54: #{encoder_forward.12} parent=51 // pred_check_branch
        %332 = sbr.rel (%p330) target = $region56
      $region55: #{encoder_forward.12} parent=51 // pred_region
        %p333 = scmp.lt.s32.totalorder %s17, 1
        %s334 = scalar_select %p333, %s17, 1
        %s335 = smul.addr %s334, 4
        %s336 = scalar_lea.vmem %s0, %s335
      $region56: #{encoder_forward.12} parent=51 // pred_fallthru
        _
      // Predicated region
      $region57: #{encoder_forward.12} parent=51 // pred_check
        %p337 = pneg %p210
      $region58: #{encoder_forward.12} parent=51 // pred_check_branch
        %339 = sbr.rel (%p337) target = $region60
      $region59: #{encoder_forward.12} parent=51 // pred_region
        %p340 = scmp.lt.s32.totalorder %s17, 1
        %s341 = scalar_select %p340, %s17, 1
        %s342 = scalar_lea.vmem %s8, %s341
      $region60: #{encoder_forward.12} parent=51 // pred_fallthru
        _
    $region52: #{encoder_forward.12} parent=5 // pred_fallthru
      _
    %p343 = scmp.le.s32.totalorder 1, %s17
    %p344 = scmp.lt.s32.totalorder %s17, 3
    %p345 = pnand %p343, %p344
    %p346 = pneg %p345
    // Predicated region
    $region61: #{encoder_forward.12} parent=5 // pred_check
      _
    $region62: #{encoder_forward.12} parent=5 // pred_check_branch
      %348 = sbr.rel (%p345) target = $region64
    $region63: #{encoder_forward.12} parent=5 // pred_region
      %s349 = ssub.s32 %s17, 1
      %p350 = scmp.lt.s32.totalorder %s22, 1
      %s351 = scalar_select %p350, %s22, 1
      %s352 = smul.addr %s351, 4
      %s353 = scalar_lea.vmem %s0, %s352
      %p354 = pneg %p43
      %p355 = pneg %p40
      %p356 = pneg %p64
      %p357 = pneg %p61
      %p358 = pneg %p85
      %p359 = pneg %p82
      %p360 = pneg %p106
      %p361 = pneg %p103
      %p362 = pneg %p127
      %p363 = pneg %p124
      %p364 = pneg %p148
      %p365 = pneg %p145
      %p366 = pneg %p169
      %p367 = pneg %p166
      %p368 = pneg %p190
      %p369 = pneg %p187
      %p370 = scmp.lt.s32.totalorder %s22, 1
      %s371 = scalar_select %p370, %s22, 1
      %s372 = scalar_lea.vmem %s8, %s371
      %p373 = pneg %p216
      %p374 = pneg %p213
      %p375 = pneg %p237
      %p376 = pneg %p234
      %p377 = pneg %p258
      %p378 = pneg %p255
      %p379 = pneg %p284
      %p380 = pneg %p281
      %p381 = scmp.lt.s32.totalorder %s22, 1
      %s382 = scalar_select %p381, %s22, 1
      %s383 = smul.addr %s382, 4
      %s384 = scalar_lea.vmem %s11, %s383
      %p385 = scmp.lt.s32.totalorder %s22, 1
      %s386 = scalar_select %p385, %s22, 1
      %s387 = smul.addr %s386, 4
      %s388 = scalar_lea.vmem %s0, %s387
      %p389 = scmp.lt.s32.totalorder %s22, 1
      %s390 = scalar_select %p389, %s22, 1
      %s391 = scalar_lea.vmem %s8, %s390
      %p392 = scmp.lt.s32.totalorder %s22, 1
      %s393 = scalar_select %p392, %s22, 1
      %s394 = smul.addr %s393, 4
      %s395 = scalar_lea.vmem %s11, %s394
      %v397 = vld [vmem:[%s388] sm:$0xf]
      %v398 = vunpack.c.l.bf16 %v397
      %v399 = vld [vmem:[%s1] sm:$0x1]
      %v400 = vld [vmem:[%s2] sm:$0x1]
      %vm401 = vcmask 261120
      %v402 = vsel %vm401, %v398, 0.0
      %403 = vadd.xlane.f32.xlu0 %v402
      %v404 = vpop.xlane.xlu0 %403
      %v405 = vrcp.pop 32.0
      %v406 = vmul.f32 %v404, %v405
      %v407 = vsub.f32 %v398, %v406
      %v408 = vmul.f32 %v407, %v407
      %v409 = vsel %vm401, %v408, 0.0
      %410 = vadd.xlane.f32.xlu0 %v409
      %v411 = vpop.xlane.xlu0 %410
      %v412 = vmul.f32 %v411, %v405
      %v413 = vadd.f32 %v412, 1e-05
      %v414 = vrsqrt.pop %v413
      %v415 = vmul.f32 %v407, %v414
      %v417 = vlaneseq
      %v418 = vshrl.u32 %v417, 7
      %v419 = vsub.s32 0, %v418
      %v420 = vrot.slane %v399, %v419
      %v422 = vmul.f32 %v415, %v420
      %v424 = vlaneseq
      %v425 = vshrl.u32 %v424, 7
      %v426 = vsub.s32 0, %v425
      %v427 = vrot.slane %v400, %v426
      %v429 = vadd.f32 %v422, %v427
      %v430 = vpack.c.bf16 %v429, %v429
      %v431 = vld [vmem:[%s3] sm:$0xf]
      %v432 = vld [vmem:[%s3 + $0x4] sm:$0xf]
      %v433 = vld [vmem:[%s3 + $0x8] sm:$0xf]
      %v434 = vld [vmem:[%s3 + $0xc] sm:$0xf]
      %v435 = vld [vmem:[%s4] sm:$0x1]
      %v437 = vlaneseq
      %v438 = vshrl.u32 %v437, 7
      %v439 = vsub.s32 0, %v438
      %v440 = vrot.slane %v435, %v439
      %v446 = vunpack.c.l.b16 %v431
      %v447 = vunpack.c.l.b16 %v432
      %v448 = vunpack.c.l.b16 %v433
      %v449 = vunpack.c.l.b16 %v434
      %v450 = vpack.c.b16 %v447, %v446
      %v451 = vpack.c.b16 %v449, %v448
      %v455 = vsel %vm401, %v430, 0
      %457 = vmatprep.subr.bf16.mxu0 0
      %458 = vmatpush1.bf16.msra.mxu0 %v450
      %459 = vmatprep.subr.bf16.mxu0 0
      %460 = vmatpush1.bf16.msra.mxu0 %v451
      %461 = vmatprep.subr.bf16.mxu0 0
      %462 = vmatpush1.bf16.msra.mxu0 0
      %463 = vmatprep.subr.bf16.mxu0 0
      %464 = vmatpush1.bf16.msra.mxu0 0
      %465 = vmatprep.subr.bf16.mxu0 0
      %466 = vmatpush1.bf16.msra.mxu0 0
      %467 = vmatprep.subr.bf16.mxu0 0
      %468 = vmatpush1.bf16.msra.mxu0 0
      %469 = vmatprep.subr.bf16.mxu0 0
      %470 = vmatpush1.bf16.msra.mxu0 0
      %471 = vmatprep.subr.bf16.mxu0 0
      %472 = vmatpush1.bf16.msra.mxu0 0
      %473 = vmatprep.subr.bf16.mxu0 0
      %474 = vmatpush1.bf16.msra.mxu0 0
      %475 = vmatprep.subr.bf16.mxu0 0
      %476 = vmatpush1.bf16.msra.mxu0 0
      %477 = vmatprep.subr.bf16.mxu0 0
      %478 = vmatpush1.bf16.msra.mxu0 0
      %479 = vmatprep.subr.bf16.mxu0 0
      %480 = vmatpush1.bf16.msra.mxu0 0
      %481 = vmatprep.subr.bf16.mxu0 0
      %482 = vmatpush1.bf16.msra.mxu0 0
      %483 = vmatprep.subr.bf16.mxu0 0
      %484 = vmatpush1.bf16.msra.mxu0 0
      %485 = vmatprep.subr.bf16.mxu0 0
      %486 = vmatpush1.bf16.msra.mxu0 0
      %487 = vmatprep.subr.bf16.mxu0 0
      %488 = vmatpush1.bf16.msra.mxu0 0
      %489 = vmatprep.mubr.bf16.mxu0 0
      %490 = vmatmul.mubr.bf16.gmra.mrb[0].mxu0 %v455
      %v491 = vpop.f32.mrb[0].mxu0
      %v492 = vadd.f32 %v440, %v491
      %v493 = vpop.f32.mrb[0].mxu0
      %v494 = vpop.f32.mrb[0].mxu0
      %v495 = vpop.f32.mrb[0].mxu0
      %496 = vdwg.mxu0
      %v497 = vpack.c.bf16 %v492, %v492
      %v498 = vld [vmem:[%s5] sm:$0x1]
      %v500 = vlaneseq
      %v501 = vshrl.u32 %v500, 7
      %v502 = vsub.s32 0, %v501
      %v503 = vrot.slane %v498, %v502
      %v505 = vadd.f32 %v492, %v503
      %v506 = vmul.f32 %v505, 0.35355338
      %v507 = vpack.c.bf16 %v506, %v506
      %v508 = vld [vmem:[%s6] sm:$0x1]
      %v510 = vlaneseq
      %v511 = vshrl.u32 %v510, 7
      %v512 = vsub.s32 0, %v511
      %v513 = vrot.slane %v508, %v512
      %v515 = vadd.f32 %v492, %v513
      %v516 = vmul.f32 %v515, 0.35355338
      %v517 = vpack.c.bf16 %v516, %v516
      %v518 = vld [vmem:[%s7] sm:$0xf]
      %v519 = vld [vmem:[%s7 + $0x4] sm:$0x1]
      %v520 = vld [vmem:[%s391] sm:$0x1]
      %v521 = vlaneseq
      %v522 = vshrl.u32 %v521, 7
      %v523 = vlaneseq
      %v524 = vand.u32 %v523, 127
      %v525 = vsub.s32 %v524, %v522
      %vm526 = vcmp.gt.s32.totalorder %v525, 4294967292
      %v527 = vsel %vm526, %v525, 4294967292
      %vm528 = vcmp.lt.s32.totalorder %v527, 4
      %v529 = vsel %vm528, %v527, 4
      %v530 = vadd.s32 %v529, 4
      %v533 = vunpack.c.l.b16 %v518
      %v534 = vunpack.c.l.b16 %v519
      %v535 = vpack.c.b16 %v534, %v533
      %vm536 = vcmask 64512
      %v538 = vsel %vm536, %v517, 0
      %v541 = vsel %vm536, %v535, 0
      %543 = vmatprep.subr.bf16.mxu0 0
      %544 = vmatpush1.bf16.xpose.msra.mxu0 %v541
      %545 = vmatprep.subr.bf16.mxu0 0
      %546 = vmatpush1.bf16.xpose.msra.mxu0 0
      %547 = vmatprep.subr.bf16.mxu0 0
      %548 = vmatpush1.bf16.xpose.msra.mxu0 0
      %549 = vmatprep.subr.bf16.mxu0 0
      %550 = vmatpush1.bf16.xpose.msra.mxu0 0
      %551 = vmatprep.subr.bf16.mxu0 0
      %552 = vmatpush1.bf16.xpose.msra.mxu0 0
      %553 = vmatprep.subr.bf16.mxu0 0
      %554 = vmatpush1.bf16.xpose.msra.mxu0 0
      %555 = vmatprep.subr.bf16.mxu0 0
      %556 = vmatpush1.bf16.xpose.msra.mxu0 0
      %557 = vmatprep.subr.bf16.mxu0 0
      %558 = vmatpush1.bf16.xpose.msra.mxu0 0
      %559 = vmatprep.subr.bf16.mxu0 0
      %560 = vmatpush1.bf16.xpose.msra.mxu0 0
      %561 = vmatprep.subr.bf16.mxu0 0
      %562 = vmatpush1.bf16.xpose.msra.mxu0 0
      %563 = vmatprep.subr.bf16.mxu0 0
      %564 = vmatpush1.bf16.xpose.msra.mxu0 0
      %565 = vmatprep.subr.bf16.mxu0 0
      %566 = vmatpush1.bf16.xpose.msra.mxu0 0
      %567 = vmatprep.subr.bf16.mxu0 0
      %568 = vmatpush1.bf16.xpose.msra.mxu0 0
      %569 = vmatprep.subr.bf16.mxu0 0
      %570 = vmatpush1.bf16.xpose.msra.mxu0 0
      %571 = vmatprep.subr.bf16.mxu0 0
      %572 = vmatpush1.bf16.xpose.msra.mxu0 0
      %573 = vmatprep.subr.bf16.mxu0 0
      %574 = vmatpush1.bf16.xpose.msra.mxu0 0
      %575 = vmatprep.mubr.bf16.mxu0 0
      %576 = vmatmul.mubr.bf16.gmra.mrb[0].mxu0 %v538
      %v577 = vpop.f32.mrb[0].mxu0
      %v578 = vadd.f32 0.0, %v577
      %v579 = vpop.f32.mrb[0].mxu0
      %v580 = vpop.f32.mrb[0].mxu0
      %v581 = vpop.f32.mrb[0].mxu0
      %582 = vdwg.mxu0
      %vm583 = vcmp.eq.s32.totalorder %v530, 0
      %585 = vset.pattern.permute.xlu0 0
      %586 = vperm.xlu0 %585, %v578
      %v587 = vpop.permute.xlu0 %586
      %v589 = vsel %vm583, %v587, 0.0
      %v590 = vadd.f32 %v589, 0.0
      %vm591 = vcmp.eq.s32.totalorder %v530, 1
      %592 = vset.pattern.permute.xlu0 1
      %593 = vperm.xlu0 %592, %v578
      %v594 = vpop.permute.xlu0 %593
      %v596 = vsel %vm591, %v594, 0.0
      %v597 = vadd.f32 %v590, %v596
      %vm598 = vcmp.eq.s32.totalorder %v530, 2
      %599 = vset.pattern.permute.xlu0 2
      %600 = vperm.xlu0 %599, %v578
      %v601 = vpop.permute.xlu0 %600
      %v603 = vsel %vm598, %v601, 0.0
      %v604 = vadd.f32 %v597, %v603
      %vm605 = vcmp.eq.s32.totalorder %v530, 3
      %606 = vset.pattern.permute.xlu0 3
      %607 = vperm.xlu0 %606, %v578
      %v608 = vpop.permute.xlu0 %607
      %v610 = vsel %vm605, %v608, 0.0
      %v611 = vadd.f32 %v604, %v610
      %vm612 = vcmp.eq.s32.totalorder %v530, 4
      %613 = vset.pattern.permute.xlu0 4
      %614 = vperm.xlu0 %613, %v578
      %v615 = vpop.permute.xlu0 %614
      %v617 = vsel %vm612, %v615, 0.0
      %v618 = vadd.f32 %v611, %v617
      %vm619 = vcmp.eq.s32.totalorder %v530, 5
      %620 = vset.pattern.permute.xlu0 5
      %621 = vperm.xlu0 %620, %v578
      %v622 = vpop.permute.xlu0 %621
      %v624 = vsel %vm619, %v622, 0.0
      %v625 = vadd.f32 %v618, %v624
      %vm626 = vcmp.eq.s32.totalorder %v530, 6
      %627 = vset.pattern.permute.xlu0 6
      %628 = vperm.xlu0 %627, %v578
      %v629 = vpop.permute.xlu0 %628
      %v631 = vsel %vm626, %v629, 0.0
      %v632 = vadd.f32 %v625, %v631
      %vm633 = vcmp.eq.s32.totalorder %v530, 7
      %634 = vset.pattern.permute.xlu0 7
      %635 = vperm.xlu0 %634, %v578
      %v636 = vpop.permute.xlu0 %635
      %v638 = vsel %vm633, %v636, 0.0
      %v639 = vadd.f32 %v632, %v638
      %vm640 = vcmp.eq.s32.totalorder %v530, 8
      %641 = vset.pattern.permute.xlu0 8
      %642 = vperm.xlu0 %641, %v578
      %v643 = vpop.permute.xlu0 %642
      %v645 = vsel %vm640, %v643, 0.0
      %v646 = vadd.f32 %v639, %v645
      %648 = vrot.lane.b32.xlu0 %v497, 96
      %v649 = vpop.permute.xlu0 %648
      %v651 = vsel %vm536, %v507, 0
      %v654 = vsel %vm536, %v649, 0
      %656 = vmatprep.subr.bf16.mxu0 0
      %657 = vmatpush1.bf16.xpose.msra.mxu0 %v654
      %658 = vmatprep.subr.bf16.mxu0 0
      %659 = vmatpush1.bf16.xpose.msra.mxu0 0
      %660 = vmatprep.subr.bf16.mxu0 0
      %661 = vmatpush1.bf16.xpose.msra.mxu0 0
      %662 = vmatprep.subr.bf16.mxu0 0
      %663 = vmatpush1.bf16.xpose.msra.mxu0 0
      %664 = vmatprep.subr.bf16.mxu0 0
      %665 = vmatpush1.bf16.xpose.msra.mxu0 0
      %666 = vmatprep.subr.bf16.mxu0 0
      %667 = vmatpush1.bf16.xpose.msra.mxu0 0
      %668 = vmatprep.subr.bf16.mxu0 0
      %669 = vmatpush1.bf16.xpose.msra.mxu0 0
      %670 = vmatprep.subr.bf16.mxu0 0
      %671 = vmatpush1.bf16.xpose.msra.mxu0 0
      %672 = vmatprep.subr.bf16.mxu0 0
      %673 = vmatpush1.bf16.xpose.msra.mxu0 0
      %674 = vmatprep.subr.bf16.mxu0 0
      %675 = vmatpush1.bf16.xpose.msra.mxu0 0
      %676 = vmatprep.subr.bf16.mxu0 0
      %677 = vmatpush1.bf16.xpose.msra.mxu0 0
      %678 = vmatprep.subr.bf16.mxu0 0
      %679 = vmatpush1.bf16.xpose.msra.mxu0 0
      %680 = vmatprep.subr.bf16.mxu0 0
      %681 = vmatpush1.bf16.xpose.msra.mxu0 0
      %682 = vmatprep.subr.bf16.mxu0 0
      %683 = vmatpush1.bf16.xpose.msra.mxu0 0
      %684 = vmatprep.subr.bf16.mxu0 0
      %685 = vmatpush1.bf16.xpose.msra.mxu0 0
      %686 = vmatprep.subr.bf16.mxu0 0
      %687 = vmatpush1.bf16.xpose.msra.mxu0 0
      %688 = vmatprep.mubr.bf16.mxu0 0
      %689 = vmatmul.mubr.bf16.gmra.mrb[0].mxu0 %v651
      %v690 = vpop.f32.mrb[0].mxu0
      %v691 = vadd.f32 %v646, %v690
      %v692 = vpop.f32.mrb[0].mxu0
      %v693 = vpop.f32.mrb[0].mxu0
      %v694 = vpop.f32.mrb[0].mxu0
      %695 = vdwg.mxu0
      %v697 = vlaneseq
      %v698 = vshrl.u32 %v697, 7
      %v699 = vsub.s32 0, %v698
      %v700 = vrot.slane %v520, %v699
      %v702 = vadd.f32 %v691, %v700
      %v703 = vsel %vm536, %v702, -inf
      %704 = vmax.xlane.f32.xlu0 %v703
      %v705 = vpop.xlane.xlu0 %704
      %v706 = vsub.f32 %v702, %v705
      %v707 = vmul.f32 %v706, 1.442695
      %v708 = vpow.pop %v707
      %v709 = vsel %vm536, %v708, 0.0
      %710 = vadd.xlane.f32.xlu0 %v709
      %v711 = vpop.xlane.xlu0 %710
      %v712 = vrcp.pop %v711
      %v713 = vmul.f32 %v708, %v712
      %v714 = vpack.c.bf16 %v713, %v713
      %715 = vrot.lane.b32.xlu0 %v497, 64
      %v716 = vpop.permute.xlu0 %715
      %v718 = vsel %vm536, %v714, 0
      %vm720 = vcmask 1043456
      %v722 = vsel %vm720, %v716, 0
      %724 = vmatprep.subr.bf16.mxu0 0
      %725 = vmatpush1.bf16.msra.mxu0 %v722
      %726 = vmatprep.subr.bf16.mxu0 0
      %727 = vmatpush1.bf16.msra.mxu0 0
      %728 = vmatprep.subr.bf16.mxu0 0
      %729 = vmatpush1.bf16.msra.mxu0 0
      %730 = vmatprep.subr.bf16.mxu0 0
      %731 = vmatpush1.bf16.msra.mxu0 0
      %732 = vmatprep.subr.bf16.mxu0 0
      %733 = vmatpush1.bf16.msra.mxu0 0
      %734 = vmatprep.subr.bf16.mxu0 0
      %735 = vmatpush1.bf16.msra.mxu0 0
      %736 = vmatprep.subr.bf16.mxu0 0
      %737 = vmatpush1.bf16.msra.mxu0 0
      %738 = vmatprep.subr.bf16.mxu0 0
      %739 = vmatpush1.bf16.msra.mxu0 0
      %740 = vmatprep.subr.bf16.mxu0 0
      %741 = vmatpush1.bf16.msra.mxu0 0
      %742 = vmatprep.subr.bf16.mxu0 0
      %743 = vmatpush1.bf16.msra.mxu0 0
      %744 = vmatprep.subr.bf16.mxu0 0
      %745 = vmatpush1.bf16.msra.mxu0 0
      %746 = vmatprep.subr.bf16.mxu0 0
      %747 = vmatpush1.bf16.msra.mxu0 0
      %748 = vmatprep.subr.bf16.mxu0 0
      %749 = vmatpush1.bf16.msra.mxu0 0
      %750 = vmatprep.subr.bf16.mxu0 0
      %751 = vmatpush1.bf16.msra.mxu0 0
      %752 = vmatprep.subr.bf16.mxu0 0
      %753 = vmatpush1.bf16.msra.mxu0 0
      %754 = vmatprep.subr.bf16.mxu0 0
      %755 = vmatpush1.bf16.msra.mxu0 0
      %756 = vmatprep.mubr.bf16.mxu0 0
      %757 = vmatmul.mubr.bf16.gmra.mrb[0].mxu0 %v718
      %v758 = vpop.f32.mrb[0].mxu0
      %v759 = vadd.f32 0.0, %v758
      %v760 = vpop.f32.mrb[0].mxu0
      %v761 = vpop.f32.mrb[0].mxu0
      %v762 = vpop.f32.mrb[0].mxu0
      %763 = vdwg.mxu0
      %v764 = vpack.c.bf16 %v759, %v759
      %vm765 = vcmask 60416
      %766 = vst.msk [vmem:[#allocation2] sm:$0xf] %vm765, %v764
      %768 = vrot.lane.b32.xlu0 %v517, 120
      %v769 = vpop.permute.xlu0 %768
      %770 = vrot.lane.b32.xlu0 %v535, 120
      %v771 = vpop.permute.xlu0 %770
      %v773 = vsel %vm536, %v769, 0
      %v776 = vsel %vm536, %v771, 0
      %778 = vmatprep.subr.bf16.mxu0 0
      %779 = vmatpush1.bf16.xpose.msra.mxu0 %v776
      %780 = vmatprep.subr.bf16.mxu0 0
      %781 = vmatpush1.bf16.xpose.msra.mxu0 0
      %782 = vmatprep.subr.bf16.mxu0 0
      %783 = vmatpush1.bf16.xpose.msra.mxu0 0
      %784 = vmatprep.subr.bf16.mxu0 0
      %785 = vmatpush1.bf16.xpose.msra.mxu0 0
      %786 = vmatprep.subr.bf16.mxu0 0
      %787 = vmatpush1.bf16.xpose.msra.mxu0 0
      %788 = vmatprep.subr.bf16.mxu0 0
      %789 = vmatpush1.bf16.xpose.msra.mxu0 0
      %790 = vmatprep.subr.bf16.mxu0 0
      %791 = vmatpush1.bf16.xpose.msra.mxu0 0
      %792 = vmatprep.subr.bf16.mxu0 0
      %793 = vmatpush1.bf16.xpose.msra.mxu0 0
      %794 = vmatprep.subr.bf16.mxu0 0
      %795 = vmatpush1.bf16.xpose.msra.mxu0 0
      %796 = vmatprep.subr.bf16.mxu0 0
      %797 = vmatpush1.bf16.xpose.msra.mxu0 0
      %798 = vmatprep.subr.bf16.mxu0 0
      %799 = vmatpush1.bf16.xpose.msra.mxu0 0
      %800 = vmatprep.subr.bf16.mxu0 0
      %801 = vmatpush1.bf16.xpose.msra.mxu0 0
      %802 = vmatprep.subr.bf16.mxu0 0
      %803 = vmatpush1.bf16.xpose.msra.mxu0 0
      %804 = vmatprep.subr.bf16.mxu0 0
      %805 = vmatpush1.bf16.xpose.msra.mxu0 0
      %806 = vmatprep.subr.bf16.mxu0 0
      %807 = vmatpush1.bf16.xpose.msra.mxu0 0
      %808 = vmatprep.subr.bf16.mxu0 0
      %809 = vmatpush1.bf16.xpose.msra.mxu0 0
      %810 = vmatprep.mubr.bf16.mxu0 0
      %811 = vmatmul.mubr.bf16.gmra.mrb[0].mxu0 %v773
      %v812 = vpop.f32.mrb[0].mxu0
      %v813 = vadd.f32 0.0, %v812
      %v814 = vpop.f32.mrb[0].mxu0
      %v815 = vpop.f32.mrb[0].mxu0
      %v816 = vpop.f32.mrb[0].mxu0
      %817 = vdwg.mxu0
      %819 = vset.pattern.permute.xlu0 0
      %820 = vperm.xlu0 %819, %v813
      %v821 = vpop.permute.xlu0 %820
      %v823 = vsel %vm583, %v821, 0.0
      %v824 = vadd.f32 %v823, 0.0
      %825 = vset.pattern.permute.xlu0 1
      %826 = vperm.xlu0 %825, %v813
      %v827 = vpop.permute.xlu0 %826
      %v829 = vsel %vm591, %v827, 0.0
      %v830 = vadd.f32 %v824, %v829
      %831 = vset.pattern.permute.xlu0 2
      %832 = vperm.xlu0 %831, %v813
      %v833 = vpop.permute.xlu0 %832
      %v835 = vsel %vm598, %v833, 0.0
      %v836 = vadd.f32 %v830, %v835
      %837 = vset.pattern.permute.xlu0 3
      %838 = vperm.xlu0 %837, %v813
      %v839 = vpop.permute.xlu0 %838
      %v841 = vsel %vm605, %v839, 0.0
      %v842 = vadd.f32 %v836, %v841
      %843 = vset.pattern.permute.xlu0 4
      %844 = vperm.xlu0 %843, %v813
      %v845 = vpop.permute.xlu0 %844
      %v847 = vsel %vm612, %v845, 0.0
      %v848 = vadd.f32 %v842, %v847
      %849 = vset.pattern.permute.xlu0 5
      %850 = vperm.xlu0 %849, %v813
      %v851 = vpop.permute.xlu0 %850
      %v853 = vsel %vm619, %v851, 0.0
      %v854 = vadd.f32 %v848, %v853
      %855 = vset.pattern.permute.xlu0 6
      %856 = vperm.xlu0 %855, %v813
      %v857 = vpop.permute.xlu0 %856
      %v859 = vsel %vm626, %v857, 0.0
      %v860 = vadd.f32 %v854, %v859
      %861 = vset.pattern.permute.xlu0 7
      %862 = vperm.xlu0 %861, %v813
      %v863 = vpop.permute.xlu0 %862
      %v865 = vsel %vm633, %v863, 0.0
      %v866 = vadd.f32 %v860, %v865
      %867 = vset.pattern.permute.xlu0 8
      %868 = vperm.xlu0 %867, %v813
      %v869 = vpop.permute.xlu0 %868
      %v871 = vsel %vm640, %v869, 0.0
      %v872 = vadd.f32 %v866, %v871
      %874 = vrot.lane.b32.xlu0 %v507, 120
      %v875 = vpop.permute.xlu0 %874
      %876 = vrot.lane.b32.xlu0 %v497, 88
      %v877 = vpop.permute.xlu0 %876
      %v879 = vsel %vm536, %v875, 0
      %v882 = vsel %vm536, %v877, 0
      %884 = vmatprep.subr.bf16.mxu0 0
      %885 = vmatpush1.bf16.xpose.msra.mxu0 %v882
      %886 = vmatprep.subr.bf16.mxu0 0
      %887 = vmatpush1.bf16.xpose.msra.mxu0 0
      %888 = vmatprep.subr.bf16.mxu0 0
      %889 = vmatpush1.bf16.xpose.msra.mxu0 0
      %890 = vmatprep.subr.bf16.mxu0 0
      %891 = vmatpush1.bf16.xpose.msra.mxu0 0
      %892 = vmatprep.subr.bf16.mxu0 0
      %893 = vmatpush1.bf16.xpose.msra.mxu0 0
      %894 = vmatprep.subr.bf16.mxu0 0
      %895 = vmatpush1.bf16.xpose.msra.mxu0 0
      %896 = vmatprep.subr.bf16.mxu0 0
      %897 = vmatpush1.bf16.xpose.msra.mxu0 0
      %898 = vmatprep.subr.bf16.mxu0 0
      %899 = vmatpush1.bf16.xpose.msra.mxu0 0
      %900 = vmatprep.subr.bf16.mxu0 0
      %901 = vmatpush1.bf16.xpose.msra.mxu0 0
      %902 = vmatprep.subr.bf16.mxu0 0
      %903 = vmatpush1.bf16.xpose.msra.mxu0 0
      %904 = vmatprep.subr.bf16.mxu0 0
      %905 = vmatpush1.bf16.xpose.msra.mxu0 0
      %906 = vmatprep.subr.bf16.mxu0 0
      %907 = vmatpush1.bf16.xpose.msra.mxu0 0
      %908 = vmatprep.subr.bf16.mxu0 0
      %909 = vmatpush1.bf16.xpose.msra.mxu0 0
      %910 = vmatprep.subr.bf16.mxu0 0
      %911 = vmatpush1.bf16.xpose.msra.mxu0 0
      %912 = vmatprep.subr.bf16.mxu0 0
      %913 = vmatpush1.bf16.xpose.msra.mxu0 0
      %914 = vmatprep.subr.bf16.mxu0 0
      %915 = vmatpush1.bf16.xpose.msra.mxu0 0
      %916 = vmatprep.mubr.bf16.mxu0 0
      %917 = vmatmul.mubr.bf16.gmra.mrb[0].mxu0 %v879
      %v918 = vpop.f32.mrb[0].mxu0
      %v919 = vadd.f32 %v872, %v918
      %v920 = vpop.f32.mrb[0].mxu0
      %v921 = vpop.f32.mrb[0].mxu0
      %v922 = vpop.f32.mrb[0].mxu0
      %923 = vdwg.mxu0
      %v924 = vadd.f32 %v919, %v700
      %v925 = vsel %vm536, %v924, -inf
      %926 = vmax.xlane.f32.xlu0 %v925
      %v927 = vpop.xlane.xlu0 %926
      %v928 = vsub.f32 %v924, %v927
      %v929 = vmul.f32 %v928, 1.442695
      %v930 = vpow.pop %v929
      %v931 = vsel %vm536, %v930, 0.0
      %932 = vadd.xlane.f32.xlu0 %v931
      %v933 = vpop.xlane.xlu0 %932
      %v934 = vrcp.pop %v933
      %v935 = vmul.f32 %v930, %v934
      %v936 = vpack.c.bf16 %v935, %v935
      %937 = vrot.lane.b32.xlu0 %v497, 56
      %v938 = vpop.permute.xlu0 %937
      %v940 = vsel %vm536, %v936, 0
      %v943 = vsel %vm720, %v938, 0
      %945 = vmatprep.subr.bf16.mxu0 0
      %946 = vmatpush1.bf16.msra.mxu0 %v943
      %947 = vmatprep.subr.bf16.mxu0 0
      %948 = vmatpush1.bf16.msra.mxu0 0
      %949 = vmatprep.subr.bf16.mxu0 0
      %950 = vmatpush1.bf16.msra.mxu0 0
      %951 = vmatprep.subr.bf16.mxu0 0
      %952 = vmatpush1.bf16.msra.mxu0 0
      %953 = vmatprep.subr.bf16.mxu0 0
      %954 = vmatpush1.bf16.msra.mxu0 0
      %955 = vmatprep.subr.bf16.mxu0 0
      %956 = vmatpush1.bf16.msra.mxu0 0
      %957 = vmatprep.subr.bf16.mxu0 0
      %958 = vmatpush1.bf16.msra.mxu0 0
      %959 = vmatprep.subr.bf16.mxu0 0
      %960 = vmatpush1.bf16.msra.mxu0 0
      %961 = vmatprep.subr.bf16.mxu0 0
      %962 = vmatpush1.bf16.msra.mxu0 0
      %963 = vmatprep.subr.bf16.mxu0 0
      %964 = vmatpush1.bf16.msra.mxu0 0
      %965 = vmatprep.subr.bf16.mxu0 0
      %966 = vmatpush1.bf16.msra.mxu0 0
      %967 = vmatprep.subr.bf16.mxu0 0
      %968 = vmatpush1.bf16.msra.mxu0 0
      %969 = vmatprep.subr.bf16.mxu0 0
      %970 = vmatpush1.bf16.msra.mxu0 0
      %971 = vmatprep.subr.bf16.mxu0 0
      %972 = vmatpush1.bf16.msra.mxu0 0
      %973 = vmatprep.subr.bf16.mxu0 0
      %974 = vmatpush1.bf16.msra.mxu0 0
      %975 = vmatprep.subr.bf16.mxu0 0
      %976 = vmatpush1.bf16.msra.mxu0 0
      %977 = vmatprep.mubr.bf16.mxu0 0
      %978 = vmatmul.mubr.bf16.gmra.mrb[0].mxu0 %v940
      %v979 = vpop.f32.mrb[0].mxu0
      %v980 = vadd.f32 0.0, %v979
      %v981 = vpop.f32.mrb[0].mxu0
      %v982 = vpop.f32.mrb[0].mxu0
      %v983 = vpop.f32.mrb[0].mxu0
      %984 = vdwg.mxu0
      %v985 = vpack.c.bf16 %v980, %v980
      %v987 = vunpack.c.l.b16 %v985
      %v988 = vpack.c.b16 %v987, %v987
      %989 = vrot.lane.b32.xlu0 %v988, 8
      %v990 = vpop.permute.xlu0 %989
      %vm992 = vcmask 126016
      %993 = vst.msk [vmem:[#allocation2] sm:$0xf] %vm992, %v990
      %994 = vrot.lane.b32.xlu0 %v517, 112
      %v995 = vpop.permute.xlu0 %994
      %996 = vrot.lane.b32.xlu0 %v535, 112
      %v997 = vpop.permute.xlu0 %996
      %v999 = vsel %vm536, %v995, 0
      %v1002 = vsel %vm536, %v997, 0
      %1004 = vmatprep.subr.bf16.mxu0 0
      %1005 = vmatpush1.bf16.xpose.msra.mxu0 %v1002
      %1006 = vmatprep.subr.bf16.mxu0 0
      %1007 = vmatpush1.bf16.xpose.msra.mxu0 0
      %1008 = vmatprep.subr.bf16.mxu0 0
      %1009 = vmatpush1.bf16.xpose.msra.mxu0 0
      %1010 = vmatprep.subr.bf16.mxu0 0
      %1011 = vmatpush1.bf16.xpose.msra.mxu0 0
      %1012 = vmatprep.subr.bf16.mxu0 0
      %1013 = vmatpush1.bf16.xpose.msra.mxu0 0
      %1014 = vmatprep.subr.bf16.mxu0 0
      %1015 = vmatpush1.bf16.xpose.msra.mxu0 0
      %1016 = vmatprep.subr.bf16.mxu0 0
      %1017 = vmatpush1.bf16.xpose.msra.mxu0 0
      %1018 = vmatprep.subr.bf16.mxu0 0
      %1019 = vmatpush1.bf16.xpose.msra.mxu0 0
      %1020 = vmatprep.subr.bf16.mxu0 0
      %1021 = vmatpush1.bf16.xpose.msra.mxu0 0
      %1022 = vmatprep.subr.bf16.mxu0 0
      %1023 = vmatpush1.bf16.xpose.msra.mxu0 0
      %1024 = vmatprep.subr.bf16.mxu0 0
      %1025 = vmatpush1.bf16.xpose.msra.mxu0 0
      %1026 = vmatprep.subr.bf16.mxu0 0
      %1027 = vmatpush1.bf16.xpose.msra.mxu0 0
      %1028 = vmatprep.subr.bf16.mxu0 0
      %1029 = vmatpush1.bf16.xpose.msra.mxu0 0
      %1030 = vmatprep.subr.bf16.mxu0 0
      %1031 = vmatpush1.bf16.xpose.msra.mxu0 0
      %1032 = vmatprep.subr.bf16.mxu0 0
      %1033 = vmatpush1.bf16.xpose.msra.mxu0 0
      %1034 = vmatprep.subr.bf16.mxu0 0
      %1035 = vmatpush1.bf16.xpose.msra.mxu0 0
      %1036 = vmatprep.mubr.bf16.mxu0 0
      %1037 = vmatmul.mubr.bf16.gmra.mrb[0].mxu0 %v999
      %v1038 = vpop.f32.mrb[0].mxu0
      %v1039 = vadd.f32 0.0, %v1038
      %v1040 = vpop.f32.mrb[0].mxu0
      %v1041 = vpop.f32.mrb[0].mxu0
      %v1042 = vpop.f32.mrb[0].mxu0
      %1043 = vdwg.mxu0
      %1045 = vset.pattern.permute.xlu0 0
      %1046 = vperm.xlu0 %1045, %v1039
      %v1047 = vpop.permute.xlu0 %1046
      %v1049 = vsel %vm583, %v1047, 0.0
      %v1050 = vadd.f32 %v1049, 0.0
      %1051 = vset.pattern.permute.xlu0 1
      %1052 = vperm.xlu0 %1051, %v1039
      %v1053 = vpop.permute.xlu0 %1052
      %v1055 = vsel %vm591, %v1053, 0.0
      %v1056 = vadd.f32 %v1050, %v1055
      %1057 = vset.pattern.permute.xlu0 2
      %1058 = vperm.xlu0 %1057, %v1039
      %v1059 = vpop.permute.xlu0 %1058
      %v1061 = vsel %vm598, %v1059, 0.0
      %v1062 = vadd.f32 %v1056, %v1061
      %1063 = vset.pattern.permute.xlu0 3
      %1064 = vperm.xlu0 %1063, %v1039
      %v1065 = vpop.permute.xlu0 %1064
      %v1067 = vsel %vm605, %v1065, 0.0
      %v1068 = vadd.f32 %v1062, %v1067
      %1069 = vset.pattern.permute.xlu0 4
      %1070 = vperm.xlu0 %1069, %v1039
      %v1071 = vpop.permute.xlu0 %1070
      %v1073 = vsel %vm612, %v1071, 0.0
      %v1074 = vadd.f32 %v1068, %v1073
      %1075 = vset.pattern.permute.xlu0 5
      %1076 = vperm.xlu0 %1075, %v1039
      %v1077 = vpop.permute.xlu0 %1076
      %v1079 = vsel %vm619, %v1077, 0.0
      %v1080 = vadd.f32 %v1074, %v1079
      %1081 = vset.pattern.permute.xlu0 6
      %1082 = vperm.xlu0 %1081, %v1039
      %v1083 = vpop.permute.xlu0 %1082
      %v1085 = vsel %vm626, %v1083, 0.0
      %v1086 = vadd.f32 %v1080, %v1085
      %1087 = vset.pattern.permute.xlu0 7
      %1088 = vperm.xlu0 %1087, %v1039
      %v1089 = vpop.permute.xlu0 %1088
      %v1091 = vsel %vm633, %v1089, 0.0
      %v1092 = vadd.f32 %v1086, %v1091
      %1093 = vset.pattern.permute.xlu0 8
      %1094 = vperm.xlu0 %1093, %v1039
      %v1095 = vpop.permute.xlu0 %1094
      %v1097 = vsel %vm640, %v1095, 0.0
      %v1098 = vadd.f32 %v1092, %v1097
      %1099 = vrot.lane.b32.xlu0 %v507, 112
      %v1100 = vpop.permute.xlu0 %1099
      %1101 = vrot.lane.b32.xlu0 %v497, 80
      %v1102 = vpop.permute.xlu0 %1101
      %v1104 = vsel %vm536, %v1100, 0
      %v1107 = vsel %vm536, %v1102, 0
      %1109 = vmatprep.subr.bf16.mxu0 0
      %1110 = vmatpush1.bf16.xpose.msra.mxu0 %v1107
      %1111 = vmatprep.subr.bf16.mxu0 0
      %1112 = vmatpush1.bf16.xpose.msra.mxu0 0
      %1113 = vmatprep.subr.bf16.mxu0 0
      %1114 = vmatpush1.bf16.xpose.msra.mxu0 0
      %1115 = vmatprep.subr.bf16.mxu0 0
      %1116 = vmatpush1.bf16.xpose.msra.mxu0 0
      %1117 = vmatprep.subr.bf16.mxu0 0
      %1118 = vmatpush1.bf16.xpose.msra.mxu0 0
      %1119 = vmatprep.subr.bf16.mxu0 0
      %1120 = vmatpush1.bf16.xpose.msra.mxu0 0
      %1121 = vmatprep.subr.bf16.mxu0 0
      %1122 = vmatpush1.bf16.xpose.msra.mxu0 0
      %1123 = vmatprep.subr.bf16.mxu0 0
      %1124 = vmatpush1.bf16.xpose.msra.mxu0 0
      %1125 = vmatprep.subr.bf16.mxu0 0
      %1126 = vmatpush1.bf16.xpose.msra.mxu0 0
      %1127 = vmatprep.subr.bf16.mxu0 0
      %1128 = vmatpush1.bf16.xpose.msra.mxu0 0
      %1129 = vmatprep.subr.bf16.mxu0 0
      %1130 = vmatpush1.bf16.xpose.msra.mxu0 0
      %1131 = vmatprep.subr.bf16.mxu0 0
      %1132 = vmatpush1.bf16.xpose.msra.mxu0 0
      %1133 = vmatprep.subr.bf16.mxu0 0
      %1134 = vmatpush1.bf16.xpose.msra.mxu0 0
      %1135 = vmatprep.subr.bf16.mxu0 0
      %1136 = vmatpush1.bf16.xpose.msra.mxu0 0
      %1137 = vmatprep.subr.bf16.mxu0 0
      %1138 = vmatpush1.bf16.xpose.msra.mxu0 0
      %1139 = vmatprep.subr.bf16.mxu0 0
      %1140 = vmatpush1.bf16.xpose.msra.mxu0 0
      %1141 = vmatprep.mubr.bf16.mxu0 0
      %1142 = vmatmul.mubr.bf16.gmra.mrb[0].mxu0 %v1104
      %v1143 = vpop.f32.mrb[0].mxu0
      %v1144 = vadd.f32 %v1098, %v1143
      %v1145 = vpop.f32.mrb[0].mxu0
      %v1146 = vpop.f32.mrb[0].mxu0
      %v1147 = vpop.f32.mrb[0].mxu0
      %1148 = vdwg.mxu0
      %v1149 = vadd.f32 %v1144, %v700
      %v1150 = vsel %vm536, %v1149, -inf
      %1151 = vmax.xlane.f32.xlu0 %v1150
      %v1152 = vpop.xlane.xlu0 %1151
      %v1153 = vsub.f32 %v1149, %v1152
      %v1154 = vmul.f32 %v1153, 1.442695
      %v1155 = vpow.pop %v1154
      %v1156 = vsel %vm536, %v1155, 0.0
      %1157 = vadd.xlane.f32.xlu0 %v1156
      %v1158 = vpop.xlane.xlu0 %1157
      %v1159 = vrcp.pop %v1158
      %v1160 = vmul.f32 %v1155, %v1159
      %v1161 = vpack.c.bf16 %v1160, %v1160
      %1162 = vrot.lane.b32.xlu0 %v497, 48
      %v1163 = vpop.permute.xlu0 %1162
      %v1165 = vsel %vm536, %v1161, 0
      %v1168 = vsel %vm720, %v1163, 0
      %1170 = vmatprep.subr.bf16.mxu0 0
      %1171 = vmatpush1.bf16.msra.mxu0 %v1168
      %1172 = vmatprep.subr.bf16.mxu0 0
      %1173 = vmatpush1.bf16.msra.mxu0 0
      %1174 = vmatprep.subr.bf16.mxu0 0
      %1175 = vmatpush1.bf16.msra.mxu0 0
      %1176 = vmatprep.subr.bf16.mxu0 0
      %1177 = vmatpush1.bf16.msra.mxu0 0
      %1178 = vmatprep.subr.bf16.mxu0 0
      %1179 = vmatpush1.bf16.msra.mxu0 0
      %1180 = vmatprep.subr.bf16.mxu0 0
      %1181 = vmatpush1.bf16.msra.mxu0 0
      %1182 = vmatprep.subr.bf16.mxu0 0
      %1183 = vmatpush1.bf16.msra.mxu0 0
      %1184 = vmatprep.subr.bf16.mxu0 0
      %1185 = vmatpush1.bf16.msra.mxu0 0
      %1186 = vmatprep.subr.bf16.mxu0 0
      %1187 = vmatpush1.bf16.msra.mxu0 0
      %1188 = vmatprep.subr.bf16.mxu0 0
      %1189 = vmatpush1.bf16.msra.mxu0 0
      %1190 = vmatprep.subr.bf16.mxu0 0
      %1191 = vmatpush1.bf16.msra.mxu0 0
      %1192 = vmatprep.subr.bf16.mxu0 0
      %1193 = vmatpush1.bf16.msra.mxu0 0
      %1194 = vmatprep.subr.bf16.mxu0 0
      %1195 = vmatpush1.bf16.msra.mxu0 0
      %1196 = vmatprep.subr.bf16.mxu0 0
      %1197 = vmatpush1.bf16.msra.mxu0 0
      %1198 = vmatprep.subr.bf16.mxu0 0
      %1199 = vmatpush1.bf16.msra.mxu0 0
      %1200 = vmatprep.subr.bf16.mxu0 0
      %1201 = vmatpush1.bf16.msra.mxu0 0
      %1202 = vmatprep.mubr.bf16.mxu0 0
      %1203 = vmatmul.mubr.bf16.gmra.mrb[0].mxu0 %v1165
      %v1204 = vpop.f32.mrb[0].mxu0
      %v1205 = vadd.f32 0.0, %v1204
      %v1206 = vpop.f32.mrb[0].mxu0
      %v1207 = vpop.f32.mrb[0].mxu0
      %v1208 = vpop.f32.mrb[0].mxu0
      %1209 = vdwg.mxu0
      %v1210 = vpack.c.bf16 %v1205, %v1205
      %v1212 = vunpack.c.l.b16 %v1210
      %v1213 = vpack.c.b16 %v1212, %v1212
      %1214 = vrot.lane.b32.xlu0 %v1213, 16
      %v1215 = vpop.permute.xlu0 %1214
      %vm1217 = vcmask 191616
      %1218 = vst.msk [vmem:[#allocation2] sm:$0xf] %vm1217, %v1215
      %1219 = vrot.lane.b32.xlu0 %v517, 104
      %v1220 = vpop.permute.xlu0 %1219
      %1221 = vrot.lane.b32.xlu0 %v535, 104
      %v1222 = vpop.permute.xlu0 %1221
      %v1224 = vsel %vm536, %v1220, 0
      %v1227 = vsel %vm536, %v1222, 0
      %1229 = vmatprep.subr.bf16.mxu0 0
      %1230 = vmatpush1.bf16.xpose.msra.mxu0 %v1227
      %1231 = vmatprep.subr.bf16.mxu0 0
      %1232 = vmatpush1.bf16.xpose.msra.mxu0 0
      %1233 = vmatprep.subr.bf16.mxu0 0
      %1234 = vmatpush1.bf16.xpose.msra.mxu0 0
      %1235 = vmatprep.subr.bf16.mxu0 0
      %1236 = vmatpush1.bf16.xpose.msra.mxu0 0
      %1237 = vmatprep.subr.bf16.mxu0 0
      %1238 = vmatpush1.bf16.xpose.msra.mxu0 0
      %1239 = vmatprep.subr.bf16.mxu0 0
      %1240 = vmatpush1.bf16.xpose.msra.mxu0 0
      %1241 = vmatprep.subr.bf16.mxu0 0
      %1242 = vmatpush1.bf16.xpose.msra.mxu0 0
      %1243 = vmatprep.subr.bf16.mxu0 0
      %1244 = vmatpush1.bf16.xpose.msra.mxu0 0
      %1245 = vmatprep.subr.bf16.mxu0 0
      %1246 = vmatpush1.bf16.xpose.msra.mxu0 0
      %1247 = vmatprep.subr.bf16.mxu0 0
      %1248 = vmatpush1.bf16.xpose.msra.mxu0 0
      %1249 = vmatprep.subr.bf16.mxu0 0
      %1250 = vmatpush1.bf16.xpose.msra.mxu0 0
      %1251 = vmatprep.subr.bf16.mxu0 0
      %1252 = vmatpush1.bf16.xpose.msra.mxu0 0
      %1253 = vmatprep.subr.bf16.mxu0 0
      %1254 = vmatpush1.bf16.xpose.msra.mxu0 0
      %1255 = vmatprep.subr.bf16.mxu0 0
      %1256 = vmatpush1.bf16.xpose.msra.mxu0 0
      %1257 = vmatprep.subr.bf16.mxu0 0
      %1258 = vmatpush1.bf16.xpose.msra.mxu0 0
      %1259 = vmatprep.subr.bf16.mxu0 0
      %1260 = vmatpush1.bf16.xpose.msra.mxu0 0
      %1261 = vmatprep.mubr.bf16.mxu0 0
      %1262 = vmatmul.mubr.bf16.gmra.mrb[0].mxu0 %v1224
      %v1263 = vpop.f32.mrb[0].mxu0
      %v1264 = vadd.f32 0.0, %v1263
      %v1265 = vpop.f32.mrb[0].mxu0
      %v1266 = vpop.f32.mrb[0].mxu0
      %v1267 = vpop.f32.mrb[0].mxu0
      %1268 = vdwg.mxu0
      %1270 = vset.pattern.permute.xlu0 0
      %1271 = vperm.xlu0 %1270, %v1264
      %v1272 = vpop.permute.xlu0 %1271
      %v1274 = vsel %vm583, %v1272, 0.0
      %v1275 = vadd.f32 %v1274, 0.0
      %1276 = vset.pattern.permute.xlu0 1
      %1277 = vperm.xlu0 %1276, %v1264
      %v1278 = vpop.permute.xlu0 %1277
      %v1280 = vsel %vm591, %v1278, 0.0
      %v1281 = vadd.f32 %v1275, %v1280
      %1282 = vset.pattern.permute.xlu0 2
      %1283 = vperm.xlu0 %1282, %v1264
      %v1284 = vpop.permute.xlu0 %1283
      %v1286 = vsel %vm598, %v1284, 0.0
      %v1287 = vadd.f32 %v1281, %v1286
      %1288 = vset.pattern.permute.xlu0 3
      %1289 = vperm.xlu0 %1288, %v1264
      %v1290 = vpop.permute.xlu0 %1289
      %v1292 = vsel %vm605, %v1290, 0.0
      %v1293 = vadd.f32 %v1287, %v1292
      %1294 = vset.pattern.permute.xlu0 4
      %1295 = vperm.xlu0 %1294, %v1264
      %v1296 = vpop.permute.xlu0 %1295
      %v1298 = vsel %vm612, %v1296, 0.0
      %v1299 = vadd.f32 %v1293, %v1298
      %1300 = vset.pattern.permute.xlu0 5
      %1301 = vperm.xlu0 %1300, %v1264
      %v1302 = vpop.permute.xlu0 %1301
      %v1304 = vsel %vm619, %v1302, 0.0
      %v1305 = vadd.f32 %v1299, %v1304
      %1306 = vset.pattern.permute.xlu0 6
      %1307 = vperm.xlu0 %1306, %v1264
      %v1308 = vpop.permute.xlu0 %1307
      %v1310 = vsel %vm626, %v1308, 0.0
      %v1311 = vadd.f32 %v1305, %v1310
      %1312 = vset.pattern.permute.xlu0 7
      %1313 = vperm.xlu0 %1312, %v1264
      %v1314 = vpop.permute.xlu0 %1313
      %v1316 = vsel %vm633, %v1314, 0.0
      %v1317 = vadd.f32 %v1311, %v1316
      %1318 = vset.pattern.permute.xlu0 8
      %1319 = vperm.xlu0 %1318, %v1264
      %v1320 = vpop.permute.xlu0 %1319
      %v1322 = vsel %vm640, %v1320, 0.0
      %v1323 = vadd.f32 %v1317, %v1322
      %1324 = vrot.lane.b32.xlu0 %v507, 104
      %v1325 = vpop.permute.xlu0 %1324
      %1326 = vrot.lane.b32.xlu0 %v497, 72
      %v1327 = vpop.permute.xlu0 %1326
      %v1329 = vsel %vm536, %v1325, 0
      %v1332 = vsel %vm536, %v1327, 0
      %1334 = vmatprep.subr.bf16.mxu0 0
      %1335 = vmatpush1.bf16.xpose.msra.mxu0 %v1332
      %1336 = vmatprep.subr.bf16.mxu0 0
      %1337 = vmatpush1.bf16.xpose.msra.mxu0 0
      %1338 = vmatprep.subr.bf16.mxu0 0
      %1339 = vmatpush1.bf16.xpose.msra.mxu0 0
      %1340 = vmatprep.subr.bf16.mxu0 0
      %1341 = vmatpush1.bf16.xpose.msra.mxu0 0
      %1342 = vmatprep.subr.bf16.mxu0 0
      %1343 = vmatpush1.bf16.xpose.msra.mxu0 0
      %1344 = vmatprep.subr.bf16.mxu0 0
      %1345 = vmatpush1.bf16.xpose.msra.mxu0 0
      %1346 = vmatprep.subr.bf16.mxu0 0
      %1347 = vmatpush1.bf16.xpose.msra.mxu0 0
      %1348 = vmatprep.subr.bf16.mxu0 0
      %1349 = vmatpush1.bf16.xpose.msra.mxu0 0
      %1350 = vmatprep.subr.bf16.mxu0 0
      %1351 = vmatpush1.bf16.xpose.msra.mxu0 0
      %1352 = vmatprep.subr.bf16.mxu0 0
      %1353 = vmatpush1.bf16.xpose.msra.mxu0 0
      %1354 = vmatprep.subr.bf16.mxu0 0
      %1355 = vmatpush1.bf16.xpose.msra.mxu0 0
      %1356 = vmatprep.subr.bf16.mxu0 0
      %1357 = vmatpush1.bf16.xpose.msra.mxu0 0
      %1358 = vmatprep.subr.bf16.mxu0 0
      %1359 = vmatpush1.bf16.xpose.msra.mxu0 0
      %1360 = vmatprep.subr.bf16.mxu0 0
      %1361 = vmatpush1.bf16.xpose.msra.mxu0 0
      %1362 = vmatprep.subr.bf16.mxu0 0
      %1363 = vmatpush1.bf16.xpose.msra.mxu0 0
      %1364 = vmatprep.subr.bf16.mxu0 0
      %1365 = vmatpush1.bf16.xpose.msra.mxu0 0
      %1366 = vmatprep.mubr.bf16.mxu0 0
      %1367 = vmatmul.mubr.bf16.gmra.mrb[0].mxu0 %v1329
      %v1368 = vpop.f32.mrb[0].mxu0
      %v1369 = vadd.f32 %v1323, %v1368
      %v1370 = vpop.f32.mrb[0].mxu0
      %v1371 = vpop.f32.mrb[0].mxu0
      %v1372 = vpop.f32.mrb[0].mxu0
      %1373 = vdwg.mxu0
      %v1374 = vadd.f32 %v1369, %v700
      %v1375 = vsel %vm536, %v1374, -inf
      %1376 = vmax.xlane.f32.xlu0 %v1375
      %v1377 = vpop.xlane.xlu0 %1376
      %v1378 = vsub.f32 %v1374, %v1377
      %v1379 = vmul.f32 %v1378, 1.442695
      %v1380 = vpow.pop %v1379
      %v1381 = vsel %vm536, %v1380, 0.0
      %1382 = vadd.xlane.f32.xlu0 %v1381
      %v1383 = vpop.xlane.xlu0 %1382
      %v1384 = vrcp.pop %v1383
      %v1385 = vmul.f32 %v1380, %v1384
      %v1386 = vpack.c.bf16 %v1385, %v1385
      %1387 = vrot.lane.b32.xlu0 %v497, 40
      %v1388 = vpop.permute.xlu0 %1387
      %v1390 = vsel %vm536, %v1386, 0
      %v1393 = vsel %vm720, %v1388, 0
      %1395 = vmatprep.subr.bf16.mxu0 0
      %1396 = vmatpush1.bf16.msra.mxu0 %v1393
      %1397 = vmatprep.subr.bf16.mxu0 0
      %1398 = vmatpush1.bf16.msra.mxu0 0
      %1399 = vmatprep.subr.bf16.mxu0 0
      %1400 = vmatpush1.bf16.msra.mxu0 0
      %1401 = vmatprep.subr.bf16.mxu0 0
      %1402 = vmatpush1.bf16.msra.mxu0 0
      %1403 = vmatprep.subr.bf16.mxu0 0
      %1404 = vmatpush1.bf16.msra.mxu0 0
      %1405 = vmatprep.subr.bf16.mxu0 0
      %1406 = vmatpush1.bf16.msra.mxu0 0
      %1407 = vmatprep.subr.bf16.mxu0 0
      %1408 = vmatpush1.bf16.msra.mxu0 0
      %1409 = vmatprep.subr.bf16.mxu0 0
      %1410 = vmatpush1.bf16.msra.mxu0 0
      %1411 = vmatprep.subr.bf16.mxu0 0
      %1412 = vmatpush1.bf16.msra.mxu0 0
      %1413 = vmatprep.subr.bf16.mxu0 0
      %1414 = vmatpush1.bf16.msra.mxu0 0
      %1415 = vmatprep.subr.bf16.mxu0 0
      %1416 = vmatpush1.bf16.msra.mxu0 0
      %1417 = vmatprep.subr.bf16.mxu0 0
      %1418 = vmatpush1.bf16.msra.mxu0 0
      %1419 = vmatprep.subr.bf16.mxu0 0
      %1420 = vmatpush1.bf16.msra.mxu0 0
      %1421 = vmatprep.subr.bf16.mxu0 0
      %1422 = vmatpush1.bf16.msra.mxu0 0
      %1423 = vmatprep.subr.bf16.mxu0 0
      %1424 = vmatpush1.bf16.msra.mxu0 0
      %1425 = vmatprep.subr.bf16.mxu0 0
      %1426 = vmatpush1.bf16.msra.mxu0 0
      %1427 = vmatprep.mubr.bf16.mxu0 0
      %1428 = vmatmul.mubr.bf16.gmra.mrb[0].mxu0 %v1390
      %v1429 = vpop.f32.mrb[0].mxu0
      %v1430 = vadd.f32 0.0, %v1429
      %v1431 = vpop.f32.mrb[0].mxu0
      %v1432 = vpop.f32.mrb[0].mxu0
      %v1433 = vpop.f32.mrb[0].mxu0
      %1434 = vdwg.mxu0
      %v1435 = vpack.c.bf16 %v1430, %v1430
      %v1437 = vunpack.c.l.b16 %v1435
      %v1438 = vpack.c.b16 %v1437, %v1437
      %1439 = vrot.lane.b32.xlu0 %v1438, 24
      %v1440 = vpop.permute.xlu0 %1439
      %vm1442 = vcmask 257216
      %1443 = vst.msk [vmem:[#allocation2] sm:$0xf] %vm1442, %v1440
      %v1444 = vld [vmem:[#allocation2] sm:$0xf]
      %v1445 = vld [vmem:[%s9] sm:$0xf]
      %v1446 = vld [vmem:[%s9 + $0x4] sm:$0xf]
      %v1447 = vld [vmem:[%s9 + $0x8] sm:$0xf]
      %v1448 = vld [vmem:[%s9 + $0xc] sm:$0xf]
      %v1449 = vld [vmem:[%s10] sm:$0x1]
      %v1451 = vlaneseq
      %v1452 = vshrl.u32 %v1451, 7
      %v1453 = vsub.s32 0, %v1452
      %v1454 = vrot.slane %v1449, %v1453
      %v1460 = vunpack.c.l.b16 %v1445
      %v1461 = vunpack.c.l.b16 %v1446
      %v1462 = vunpack.c.l.b16 %v1447
      %v1463 = vunpack.c.l.b16 %v1448
      %v1464 = vpack.c.b16 %v1461, %v1460
      %v1465 = vpack.c.b16 %v1463, %v1462
      %v1469 = vsel %vm401, %v1444, 0
      %1471 = vmatprep.subr.bf16.mxu0 0
      %1472 = vmatpush1.bf16.msra.mxu0 %v1464
      %1473 = vmatprep.subr.bf16.mxu0 0
      %1474 = vmatpush1.bf16.msra.mxu0 %v1465
      %1475 = vmatprep.subr.bf16.mxu0 0
      %1476 = vmatpush1.bf16.msra.mxu0 0
      %1477 = vmatprep.subr.bf16.mxu0 0
      %1478 = vmatpush1.bf16.msra.mxu0 0
      %1479 = vmatprep.subr.bf16.mxu0 0
      %1480 = vmatpush1.bf16.msra.mxu0 0
      %1481 = vmatprep.subr.bf16.mxu0 0
      %1482 = vmatpush1.bf16.msra.mxu0 0
      %1483 = vmatprep.subr.bf16.mxu0 0
      %1484 = vmatpush1.bf16.msra.mxu0 0
      %1485 = vmatprep.subr.bf16.mxu0 0
      %1486 = vmatpush1.bf16.msra.mxu0 0
      %1487 = vmatprep.subr.bf16.mxu0 0
      %1488 = vmatpush1.bf16.msra.mxu0 0
      %1489 = vmatprep.subr.bf16.mxu0 0
      %1490 = vmatpush1.bf16.msra.mxu0 0
      %1491 = vmatprep.subr.bf16.mxu0 0
      %1492 = vmatpush1.bf16.msra.mxu0 0
      %1493 = vmatprep.subr.bf16.mxu0 0
      %1494 = vmatpush1.bf16.msra.mxu0 0
      %1495 = vmatprep.subr.bf16.mxu0 0
      %1496 = vmatpush1.bf16.msra.mxu0 0
      %1497 = vmatprep.subr.bf16.mxu0 0
      %1498 = vmatpush1.bf16.msra.mxu0 0
      %1499 = vmatprep.subr.bf16.mxu0 0
      %1500 = vmatpush1.bf16.msra.mxu0 0
      %1501 = vmatprep.subr.bf16.mxu0 0
      %1502 = vmatpush1.bf16.msra.mxu0 0
      %1503 = vmatprep.mubr.bf16.mxu0 0
      %1504 = vmatmul.mubr.bf16.gmra.mrb[0].mxu0 %v1469
      %v1505 = vpop.f32.mrb[0].mxu0
      %v1506 = vadd.f32 %v1454, %v1505
      %v1507 = vpop.f32.mrb[0].mxu0
      %v1508 = vpop.f32.mrb[0].mxu0
      %v1509 = vpop.f32.mrb[0].mxu0
      %1510 = vdwg.mxu0
      %v1511 = vadd.f32 %v398, %v1506
      %v1512 = vpack.c.bf16 %v1511, %v1511
      %vm1513 = vcmask 257024
      %1514 = vst.msk [vmem:[%s395] sm:$0xf] %vm1513, %v1512
      %p1515 = scmp.lt.s32.totalorder %s22, 1
      %s1516 = scalar_select %p1515, %s22, 1
      %s1517 = smul.addr %s1516, 4
      %s1518 = scalar_lea.vmem %s11, %s1517
      // Predicated region
      $region65: #{encoder_forward.12} parent=63 // pred_check
        %p1519 = pneg %p281
      $region66: #{encoder_forward.12} parent=63 // pred_check_branch
        %1521 = sbr.rel (%p1519) target = $region68
      $region67: #{encoder_forward.12} parent=63 // pred_region
        _
      $region68: #{encoder_forward.12} parent=63 // pred_fallthru
        _
    $region64: #{encoder_forward.12} parent=5 // pred_fallthru
      _
    %p1522 = scmp.le.s32.totalorder 2, %s17
    // Predicated region
    $region69: #{encoder_forward.12} parent=5 // pred_check
      %p1523 = pneg %p1522
    $region70: #{encoder_forward.12} parent=5 // pred_check_branch
      %1525 = sbr.rel (%p1523) target = $region72
    $region71: #{encoder_forward.12} parent=5 // pred_region
      %s1526 = ssub.s32 %s17, 2
      // Predicated region
      $region73: #{encoder_forward.12} parent=71 // pred_check
        %p1527 = pneg %p287
      $region74: #{encoder_forward.12} parent=71 // pred_check_branch
        %1529 = sbr.rel (%p1527) target = $region76
      $region75: #{encoder_forward.12} parent=71 // pred_region
        %p1530 = scmp.lt.s32.totalorder %s23, 1
        %s1531 = scalar_select %p1530, %s23, 1
        %s1532 = smul.addr %s1531, 4
        %s1533 = scalar_lea.vmem %s11, %s1532
      $region76: #{encoder_forward.12} parent=71 // pred_fallthru
        _
    $region72: #{encoder_forward.12} parent=5 // pred_fallthru
      _
  $region6: #{encoder_forward.12} parent=0 // loop_footer
    %s21 = sadd.s32 1, %s17
  $region7: #{encoder_forward.12} parent=0 // loop_footer_branch
    %16 = sbr.rel target = $region3
  $region8: #{encoder_forward.12} parent=0 // loop_exit
    _

</llo_original>
